<compile_context>
chip_gen: v7x
topology: tpu7x:2x2x1
jax: 0.10.0
libtpu: 0.0.40
codegen_flags: <defaults>
</compile_context>

<pallas_src>
import jax
import jax.numpy as jnp
from jax.experimental import pallas as pl
from jax.experimental.pallas import tpu as pltpu

# ---- small config (ConformerParams, shrunk) ----
B = 2            # batch
L = 16           # sequence length
D = 32           # embed_dim
H = 64           # ff_hidden_size
NH = 4           # num_attn_heads
HD = D // NH     # head dim
KS = 7           # depthwise kernel size
ROWS = B * L     # batch folded into matmul rows
LN_EPS = 1e-5
BN_EPS = 1e-5

# rows of the packed (N_VECD, D) parameter slab
IDX_FF1_G, IDX_FF1_B, IDX_FF1_B2 = 0, 1, 2
IDX_FF2_G, IDX_FF2_B, IDX_FF2_B2 = 3, 4, 5
IDX_FIN_G, IDX_FIN_B = 6, 7
IDX_BO = 8
IDX_BN_SCALE, IDX_BN_SHIFT = 9, 10
IDX_PW2_B = 11
N_VECD = 12


def _layernorm(x, gamma, beta):
    mu = jnp.mean(x, axis=-1, keepdims=True)
    var = jnp.mean((x - mu) ** 2, axis=-1, keepdims=True)
    return (x - mu) * jax.lax.rsqrt(var + LN_EPS) * gamma + beta


def _silu(x):
    return x * jax.nn.sigmoid(x)


# -------------------- fused kernel --------------------

def conformer_kernel(x_ref, cs_ref, vecd_ref, vech_ref, ffw1_ref, ffw2_ref,
                     wqkv_ref, wo_ref, bqkv_ref, pww_ref, dwt_ref, o_ref):
    def vD(i):                       # (1, D) row of the packed D-width slab
        return vecd_ref[i:i + 1, :]

    def vH(i):                       # (1, H) row of the packed H-width slab
        return vech_ref[i:i + 1, :]

    x = x_ref[...]                                           # (ROWS, D)

    # ---- FeedForward: x + 0.5 * (Linear(SiLU(Linear(LN(x))))) ----
    def feed_forward(x, wi, g_i, b_i, b2_i):
        y = _layernorm(x, vD(g_i), vD(b_i))
        h = jnp.dot(y, ffw1_ref[wi], preferred_element_type=jnp.float32) + vH(wi)
        h = _silu(h)
        y2 = jnp.dot(h, ffw2_ref[wi], preferred_element_type=jnp.float32) + vD(b2_i)
        return x + 0.5 * y2

    x = feed_forward(x, 0, IDX_FF1_G, IDX_FF1_B, IDX_FF1_B2)

    # ---- Rotary multi-head attention ----
    cos = cs_ref[0]                                          # (ROWS, HD)
    sin = cs_ref[1]
    scale = 1.0 / (HD ** 0.5)
    attn_out = jnp.zeros((ROWS, D), jnp.float32)
    for h in range(NH):
        def proj(slot, _h=h):
            row = slot * NH + _h
            return (jnp.dot(x, wqkv_ref[row], preferred_element_type=jnp.float32)
                    + bqkv_ref[row:row + 1, :])
        # rotary via pre-rotated weights: q_rot = q*cos + rotate_half(q)*sin
        q = proj(0) * cos + proj(1) * sin                    # (ROWS, HD)
        k = proj(2) * cos + proj(3) * sin
        v = proj(4)
        q3 = q.reshape(B, L, HD)
        k3 = k.reshape(B, L, HD)
        v3 = v.reshape(B, L, HD)
        s = jnp.einsum('bld,bmd->blm', q3, k3,
                       preferred_element_type=jnp.float32) * scale
        s = s - jnp.max(s, axis=-1, keepdims=True)
        p = jnp.exp(s)
        p = p * pl.reciprocal(jnp.sum(p, axis=-1, keepdims=True), approx=True)
        ctx = jnp.einsum('blm,bmd->bld', p, v3,
                         preferred_element_type=jnp.float32)
        attn_out = attn_out + jnp.dot(ctx.reshape(ROWS, HD), wo_ref[h],
                                      preferred_element_type=jnp.float32)
    x = x + attn_out + vD(IDX_BO)

    # ---- ConvModule (LayerNorm result discarded, as in the reference) ----
    a = jnp.dot(x, pww_ref[0], preferred_element_type=jnp.float32)
    g = jnp.dot(x, pww_ref[1], preferred_element_type=jnp.float32)
    y = a * jax.nn.sigmoid(g)                                # GLU
    # depthwise conv along L (per batch): rolls + pre-masked per-tap weights
    pad = (KS - 1) // 2
    acc = y * dwt_ref[pad]                                   # center tap
    for kk in range(KS):
        off = kk - pad
        if off != 0:
            shifted = pltpu.roll(y, (-off) % ROWS, axis=0)
            acc = acc + shifted * dwt_ref[kk]
    # BatchNorm1d (eval mode, pre-folded scale/shift) + SiLU
    yb = _silu(acc * vD(IDX_BN_SCALE) + vD(IDX_BN_SHIFT))
    conv_out = jnp.dot(yb, pww_ref[2],
                       preferred_element_type=jnp.float32) + vD(IDX_PW2_B)
    x = x + conv_out

    # ---- FF2 ----
    x = feed_forward(x, 1, IDX_FF2_G, IDX_FF2_B, IDX_FF2_B2)

    # ---- final LayerNorm ----
    o_ref[...] = _layernorm(x, vD(IDX_FIN_G), vD(IDX_FIN_B))


# -------------------- wrapper --------------------

def conformer_block(x, rotary_freqs, p):
    f32 = jnp.float32

    # rotary tables (rotate-half convention), tiled over batch rows
    cos = jnp.concatenate([jnp.cos(rotary_freqs), jnp.cos(rotary_freqs)], axis=-1)
    sin = jnp.concatenate([jnp.sin(rotary_freqs), jnp.sin(rotary_freqs)], axis=-1)
    cs = jnp.stack([jnp.tile(cos, (B, 1)), jnp.tile(sin, (B, 1))], axis=0)  # (2, ROWS, HD)

    # rotate-half-with-sign matrix P: q @ P == rotate_half(q) per head
    half = HD // 2
    eye = jnp.eye(half, dtype=f32)
    zero = jnp.zeros((half, half), f32)
    P = jnp.concatenate([jnp.concatenate([zero, eye], axis=1),
                         jnp.concatenate([-eye, zero], axis=1)], axis=0)     # (HD, HD)

    def split_heads_cols(w):   # (D, D) -> (NH, D, HD)
        return jnp.stack([w[:, h * HD:(h + 1) * HD] for h in range(NH)], axis=0)

    def split_heads_bias(b):   # (1, D) -> (NH, HD)
        return jnp.stack([b[0, h * HD:(h + 1) * HD] for h in range(NH)], axis=0)

    wq_h, wk_h, wv_h = (split_heads_cols(p[n]) for n in ("wq", "wk", "wv"))
    bq_h, bk_h, bv_h = (split_heads_bias(p[n]) for n in ("bq", "bk", "bv"))
    wqkv = jnp.concatenate([wq_h, jnp.einsum('hdk,kj->hdj', wq_h, P),
                            wk_h, jnp.einsum('hdk,kj->hdj', wk_h, P),
                            wv_h], axis=0)                                   # (5*NH, D, HD)
    bqkv = jnp.concatenate([bq_h, bq_h @ P, bk_h, bk_h @ P, bv_h], axis=0)   # (5*NH, HD)
    wo_h = jnp.stack([p["wo"][h * HD:(h + 1) * HD, :] for h in range(NH)], axis=0)

    # fold eval-mode BatchNorm into scale/shift
    bn_scale = p["bn_g"] * jax.lax.rsqrt(p["bn_v"] + BN_EPS)
    bn_shift = p["bn_b"] - p["bn_m"] * bn_scale

    # packed parameter slabs
    vecd = jnp.concatenate([
        p["ff1_g"], p["ff1_b"], p["ff1_b2"],
        p["ff2_g"], p["ff2_b"], p["ff2_b2"],
        p["fin_g"], p["fin_b"],
        p["bo"], bn_scale, bn_shift, p["pw2_b"]], axis=0)                    # (N_VECD, D)
    assert vecd.shape[0] == N_VECD
    vech = jnp.concatenate([p["ff1_b1"], p["ff2_b1"]], axis=0)               # (2, H)
    ffw1 = jnp.stack([p["ff1_w1"], p["ff2_w1"]], axis=0)                     # (2, D, H)
    ffw2 = jnp.stack([p["ff1_w2"], p["ff2_w2"]], axis=0)                     # (2, H, D)
    pww = jnp.stack([p["pw1"][:, :D], p["pw1"][:, D:], p["pw2"]], axis=0)    # (3, D, D)

    # per-tap depthwise coefficients with the 'same'-padding boundary mask
    # baked in (avoids any in-kernel iota/modulo and the padded buffer).
    pad = (KS - 1) // 2
    lpos = jnp.arange(ROWS, dtype=jnp.int32) % L                             # (ROWS,)
    taps = []
    for kk in range(KS):
        off = kk - pad
        valid = ((lpos + off >= 0) & (lpos + off < L)).astype(f32)[:, None]  # (ROWS, 1)
        taps.append(valid * p["dw"][kk][None, :])                            # (ROWS, D)
    dwtaps = jnp.stack(taps, axis=0)                                         # (KS, ROWS, D)

    vspec = pl.BlockSpec(memory_space=pltpu.MemorySpace.VMEM)
    out = pl.pallas_call(
        conformer_kernel,
        out_shape=jax.ShapeDtypeStruct((ROWS, D), jnp.float32),
        in_specs=[vspec] * 11,
        out_specs=vspec,
    )(x.reshape(ROWS, D), cs, vecd, vech, ffw1, ffw2, wqkv, wo_h, bqkv, pww, dwtaps)
    return out.reshape(B, L, D)


# -------------------- params --------------------

def init_params(key):
    def nrm(k, shape, scale=0.05):
        return scale * jax.random.normal(k, shape, jnp.float32)

    ks = iter(jax.random.split(key, 40))
    p = {}
    # ff1
    p["ff1_g"] = jnp.ones((1, D), jnp.float32)
    p["ff1_b"] = jnp.zeros((1, D), jnp.float32)
    p["ff1_w1"] = nrm(next(ks), (D, H))
    p["ff1_b1"] = nrm(next(ks), (1, H))
    p["ff1_w2"] = nrm(next(ks), (H, D))
    p["ff1_b2"] = nrm(next(ks), (1, D))
    # attention
    for name in ("q", "k", "v", "o"):
        p["w" + name] = nrm(next(ks), (D, D))
        p["b" + name] = nrm(next(ks), (1, D))
    # conv module
    p["pw1"] = nrm(next(ks), (D, 2 * D))          # pointwise_conv_1 weight^T
    p["dw"] = nrm(next(ks), (KS, D))              # depthwise weight[d,0,k] -> [k,d]
    p["bn_g"] = 1.0 + nrm(next(ks), (1, D), 0.02)
    p["bn_b"] = nrm(next(ks), (1, D), 0.02)
    p["bn_m"] = nrm(next(ks), (1, D), 0.02)
    p["bn_v"] = 1.0 + jnp.abs(nrm(next(ks), (1, D), 0.02))
    p["pw2"] = nrm(next(ks), (D, D))              # pointwise_conv_2 weight^T
    p["pw2_b"] = nrm(next(ks), (1, D))
    # ff2
    p["ff2_g"] = jnp.ones((1, D), jnp.float32)
    p["ff2_b"] = jnp.zeros((1, D), jnp.float32)
    p["ff2_w1"] = nrm(next(ks), (D, H))
    p["ff2_b1"] = nrm(next(ks), (1, H))
    p["ff2_w2"] = nrm(next(ks), (H, D))
    p["ff2_b2"] = nrm(next(ks), (1, D))
    # final norm
    p["fin_g"] = jnp.ones((1, D), jnp.float32)
    p["fin_b"] = jnp.zeros((1, D), jnp.float32)
    return p


if __name__ == "__main__":
    key = jax.random.PRNGKey(0)
    kx, kp = jax.random.split(key)
    x = jax.random.normal(kx, (B, L, D), jnp.float32)
    params = init_params(kp)

    # rotary frequencies: positions * inverse-frequency table, shape (L, HD//2)
    inv_freq = 1.0 / (10000.0 ** (jnp.arange(HD // 2, dtype=jnp.float32) / (HD // 2)))
    rotary_freqs = jnp.arange(L, dtype=jnp.float32)[:, None] * inv_freq[None, :]

    out = jax.jit(conformer_block)(x, rotary_freqs, params)
    jax.block_until_ready(out)
    assert out.shape == (B, L, D)
    print("KERNEL_OK")
</pallas_src>

<mosaic_0001>
module attributes {stable_mosaic.version = 11 : i64} {
  func.func @conformer_kernel(%arg0: memref<32x32xf32, #tpu.memory_space<vmem>>, %arg1: memref<2x32x8xf32, #tpu.memory_space<vmem>>, %arg2: memref<12x32xf32, #tpu.memory_space<vmem>>, %arg3: memref<2x64xf32, #tpu.memory_space<vmem>>, %arg4: memref<2x32x64xf32, #tpu.memory_space<vmem>>, %arg5: memref<2x64x32xf32, #tpu.memory_space<vmem>>, %arg6: memref<20x32x8xf32, #tpu.memory_space<vmem>>, %arg7: memref<4x8x32xf32, #tpu.memory_space<vmem>>, %arg8: memref<20x8xf32, #tpu.memory_space<vmem>>, %arg9: memref<3x32x32xf32, #tpu.memory_space<vmem>>, %arg10: memref<7x32x32xf32, #tpu.memory_space<vmem>>, %arg11: memref<32x32xf32, #tpu.memory_space<vmem>>) attributes {dimension_semantics = [], scalar_prefetch = 0 : i64, scratch_operands = 0 : i64, tpu.core_type = #tpu.core_type<tc>} {
    %c0 = arith.constant 0 : index
    %c0_0 = arith.constant 0 : index
    %0 = vector.load %arg0[%c0, %c0_0] : memref<32x32xf32, #tpu.memory_space<vmem>>, vector<32x32xf32>
    %c0_1 = arith.constant 0 : index
    %c0_2 = arith.constant 0 : index
    %1 = vector.load %arg2[%c0_1, %c0_2] : memref<12x32xf32, #tpu.memory_space<vmem>>, vector<1x32xf32>
    %c1 = arith.constant 1 : index
    %c0_3 = arith.constant 0 : index
    %2 = vector.load %arg2[%c1, %c0_3] : memref<12x32xf32, #tpu.memory_space<vmem>>, vector<1x32xf32>
    %cst = arith.constant dense<0.000000e+00> : vector<32xf32>
    %3 = vector.multi_reduction <add>, %0, %cst [1] : vector<32x32xf32> to vector<32xf32>
    %4 = vector.shape_cast %3 : vector<32xf32> to vector<32x1xf32>
    %cst_4 = arith.constant 3.200000e+01 : f32
    %5 = vector.broadcast %cst_4 : f32 to vector<32x1xf32>
    %6 = arith.divf %4, %5 : vector<32x1xf32>
    %7 = vector.broadcast %6 : vector<32x1xf32> to vector<32x32xf32>
    %8 = arith.subf %0, %7 : vector<32x32xf32>
    %9 = arith.mulf %8, %8 : vector<32x32xf32>
    %cst_5 = arith.constant dense<0.000000e+00> : vector<32xf32>
    %10 = vector.multi_reduction <add>, %9, %cst_5 [1] : vector<32x32xf32> to vector<32xf32>
    %11 = vector.shape_cast %10 : vector<32xf32> to vector<32x1xf32>
    %cst_6 = arith.constant 3.200000e+01 : f32
    %12 = vector.broadcast %cst_6 : f32 to vector<32x1xf32>
    %13 = arith.divf %11, %12 : vector<32x1xf32>
    %14 = vector.broadcast %6 : vector<32x1xf32> to vector<32x32xf32>
    %15 = arith.subf %0, %14 : vector<32x32xf32>
    %cst_7 = arith.constant 9.99999974E-6 : f32
    %16 = vector.broadcast %cst_7 : f32 to vector<32x1xf32>
    %17 = arith.addf %13, %16 : vector<32x1xf32>
    %18 = math.rsqrt %17 : vector<32x1xf32>
    %19 = vector.broadcast %18 : vector<32x1xf32> to vector<32x32xf32>
    %20 = arith.mulf %15, %19 : vector<32x32xf32>
    %21 = vector.broadcast %1 : vector<1x32xf32> to vector<32x32xf32>
    %22 = arith.mulf %20, %21 : vector<32x32xf32>
    %23 = vector.broadcast %2 : vector<1x32xf32> to vector<32x32xf32>
    %24 = arith.addf %22, %23 : vector<32x32xf32>
    %c0_8 = arith.constant 0 : index
    %c0_9 = arith.constant 0 : index
    %c0_10 = arith.constant 0 : index
    %25 = vector.load %arg4[%c0_8, %c0_9, %c0_10] : memref<2x32x64xf32, #tpu.memory_space<vmem>>, vector<1x32x64xf32>
    %26 = vector.shape_cast %25 : vector<1x32x64xf32> to vector<32x64xf32>
    %cst_11 = arith.constant dense<0.000000e+00> : vector<32x64xf32>
    %27 = tpu.matmul %24, %26, %cst_11 {dimension_numbers = #tpu.dot_dimension_numbers<[1], [0], [0], [1], [0, 0, 1, 1], [], []>} : vector<32x32xf32>, vector<32x64xf32>, vector<32x64xf32> -> vector<32x64xf32>
    %c0_12 = arith.constant 0 : index
    %c0_13 = arith.constant 0 : index
    %28 = vector.load %arg3[%c0_12, %c0_13] : memref<2x64xf32, #tpu.memory_space<vmem>>, vector<1x64xf32>
    %29 = vector.broadcast %28 : vector<1x64xf32> to vector<32x64xf32>
    %30 = arith.addf %27, %29 : vector<32x64xf32>
    %31 = arith.negf %30 : vector<32x64xf32>
    %32 = math.exp %31 : vector<32x64xf32>
    %cst_14 = arith.constant 1.000000e+00 : f32
    %33 = vector.broadcast %cst_14 : f32 to vector<32x64xf32>
    %34 = arith.addf %33, %32 : vector<32x64xf32>
    %35 = arith.divf %33, %34 : vector<32x64xf32>
    %36 = arith.mulf %30, %35 : vector<32x64xf32>
    %c0_15 = arith.constant 0 : index
    %c0_16 = arith.constant 0 : index
    %c0_17 = arith.constant 0 : index
    %37 = vector.load %arg5[%c0_15, %c0_16, %c0_17] : memref<2x64x32xf32, #tpu.memory_space<vmem>>, vector<1x64x32xf32>
    %38 = vector.shape_cast %37 : vector<1x64x32xf32> to vector<64x32xf32>
    %cst_18 = arith.constant dense<0.000000e+00> : vector<32x32xf32>
    %39 = tpu.matmul %36, %38, %cst_18 {dimension_numbers = #tpu.dot_dimension_numbers<[1], [0], [0], [1], [0, 0, 1, 1], [], []>} : vector<32x64xf32>, vector<64x32xf32>, vector<32x32xf32> -> vector<32x32xf32>
    %c2 = arith.constant 2 : index
    %c0_19 = arith.constant 0 : index
    %40 = vector.load %arg2[%c2, %c0_19] : memref<12x32xf32, #tpu.memory_space<vmem>>, vector<1x32xf32>
    %41 = vector.broadcast %40 : vector<1x32xf32> to vector<32x32xf32>
    %42 = arith.addf %39, %41 : vector<32x32xf32>
    %cst_20 = arith.constant 5.000000e-01 : f32
    %43 = vector.broadcast %cst_20 : f32 to vector<32x32xf32>
    %44 = arith.mulf %43, %42 : vector<32x32xf32>
    %45 = arith.addf %0, %44 : vector<32x32xf32>
    %c0_21 = arith.constant 0 : index
    %c0_22 = arith.constant 0 : index
    %c0_23 = arith.constant 0 : index
    %46 = vector.load %arg1[%c0_21, %c0_22, %c0_23] : memref<2x32x8xf32, #tpu.memory_space<vmem>>, vector<1x32x8xf32>
    %47 = vector.shape_cast %46 : vector<1x32x8xf32> to vector<32x8xf32>
    %c1_24 = arith.constant 1 : index
    %c0_25 = arith.constant 0 : index
    %c0_26 = arith.constant 0 : index
    %48 = vector.load %arg1[%c1_24, %c0_25, %c0_26] : memref<2x32x8xf32, #tpu.memory_space<vmem>>, vector<1x32x8xf32>
    %49 = vector.shape_cast %48 : vector<1x32x8xf32> to vector<32x8xf32>
    %cst_27 = arith.constant 0.000000e+00 : f32
    %50 = vector.broadcast %cst_27 : f32 to vector<32x32xf32>
    %c0_28 = arith.constant 0 : index
    %c0_29 = arith.constant 0 : index
    %c0_30 = arith.constant 0 : index
    %51 = vector.load %arg6[%c0_28, %c0_29, %c0_30] : memref<20x32x8xf32, #tpu.memory_space<vmem>>, vector<1x32x8xf32>
    %52 = vector.shape_cast %51 : vector<1x32x8xf32> to vector<32x8xf32>
    %cst_31 = arith.constant dense<0.000000e+00> : vector<32x8xf32>
    %53 = tpu.matmul %45, %52, %cst_31 {dimension_numbers = #tpu.dot_dimension_numbers<[1], [0], [0], [1], [0, 0, 1, 1], [], []>} : vector<32x32xf32>, vector<32x8xf32>, vector<32x8xf32> -> vector<32x8xf32>
    %c0_32 = arith.constant 0 : index
    %c0_33 = arith.constant 0 : index
    %54 = vector.load %arg8[%c0_32, %c0_33] : memref<20x8xf32, #tpu.memory_space<vmem>>, vector<1x8xf32>
    %55 = vector.broadcast %54 : vector<1x8xf32> to vector<32x8xf32>
    %56 = arith.addf %53, %55 : vector<32x8xf32>
    %57 = arith.mulf %56, %47 : vector<32x8xf32>
    %c4 = arith.constant 4 : index
    %c0_34 = arith.constant 0 : index
    %c0_35 = arith.constant 0 : index
    %58 = vector.load %arg6[%c4, %c0_34, %c0_35] : memref<20x32x8xf32, #tpu.memory_space<vmem>>, vector<1x32x8xf32>
    %59 = vector.shape_cast %58 : vector<1x32x8xf32> to vector<32x8xf32>
    %cst_36 = arith.constant dense<0.000000e+00> : vector<32x8xf32>
    %60 = tpu.matmul %45, %59, %cst_36 {dimension_numbers = #tpu.dot_dimension_numbers<[1], [0], [0], [1], [0, 0, 1, 1], [], []>} : vector<32x32xf32>, vector<32x8xf32>, vector<32x8xf32> -> vector<32x8xf32>
    %c4_37 = arith.constant 4 : index
    %c0_38 = arith.constant 0 : index
    %61 = vector.load %arg8[%c4_37, %c0_38] : memref<20x8xf32, #tpu.memory_space<vmem>>, vector<1x8xf32>
    %62 = vector.broadcast %61 : vector<1x8xf32> to vector<32x8xf32>
    %63 = arith.addf %60, %62 : vector<32x8xf32>
    %64 = arith.mulf %63, %49 : vector<32x8xf32>
    %65 = arith.addf %57, %64 : vector<32x8xf32>
    %c8 = arith.constant 8 : index
    %c0_39 = arith.constant 0 : index
    %c0_40 = arith.constant 0 : index
    %66 = vector.load %arg6[%c8, %c0_39, %c0_40] : memref<20x32x8xf32, #tpu.memory_space<vmem>>, vector<1x32x8xf32>
    %67 = vector.shape_cast %66 : vector<1x32x8xf32> to vector<32x8xf32>
    %cst_41 = arith.constant dense<0.000000e+00> : vector<32x8xf32>
    %68 = tpu.matmul %45, %67, %cst_41 {dimension_numbers = #tpu.dot_dimension_numbers<[1], [0], [0], [1], [0, 0, 1, 1], [], []>} : vector<32x32xf32>, vector<32x8xf32>, vector<32x8xf32> -> vector<32x8xf32>
    %c8_42 = arith.constant 8 : index
    %c0_43 = arith.constant 0 : index
    %69 = vector.load %arg8[%c8_42, %c0_43] : memref<20x8xf32, #tpu.memory_space<vmem>>, vector<1x8xf32>
    %70 = vector.broadcast %69 : vector<1x8xf32> to vector<32x8xf32>
    %71 = arith.addf %68, %70 : vector<32x8xf32>
    %72 = arith.mulf %71, %47 : vector<32x8xf32>
    %c12 = arith.constant 12 : index
    %c0_44 = arith.constant 0 : index
    %c0_45 = arith.constant 0 : index
    %73 = vector.load %arg6[%c12, %c0_44, %c0_45] : memref<20x32x8xf32, #tpu.memory_space<vmem>>, vector<1x32x8xf32>
    %74 = vector.shape_cast %73 : vector<1x32x8xf32> to vector<32x8xf32>
    %cst_46 = arith.constant dense<0.000000e+00> : vector<32x8xf32>
    %75 = tpu.matmul %45, %74, %cst_46 {dimension_numbers = #tpu.dot_dimension_numbers<[1], [0], [0], [1], [0, 0, 1, 1], [], []>} : vector<32x32xf32>, vector<32x8xf32>, vector<32x8xf32> -> vector<32x8xf32>
    %c12_47 = arith.constant 12 : index
    %c0_48 = arith.constant 0 : index
    %76 = vector.load %arg8[%c12_47, %c0_48] : memref<20x8xf32, #tpu.memory_space<vmem>>, vector<1x8xf32>
    %77 = vector.broadcast %76 : vector<1x8xf32> to vector<32x8xf32>
    %78 = arith.addf %75, %77 : vector<32x8xf32>
    %79 = arith.mulf %78, %49 : vector<32x8xf32>
    %80 = arith.addf %72, %79 : vector<32x8xf32>
    %c16 = arith.constant 16 : index
    %c0_49 = arith.constant 0 : index
    %c0_50 = arith.constant 0 : index
    %81 = vector.load %arg6[%c16, %c0_49, %c0_50] : memref<20x32x8xf32, #tpu.memory_space<vmem>>, vector<1x32x8xf32>
    %82 = vector.shape_cast %81 : vector<1x32x8xf32> to vector<32x8xf32>
    %cst_51 = arith.constant dense<0.000000e+00> : vector<32x8xf32>
    %83 = tpu.matmul %45, %82, %cst_51 {dimension_numbers = #tpu.dot_dimension_numbers<[1], [0], [0], [1], [0, 0, 1, 1], [], []>} : vector<32x32xf32>, vector<32x8xf32>, vector<32x8xf32> -> vector<32x8xf32>
    %c16_52 = arith.constant 16 : index
    %c0_53 = arith.constant 0 : index
    %84 = vector.load %arg8[%c16_52, %c0_53] : memref<20x8xf32, #tpu.memory_space<vmem>>, vector<1x8xf32>
    %85 = vector.broadcast %84 : vector<1x8xf32> to vector<32x8xf32>
    %86 = arith.addf %83, %85 : vector<32x8xf32>
    %87 = vector.shape_cast %65 : vector<32x8xf32> to vector<2x16x8xf32>
    %88 = vector.shape_cast %80 : vector<32x8xf32> to vector<2x16x8xf32>
    %89 = vector.shape_cast %86 : vector<32x8xf32> to vector<2x16x8xf32>
    "tpu.trace_start"() <{level = 10 : i32, message = "bld,bmd->blm"}> : () -> ()
    %cst_54 = arith.constant dense<0.000000e+00> : vector<2x16x16xf32>
    %90 = tpu.matmul %87, %88, %cst_54 {dimension_numbers = #tpu.dot_dimension_numbers<[2], [2], [1], [1], [0, 0, 0, 1, 1, 1], [0], [0]>} : vector<2x16x8xf32>, vector<2x16x8xf32>, vector<2x16x16xf32> -> vector<2x16x16xf32>
    "tpu.trace_stop"() : () -> ()
    %cst_55 = arith.constant 0.353553385 : f32
    %91 = vector.broadcast %cst_55 : f32 to vector<2x16x16xf32>
    %92 = arith.mulf %90, %91 : vector<2x16x16xf32>
    %cst_56 = arith.constant dense<0xFF800000> : vector<2x16xf32>
    %93 = vector.multi_reduction <maximumf>, %92, %cst_56 [2] : vector<2x16x16xf32> to vector<2x16xf32>
    %94 = vector.shape_cast %93 : vector<2x16xf32> to vector<2x16x1xf32>
    %95 = vector.broadcast %94 : vector<2x16x1xf32> to vector<2x16x16xf32>
    %96 = arith.subf %92, %95 : vector<2x16x16xf32>
    %97 = math.exp %96 : vector<2x16x16xf32>
    %cst_57 = arith.constant dense<0.000000e+00> : vector<2x16xf32>
    %98 = vector.multi_reduction <add>, %97, %cst_57 [2] : vector<2x16x16xf32> to vector<2x16xf32>
    %99 = vector.shape_cast %98 : vector<2x16xf32> to vector<2x16x1xf32>
    %100 = tpu.reciprocal %99 {approx = true} : vector<2x16x1xf32> -> vector<2x16x1xf32>
    %101 = vector.broadcast %100 : vector<2x16x1xf32> to vector<2x16x16xf32>
    %102 = arith.mulf %97, %101 : vector<2x16x16xf32>
    "tpu.trace_start"() <{level = 10 : i32, message = "blm,bmd->bld"}> : () -> ()
    %cst_58 = arith.constant dense<0.000000e+00> : vector<2x16x8xf32>
    %103 = tpu.matmul %102, %89, %cst_58 {dimension_numbers = #tpu.dot_dimension_numbers<[2], [1], [1], [2], [0, 0, 0, 1, 1, 2], [0], [0]>} : vector<2x16x16xf32>, vector<2x16x8xf32>, vector<2x16x8xf32> -> vector<2x16x8xf32>
    "tpu.trace_stop"() : () -> ()
    %104 = vector.shape_cast %103 : vector<2x16x8xf32> to vector<32x8xf32>
    %c0_59 = arith.constant 0 : index
    %c0_60 = arith.constant 0 : index
    %c0_61 = arith.constant 0 : index
    %105 = vector.load %arg7[%c0_59, %c0_60, %c0_61] : memref<4x8x32xf32, #tpu.memory_space<vmem>>, vector<1x8x32xf32>
    %106 = vector.shape_cast %105 : vector<1x8x32xf32> to vector<8x32xf32>
    %cst_62 = arith.constant dense<0.000000e+00> : vector<32x32xf32>
    %107 = tpu.matmul %104, %106, %cst_62 {dimension_numbers = #tpu.dot_dimension_numbers<[1], [0], [0], [1], [0, 0, 1, 1], [], []>} : vector<32x8xf32>, vector<8x32xf32>, vector<32x32xf32> -> vector<32x32xf32>
    %108 = arith.addf %50, %107 : vector<32x32xf32>
    %c1_63 = arith.constant 1 : index
    %c0_64 = arith.constant 0 : index
    %c0_65 = arith.constant 0 : index
    %109 = vector.load %arg6[%c1_63, %c0_64, %c0_65] : memref<20x32x8xf32, #tpu.memory_space<vmem>>, vector<1x32x8xf32>
    %110 = vector.shape_cast %109 : vector<1x32x8xf32> to vector<32x8xf32>
    %cst_66 = arith.constant dense<0.000000e+00> : vector<32x8xf32>
    %111 = tpu.matmul %45, %110, %cst_66 {dimension_numbers = #tpu.dot_dimension_numbers<[1], [0], [0], [1], [0, 0, 1, 1], [], []>} : vector<32x32xf32>, vector<32x8xf32>, vector<32x8xf32> -> vector<32x8xf32>
    %c1_67 = arith.constant 1 : index
    %c0_68 = arith.constant 0 : index
    %112 = vector.load %arg8[%c1_67, %c0_68] : memref<20x8xf32, #tpu.memory_space<vmem>>, vector<1x8xf32>
    %113 = vector.broadcast %112 : vector<1x8xf32> to vector<32x8xf32>
    %114 = arith.addf %111, %113 : vector<32x8xf32>
    %115 = arith.mulf %114, %47 : vector<32x8xf32>
    %c5 = arith.constant 5 : index
    %c0_69 = arith.constant 0 : index
    %c0_70 = arith.constant 0 : index
    %116 = vector.load %arg6[%c5, %c0_69, %c0_70] : memref<20x32x8xf32, #tpu.memory_space<vmem>>, vector<1x32x8xf32>
    %117 = vector.shape_cast %116 : vector<1x32x8xf32> to vector<32x8xf32>
    %cst_71 = arith.constant dense<0.000000e+00> : vector<32x8xf32>
    %118 = tpu.matmul %45, %117, %cst_71 {dimension_numbers = #tpu.dot_dimension_numbers<[1], [0], [0], [1], [0, 0, 1, 1], [], []>} : vector<32x32xf32>, vector<32x8xf32>, vector<32x8xf32> -> vector<32x8xf32>
    %c5_72 = arith.constant 5 : index
    %c0_73 = arith.constant 0 : index
    %119 = vector.load %arg8[%c5_72, %c0_73] : memref<20x8xf32, #tpu.memory_space<vmem>>, vector<1x8xf32>
    %120 = vector.broadcast %119 : vector<1x8xf32> to vector<32x8xf32>
    %121 = arith.addf %118, %120 : vector<32x8xf32>
    %122 = arith.mulf %121, %49 : vector<32x8xf32>
    %123 = arith.addf %115, %122 : vector<32x8xf32>
    %c9 = arith.constant 9 : index
    %c0_74 = arith.constant 0 : index
    %c0_75 = arith.constant 0 : index
    %124 = vector.load %arg6[%c9, %c0_74, %c0_75] : memref<20x32x8xf32, #tpu.memory_space<vmem>>, vector<1x32x8xf32>
    %125 = vector.shape_cast %124 : vector<1x32x8xf32> to vector<32x8xf32>
    %cst_76 = arith.constant dense<0.000000e+00> : vector<32x8xf32>
    %126 = tpu.matmul %45, %125, %cst_76 {dimension_numbers = #tpu.dot_dimension_numbers<[1], [0], [0], [1], [0, 0, 1, 1], [], []>} : vector<32x32xf32>, vector<32x8xf32>, vector<32x8xf32> -> vector<32x8xf32>
    %c9_77 = arith.constant 9 : index
    %c0_78 = arith.constant 0 : index
    %127 = vector.load %arg8[%c9_77, %c0_78] : memref<20x8xf32, #tpu.memory_space<vmem>>, vector<1x8xf32>
    %128 = vector.broadcast %127 : vector<1x8xf32> to vector<32x8xf32>
    %129 = arith.addf %126, %128 : vector<32x8xf32>
    %130 = arith.mulf %129, %47 : vector<32x8xf32>
    %c13 = arith.constant 13 : index
    %c0_79 = arith.constant 0 : index
    %c0_80 = arith.constant 0 : index
    %131 = vector.load %arg6[%c13, %c0_79, %c0_80] : memref<20x32x8xf32, #tpu.memory_space<vmem>>, vector<1x32x8xf32>
    %132 = vector.shape_cast %131 : vector<1x32x8xf32> to vector<32x8xf32>
    %cst_81 = arith.constant dense<0.000000e+00> : vector<32x8xf32>
    %133 = tpu.matmul %45, %132, %cst_81 {dimension_numbers = #tpu.dot_dimension_numbers<[1], [0], [0], [1], [0, 0, 1, 1], [], []>} : vector<32x32xf32>, vector<32x8xf32>, vector<32x8xf32> -> vector<32x8xf32>
    %c13_82 = arith.constant 13 : index
    %c0_83 = arith.constant 0 : index
    %134 = vector.load %arg8[%c13_82, %c0_83] : memref<20x8xf32, #tpu.memory_space<vmem>>, vector<1x8xf32>
    %135 = vector.broadcast %134 : vector<1x8xf32> to vector<32x8xf32>
    %136 = arith.addf %133, %135 : vector<32x8xf32>
    %137 = arith.mulf %136, %49 : vector<32x8xf32>
    %138 = arith.addf %130, %137 : vector<32x8xf32>
    %c17 = arith.constant 17 : index
    %c0_84 = arith.constant 0 : index
    %c0_85 = arith.constant 0 : index
    %139 = vector.load %arg6[%c17, %c0_84, %c0_85] : memref<20x32x8xf32, #tpu.memory_space<vmem>>, vector<1x32x8xf32>
    %140 = vector.shape_cast %139 : vector<1x32x8xf32> to vector<32x8xf32>
    %cst_86 = arith.constant dense<0.000000e+00> : vector<32x8xf32>
    %141 = tpu.matmul %45, %140, %cst_86 {dimension_numbers = #tpu.dot_dimension_numbers<[1], [0], [0], [1], [0, 0, 1, 1], [], []>} : vector<32x32xf32>, vector<32x8xf32>, vector<32x8xf32> -> vector<32x8xf32>
    %c17_87 = arith.constant 17 : index
    %c0_88 = arith.constant 0 : index
    %142 = vector.load %arg8[%c17_87, %c0_88] : memref<20x8xf32, #tpu.memory_space<vmem>>, vector<1x8xf32>
    %143 = vector.broadcast %142 : vector<1x8xf32> to vector<32x8xf32>
    %144 = arith.addf %141, %143 : vector<32x8xf32>
    %145 = vector.shape_cast %123 : vector<32x8xf32> to vector<2x16x8xf32>
    %146 = vector.shape_cast %138 : vector<32x8xf32> to vector<2x16x8xf32>
    %147 = vector.shape_cast %144 : vector<32x8xf32> to vector<2x16x8xf32>
    "tpu.trace_start"() <{level = 10 : i32, message = "bld,bmd->blm"}> : () -> ()
    %cst_89 = arith.constant dense<0.000000e+00> : vector<2x16x16xf32>
    %148 = tpu.matmul %145, %146, %cst_89 {dimension_numbers = #tpu.dot_dimension_numbers<[2], [2], [1], [1], [0, 0, 0, 1, 1, 1], [0], [0]>} : vector<2x16x8xf32>, vector<2x16x8xf32>, vector<2x16x16xf32> -> vector<2x16x16xf32>
    "tpu.trace_stop"() : () -> ()
    %cst_90 = arith.constant 0.353553385 : f32
    %149 = vector.broadcast %cst_90 : f32 to vector<2x16x16xf32>
    %150 = arith.mulf %148, %149 : vector<2x16x16xf32>
    %cst_91 = arith.constant dense<0xFF800000> : vector<2x16xf32>
    %151 = vector.multi_reduction <maximumf>, %150, %cst_91 [2] : vector<2x16x16xf32> to vector<2x16xf32>
    %152 = vector.shape_cast %151 : vector<2x16xf32> to vector<2x16x1xf32>
    %153 = vector.broadcast %152 : vector<2x16x1xf32> to vector<2x16x16xf32>
    %154 = arith.subf %150, %153 : vector<2x16x16xf32>
    %155 = math.exp %154 : vector<2x16x16xf32>
    %cst_92 = arith.constant dense<0.000000e+00> : vector<2x16xf32>
    %156 = vector.multi_reduction <add>, %155, %cst_92 [2] : vector<2x16x16xf32> to vector<2x16xf32>
    %157 = vector.shape_cast %156 : vector<2x16xf32> to vector<2x16x1xf32>
    %158 = tpu.reciprocal %157 {approx = true} : vector<2x16x1xf32> -> vector<2x16x1xf32>
    %159 = vector.broadcast %158 : vector<2x16x1xf32> to vector<2x16x16xf32>
    %160 = arith.mulf %155, %159 : vector<2x16x16xf32>
    "tpu.trace_start"() <{level = 10 : i32, message = "blm,bmd->bld"}> : () -> ()
    %cst_93 = arith.constant dense<0.000000e+00> : vector<2x16x8xf32>
    %161 = tpu.matmul %160, %147, %cst_93 {dimension_numbers = #tpu.dot_dimension_numbers<[2], [1], [1], [2], [0, 0, 0, 1, 1, 2], [0], [0]>} : vector<2x16x16xf32>, vector<2x16x8xf32>, vector<2x16x8xf32> -> vector<2x16x8xf32>
    "tpu.trace_stop"() : () -> ()
    %162 = vector.shape_cast %161 : vector<2x16x8xf32> to vector<32x8xf32>
    %c1_94 = arith.constant 1 : index
    %c0_95 = arith.constant 0 : index
    %c0_96 = arith.constant 0 : index
    %163 = vector.load %arg7[%c1_94, %c0_95, %c0_96] : memref<4x8x32xf32, #tpu.memory_space<vmem>>, vector<1x8x32xf32>
    %164 = vector.shape_cast %163 : vector<1x8x32xf32> to vector<8x32xf32>
    %cst_97 = arith.constant dense<0.000000e+00> : vector<32x32xf32>
    %165 = tpu.matmul %162, %164, %cst_97 {dimension_numbers = #tpu.dot_dimension_numbers<[1], [0], [0], [1], [0, 0, 1, 1], [], []>} : vector<32x8xf32>, vector<8x32xf32>, vector<32x32xf32> -> vector<32x32xf32>
    %166 = arith.addf %108, %165 : vector<32x32xf32>
    %c2_98 = arith.constant 2 : index
    %c0_99 = arith.constant 0 : index
    %c0_100 = arith.constant 0 : index
    %167 = vector.load %arg6[%c2_98, %c0_99, %c0_100] : memref<20x32x8xf32, #tpu.memory_space<vmem>>, vector<1x32x8xf32>
    %168 = vector.shape_cast %167 : vector<1x32x8xf32> to vector<32x8xf32>
    %cst_101 = arith.constant dense<0.000000e+00> : vector<32x8xf32>
    %169 = tpu.matmul %45, %168, %cst_101 {dimension_numbers = #tpu.dot_dimension_numbers<[1], [0], [0], [1], [0, 0, 1, 1], [], []>} : vector<32x32xf32>, vector<32x8xf32>, vector<32x8xf32> -> vector<32x8xf32>
    %c2_102 = arith.constant 2 : index
    %c0_103 = arith.constant 0 : index
    %170 = vector.load %arg8[%c2_102, %c0_103] : memref<20x8xf32, #tpu.memory_space<vmem>>, vector<1x8xf32>
    %171 = vector.broadcast %170 : vector<1x8xf32> to vector<32x8xf32>
    %172 = arith.addf %169, %171 : vector<32x8xf32>
    %173 = arith.mulf %172, %47 : vector<32x8xf32>
    %c6 = arith.constant 6 : index
    %c0_104 = arith.constant 0 : index
    %c0_105 = arith.constant 0 : index
    %174 = vector.load %arg6[%c6, %c0_104, %c0_105] : memref<20x32x8xf32, #tpu.memory_space<vmem>>, vector<1x32x8xf32>
    %175 = vector.shape_cast %174 : vector<1x32x8xf32> to vector<32x8xf32>
    %cst_106 = arith.constant dense<0.000000e+00> : vector<32x8xf32>
    %176 = tpu.matmul %45, %175, %cst_106 {dimension_numbers = #tpu.dot_dimension_numbers<[1], [0], [0], [1], [0, 0, 1, 1], [], []>} : vector<32x32xf32>, vector<32x8xf32>, vector<32x8xf32> -> vector<32x8xf32>
    %c6_107 = arith.constant 6 : index
    %c0_108 = arith.constant 0 : index
    %177 = vector.load %arg8[%c6_107, %c0_108] : memref<20x8xf32, #tpu.memory_space<vmem>>, vector<1x8xf32>
    %178 = vector.broadcast %177 : vector<1x8xf32> to vector<32x8xf32>
    %179 = arith.addf %176, %178 : vector<32x8xf32>
    %180 = arith.mulf %179, %49 : vector<32x8xf32>
    %181 = arith.addf %173, %180 : vector<32x8xf32>
    %c10 = arith.constant 10 : index
    %c0_109 = arith.constant 0 : index
    %c0_110 = arith.constant 0 : index
    %182 = vector.load %arg6[%c10, %c0_109, %c0_110] : memref<20x32x8xf32, #tpu.memory_space<vmem>>, vector<1x32x8xf32>
    %183 = vector.shape_cast %182 : vector<1x32x8xf32> to vector<32x8xf32>
    %cst_111 = arith.constant dense<0.000000e+00> : vector<32x8xf32>
    %184 = tpu.matmul %45, %183, %cst_111 {dimension_numbers = #tpu.dot_dimension_numbers<[1], [0], [0], [1], [0, 0, 1, 1], [], []>} : vector<32x32xf32>, vector<32x8xf32>, vector<32x8xf32> -> vector<32x8xf32>
    %c10_112 = arith.constant 10 : index
    %c0_113 = arith.constant 0 : index
    %185 = vector.load %arg8[%c10_112, %c0_113] : memref<20x8xf32, #tpu.memory_space<vmem>>, vector<1x8xf32>
    %186 = vector.broadcast %185 : vector<1x8xf32> to vector<32x8xf32>
    %187 = arith.addf %184, %186 : vector<32x8xf32>
    %188 = arith.mulf %187, %47 : vector<32x8xf32>
    %c14 = arith.constant 14 : index
    %c0_114 = arith.constant 0 : index
    %c0_115 = arith.constant 0 : index
    %189 = vector.load %arg6[%c14, %c0_114, %c0_115] : memref<20x32x8xf32, #tpu.memory_space<vmem>>, vector<1x32x8xf32>
    %190 = vector.shape_cast %189 : vector<1x32x8xf32> to vector<32x8xf32>
    %cst_116 = arith.constant dense<0.000000e+00> : vector<32x8xf32>
    %191 = tpu.matmul %45, %190, %cst_116 {dimension_numbers = #tpu.dot_dimension_numbers<[1], [0], [0], [1], [0, 0, 1, 1], [], []>} : vector<32x32xf32>, vector<32x8xf32>, vector<32x8xf32> -> vector<32x8xf32>
    %c14_117 = arith.constant 14 : index
    %c0_118 = arith.constant 0 : index
    %192 = vector.load %arg8[%c14_117, %c0_118] : memref<20x8xf32, #tpu.memory_space<vmem>>, vector<1x8xf32>
    %193 = vector.broadcast %192 : vector<1x8xf32> to vector<32x8xf32>
    %194 = arith.addf %191, %193 : vector<32x8xf32>
    %195 = arith.mulf %194, %49 : vector<32x8xf32>
    %196 = arith.addf %188, %195 : vector<32x8xf32>
    %c18 = arith.constant 18 : index
    %c0_119 = arith.constant 0 : index
    %c0_120 = arith.constant 0 : index
    %197 = vector.load %arg6[%c18, %c0_119, %c0_120] : memref<20x32x8xf32, #tpu.memory_space<vmem>>, vector<1x32x8xf32>
    %198 = vector.shape_cast %197 : vector<1x32x8xf32> to vector<32x8xf32>
    %cst_121 = arith.constant dense<0.000000e+00> : vector<32x8xf32>
    %199 = tpu.matmul %45, %198, %cst_121 {dimension_numbers = #tpu.dot_dimension_numbers<[1], [0], [0], [1], [0, 0, 1, 1], [], []>} : vector<32x32xf32>, vector<32x8xf32>, vector<32x8xf32> -> vector<32x8xf32>
    %c18_122 = arith.constant 18 : index
    %c0_123 = arith.constant 0 : index
    %200 = vector.load %arg8[%c18_122, %c0_123] : memref<20x8xf32, #tpu.memory_space<vmem>>, vector<1x8xf32>
    %201 = vector.broadcast %200 : vector<1x8xf32> to vector<32x8xf32>
    %202 = arith.addf %199, %201 : vector<32x8xf32>
    %203 = vector.shape_cast %181 : vector<32x8xf32> to vector<2x16x8xf32>
    %204 = vector.shape_cast %196 : vector<32x8xf32> to vector<2x16x8xf32>
    %205 = vector.shape_cast %202 : vector<32x8xf32> to vector<2x16x8xf32>
    "tpu.trace_start"() <{level = 10 : i32, message = "bld,bmd->blm"}> : () -> ()
    %cst_124 = arith.constant dense<0.000000e+00> : vector<2x16x16xf32>
    %206 = tpu.matmul %203, %204, %cst_124 {dimension_numbers = #tpu.dot_dimension_numbers<[2], [2], [1], [1], [0, 0, 0, 1, 1, 1], [0], [0]>} : vector<2x16x8xf32>, vector<2x16x8xf32>, vector<2x16x16xf32> -> vector<2x16x16xf32>
    "tpu.trace_stop"() : () -> ()
    %cst_125 = arith.constant 0.353553385 : f32
    %207 = vector.broadcast %cst_125 : f32 to vector<2x16x16xf32>
    %208 = arith.mulf %206, %207 : vector<2x16x16xf32>
    %cst_126 = arith.constant dense<0xFF800000> : vector<2x16xf32>
    %209 = vector.multi_reduction <maximumf>, %208, %cst_126 [2] : vector<2x16x16xf32> to vector<2x16xf32>
    %210 = vector.shape_cast %209 : vector<2x16xf32> to vector<2x16x1xf32>
    %211 = vector.broadcast %210 : vector<2x16x1xf32> to vector<2x16x16xf32>
    %212 = arith.subf %208, %211 : vector<2x16x16xf32>
    %213 = math.exp %212 : vector<2x16x16xf32>
    %cst_127 = arith.constant dense<0.000000e+00> : vector<2x16xf32>
    %214 = vector.multi_reduction <add>, %213, %cst_127 [2] : vector<2x16x16xf32> to vector<2x16xf32>
    %215 = vector.shape_cast %214 : vector<2x16xf32> to vector<2x16x1xf32>
    %216 = tpu.reciprocal %215 {approx = true} : vector<2x16x1xf32> -> vector<2x16x1xf32>
    %217 = vector.broadcast %216 : vector<2x16x1xf32> to vector<2x16x16xf32>
    %218 = arith.mulf %213, %217 : vector<2x16x16xf32>
    "tpu.trace_start"() <{level = 10 : i32, message = "blm,bmd->bld"}> : () -> ()
    %cst_128 = arith.constant dense<0.000000e+00> : vector<2x16x8xf32>
    %219 = tpu.matmul %218, %205, %cst_128 {dimension_numbers = #tpu.dot_dimension_numbers<[2], [1], [1], [2], [0, 0, 0, 1, 1, 2], [0], [0]>} : vector<2x16x16xf32>, vector<2x16x8xf32>, vector<2x16x8xf32> -> vector<2x16x8xf32>
    "tpu.trace_stop"() : () -> ()
    %220 = vector.shape_cast %219 : vector<2x16x8xf32> to vector<32x8xf32>
    %c2_129 = arith.constant 2 : index
    %c0_130 = arith.constant 0 : index
    %c0_131 = arith.constant 0 : index
    %221 = vector.load %arg7[%c2_129, %c0_130, %c0_131] : memref<4x8x32xf32, #tpu.memory_space<vmem>>, vector<1x8x32xf32>
    %222 = vector.shape_cast %221 : vector<1x8x32xf32> to vector<8x32xf32>
    %cst_132 = arith.constant dense<0.000000e+00> : vector<32x32xf32>
    %223 = tpu.matmul %220, %222, %cst_132 {dimension_numbers = #tpu.dot_dimension_numbers<[1], [0], [0], [1], [0, 0, 1, 1], [], []>} : vector<32x8xf32>, vector<8x32xf32>, vector<32x32xf32> -> vector<32x32xf32>
    %224 = arith.addf %166, %223 : vector<32x32xf32>
    %c3 = arith.constant 3 : index
    %c0_133 = arith.constant 0 : index
    %c0_134 = arith.constant 0 : index
    %225 = vector.load %arg6[%c3, %c0_133, %c0_134] : memref<20x32x8xf32, #tpu.memory_space<vmem>>, vector<1x32x8xf32>
    %226 = vector.shape_cast %225 : vector<1x32x8xf32> to vector<32x8xf32>
    %cst_135 = arith.constant dense<0.000000e+00> : vector<32x8xf32>
    %227 = tpu.matmul %45, %226, %cst_135 {dimension_numbers = #tpu.dot_dimension_numbers<[1], [0], [0], [1], [0, 0, 1, 1], [], []>} : vector<32x32xf32>, vector<32x8xf32>, vector<32x8xf32> -> vector<32x8xf32>
    %c3_136 = arith.constant 3 : index
    %c0_137 = arith.constant 0 : index
    %228 = vector.load %arg8[%c3_136, %c0_137] : memref<20x8xf32, #tpu.memory_space<vmem>>, vector<1x8xf32>
    %229 = vector.broadcast %228 : vector<1x8xf32> to vector<32x8xf32>
    %230 = arith.addf %227, %229 : vector<32x8xf32>
    %231 = arith.mulf %230, %47 : vector<32x8xf32>
    %c7 = arith.constant 7 : index
    %c0_138 = arith.constant 0 : index
    %c0_139 = arith.constant 0 : index
    %232 = vector.load %arg6[%c7, %c0_138, %c0_139] : memref<20x32x8xf32, #tpu.memory_space<vmem>>, vector<1x32x8xf32>
    %233 = vector.shape_cast %232 : vector<1x32x8xf32> to vector<32x8xf32>
    %cst_140 = arith.constant dense<0.000000e+00> : vector<32x8xf32>
    %234 = tpu.matmul %45, %233, %cst_140 {dimension_numbers = #tpu.dot_dimension_numbers<[1], [0], [0], [1], [0, 0, 1, 1], [], []>} : vector<32x32xf32>, vector<32x8xf32>, vector<32x8xf32> -> vector<32x8xf32>
    %c7_141 = arith.constant 7 : index
    %c0_142 = arith.constant 0 : index
    %235 = vector.load %arg8[%c7_141, %c0_142] : memref<20x8xf32, #tpu.memory_space<vmem>>, vector<1x8xf32>
    %236 = vector.broadcast %235 : vector<1x8xf32> to vector<32x8xf32>
    %237 = arith.addf %234, %236 : vector<32x8xf32>
    %238 = arith.mulf %237, %49 : vector<32x8xf32>
    %239 = arith.addf %231, %238 : vector<32x8xf32>
    %c11 = arith.constant 11 : index
    %c0_143 = arith.constant 0 : index
    %c0_144 = arith.constant 0 : index
    %240 = vector.load %arg6[%c11, %c0_143, %c0_144] : memref<20x32x8xf32, #tpu.memory_space<vmem>>, vector<1x32x8xf32>
    %241 = vector.shape_cast %240 : vector<1x32x8xf32> to vector<32x8xf32>
    %cst_145 = arith.constant dense<0.000000e+00> : vector<32x8xf32>
    %242 = tpu.matmul %45, %241, %cst_145 {dimension_numbers = #tpu.dot_dimension_numbers<[1], [0], [0], [1], [0, 0, 1, 1], [], []>} : vector<32x32xf32>, vector<32x8xf32>, vector<32x8xf32> -> vector<32x8xf32>
    %c11_146 = arith.constant 11 : index
    %c0_147 = arith.constant 0 : index
    %243 = vector.load %arg8[%c11_146, %c0_147] : memref<20x8xf32, #tpu.memory_space<vmem>>, vector<1x8xf32>
    %244 = vector.broadcast %243 : vector<1x8xf32> to vector<32x8xf32>
    %245 = arith.addf %242, %244 : vector<32x8xf32>
    %246 = arith.mulf %245, %47 : vector<32x8xf32>
    %c15 = arith.constant 15 : index
    %c0_148 = arith.constant 0 : index
    %c0_149 = arith.constant 0 : index
    %247 = vector.load %arg6[%c15, %c0_148, %c0_149] : memref<20x32x8xf32, #tpu.memory_space<vmem>>, vector<1x32x8xf32>
    %248 = vector.shape_cast %247 : vector<1x32x8xf32> to vector<32x8xf32>
    %cst_150 = arith.constant dense<0.000000e+00> : vector<32x8xf32>
    %249 = tpu.matmul %45, %248, %cst_150 {dimension_numbers = #tpu.dot_dimension_numbers<[1], [0], [0], [1], [0, 0, 1, 1], [], []>} : vector<32x32xf32>, vector<32x8xf32>, vector<32x8xf32> -> vector<32x8xf32>
    %c15_151 = arith.constant 15 : index
    %c0_152 = arith.constant 0 : index
    %250 = vector.load %arg8[%c15_151, %c0_152] : memref<20x8xf32, #tpu.memory_space<vmem>>, vector<1x8xf32>
    %251 = vector.broadcast %250 : vector<1x8xf32> to vector<32x8xf32>
    %252 = arith.addf %249, %251 : vector<32x8xf32>
    %253 = arith.mulf %252, %49 : vector<32x8xf32>
    %254 = arith.addf %246, %253 : vector<32x8xf32>
    %c19 = arith.constant 19 : index
    %c0_153 = arith.constant 0 : index
    %c0_154 = arith.constant 0 : index
    %255 = vector.load %arg6[%c19, %c0_153, %c0_154] : memref<20x32x8xf32, #tpu.memory_space<vmem>>, vector<1x32x8xf32>
    %256 = vector.shape_cast %255 : vector<1x32x8xf32> to vector<32x8xf32>
    %cst_155 = arith.constant dense<0.000000e+00> : vector<32x8xf32>
    %257 = tpu.matmul %45, %256, %cst_155 {dimension_numbers = #tpu.dot_dimension_numbers<[1], [0], [0], [1], [0, 0, 1, 1], [], []>} : vector<32x32xf32>, vector<32x8xf32>, vector<32x8xf32> -> vector<32x8xf32>
    %c19_156 = arith.constant 19 : index
    %c0_157 = arith.constant 0 : index
    %258 = vector.load %arg8[%c19_156, %c0_157] : memref<20x8xf32, #tpu.memory_space<vmem>>, vector<1x8xf32>
    %259 = vector.broadcast %258 : vector<1x8xf32> to vector<32x8xf32>
    %260 = arith.addf %257, %259 : vector<32x8xf32>
    %261 = vector.shape_cast %239 : vector<32x8xf32> to vector<2x16x8xf32>
    %262 = vector.shape_cast %254 : vector<32x8xf32> to vector<2x16x8xf32>
    %263 = vector.shape_cast %260 : vector<32x8xf32> to vector<2x16x8xf32>
    "tpu.trace_start"() <{level = 10 : i32, message = "bld,bmd->blm"}> : () -> ()
    %cst_158 = arith.constant dense<0.000000e+00> : vector<2x16x16xf32>
    %264 = tpu.matmul %261, %262, %cst_158 {dimension_numbers = #tpu.dot_dimension_numbers<[2], [2], [1], [1], [0, 0, 0, 1, 1, 1], [0], [0]>} : vector<2x16x8xf32>, vector<2x16x8xf32>, vector<2x16x16xf32> -> vector<2x16x16xf32>
    "tpu.trace_stop"() : () -> ()
    %cst_159 = arith.constant 0.353553385 : f32
    %265 = vector.broadcast %cst_159 : f32 to vector<2x16x16xf32>
    %266 = arith.mulf %264, %265 : vector<2x16x16xf32>
    %cst_160 = arith.constant dense<0xFF800000> : vector<2x16xf32>
    %267 = vector.multi_reduction <maximumf>, %266, %cst_160 [2] : vector<2x16x16xf32> to vector<2x16xf32>
    %268 = vector.shape_cast %267 : vector<2x16xf32> to vector<2x16x1xf32>
    %269 = vector.broadcast %268 : vector<2x16x1xf32> to vector<2x16x16xf32>
    %270 = arith.subf %266, %269 : vector<2x16x16xf32>
    %271 = math.exp %270 : vector<2x16x16xf32>
    %cst_161 = arith.constant dense<0.000000e+00> : vector<2x16xf32>
    %272 = vector.multi_reduction <add>, %271, %cst_161 [2] : vector<2x16x16xf32> to vector<2x16xf32>
    %273 = vector.shape_cast %272 : vector<2x16xf32> to vector<2x16x1xf32>
    %274 = tpu.reciprocal %273 {approx = true} : vector<2x16x1xf32> -> vector<2x16x1xf32>
    %275 = vector.broadcast %274 : vector<2x16x1xf32> to vector<2x16x16xf32>
    %276 = arith.mulf %271, %275 : vector<2x16x16xf32>
    "tpu.trace_start"() <{level = 10 : i32, message = "blm,bmd->bld"}> : () -> ()
    %cst_162 = arith.constant dense<0.000000e+00> : vector<2x16x8xf32>
    %277 = tpu.matmul %276, %263, %cst_162 {dimension_numbers = #tpu.dot_dimension_numbers<[2], [1], [1], [2], [0, 0, 0, 1, 1, 2], [0], [0]>} : vector<2x16x16xf32>, vector<2x16x8xf32>, vector<2x16x8xf32> -> vector<2x16x8xf32>
    "tpu.trace_stop"() : () -> ()
    %278 = vector.shape_cast %277 : vector<2x16x8xf32> to vector<32x8xf32>
    %c3_163 = arith.constant 3 : index
    %c0_164 = arith.constant 0 : index
    %c0_165 = arith.constant 0 : index
    %279 = vector.load %arg7[%c3_163, %c0_164, %c0_165] : memref<4x8x32xf32, #tpu.memory_space<vmem>>, vector<1x8x32xf32>
    %280 = vector.shape_cast %279 : vector<1x8x32xf32> to vector<8x32xf32>
    %cst_166 = arith.constant dense<0.000000e+00> : vector<32x32xf32>
    %281 = tpu.matmul %278, %280, %cst_166 {dimension_numbers = #tpu.dot_dimension_numbers<[1], [0], [0], [1], [0, 0, 1, 1], [], []>} : vector<32x8xf32>, vector<8x32xf32>, vector<32x32xf32> -> vector<32x32xf32>
    %282 = arith.addf %224, %281 : vector<32x32xf32>
    %283 = arith.addf %45, %282 : vector<32x32xf32>
    %c8_167 = arith.constant 8 : index
    %c0_168 = arith.constant 0 : index
    %284 = vector.load %arg2[%c8_167, %c0_168] : memref<12x32xf32, #tpu.memory_space<vmem>>, vector<1x32xf32>
    %285 = vector.broadcast %284 : vector<1x32xf32> to vector<32x32xf32>
    %286 = arith.addf %283, %285 : vector<32x32xf32>
    %c0_169 = arith.constant 0 : index
    %c0_170 = arith.constant 0 : index
    %c0_171 = arith.constant 0 : index
    %287 = vector.load %arg9[%c0_169, %c0_170, %c0_171] : memref<3x32x32xf32, #tpu.memory_space<vmem>>, vector<1x32x32xf32>
    %288 = vector.shape_cast %287 : vector<1x32x32xf32> to vector<32x32xf32>
    %cst_172 = arith.constant dense<0.000000e+00> : vector<32x32xf32>
    %289 = tpu.matmul %286, %288, %cst_172 {dimension_numbers = #tpu.dot_dimension_numbers<[1], [0], [0], [1], [0, 0, 1, 1], [], []>} : vector<32x32xf32>, vector<32x32xf32>, vector<32x32xf32> -> vector<32x32xf32>
    %c1_173 = arith.constant 1 : index
    %c0_174 = arith.constant 0 : index
    %c0_175 = arith.constant 0 : index
    %290 = vector.load %arg9[%c1_173, %c0_174, %c0_175] : memref<3x32x32xf32, #tpu.memory_space<vmem>>, vector<1x32x32xf32>
    %291 = vector.shape_cast %290 : vector<1x32x32xf32> to vector<32x32xf32>
    %cst_176 = arith.constant dense<0.000000e+00> : vector<32x32xf32>
    %292 = tpu.matmul %286, %291, %cst_176 {dimension_numbers = #tpu.dot_dimension_numbers<[1], [0], [0], [1], [0, 0, 1, 1], [], []>} : vector<32x32xf32>, vector<32x32xf32>, vector<32x32xf32> -> vector<32x32xf32>
    %293 = arith.negf %292 : vector<32x32xf32>
    %294 = math.exp %293 : vector<32x32xf32>
    %cst_177 = arith.constant 1.000000e+00 : f32
    %295 = vector.broadcast %cst_177 : f32 to vector<32x32xf32>
    %296 = arith.addf %295, %294 : vector<32x32xf32>
    %297 = arith.divf %295, %296 : vector<32x32xf32>
    %298 = arith.mulf %289, %297 : vector<32x32xf32>
    %c3_178 = arith.constant 3 : index
    %c0_179 = arith.constant 0 : index
    %c0_180 = arith.constant 0 : index
    %299 = vector.load %arg10[%c3_178, %c0_179, %c0_180] : memref<7x32x32xf32, #tpu.memory_space<vmem>>, vector<1x32x32xf32>
    %300 = vector.shape_cast %299 : vector<1x32x32xf32> to vector<32x32xf32>
    %301 = arith.mulf %298, %300 : vector<32x32xf32>
    %c3_i32 = arith.constant 3 : i32
    %302 = tpu.dynamic_rotate %298 by %c3_i32 dim 0 : vector<32x32xf32>, i32 -> vector<32x32xf32>
    %c0_181 = arith.constant 0 : index
    %c0_182 = arith.constant 0 : index
    %c0_183 = arith.constant 0 : index
    %303 = vector.load %arg10[%c0_181, %c0_182, %c0_183] : memref<7x32x32xf32, #tpu.memory_space<vmem>>, vector<1x32x32xf32>
    %304 = vector.shape_cast %303 : vector<1x32x32xf32> to vector<32x32xf32>
    %305 = arith.mulf %302, %304 : vector<32x32xf32>
    %306 = arith.addf %301, %305 : vector<32x32xf32>
    %c2_i32 = arith.constant 2 : i32
    %307 = tpu.dynamic_rotate %298 by %c2_i32 dim 0 : vector<32x32xf32>, i32 -> vector<32x32xf32>
    %c1_184 = arith.constant 1 : index
    %c0_185 = arith.constant 0 : index
    %c0_186 = arith.constant 0 : index
    %308 = vector.load %arg10[%c1_184, %c0_185, %c0_186] : memref<7x32x32xf32, #tpu.memory_space<vmem>>, vector<1x32x32xf32>
    %309 = vector.shape_cast %308 : vector<1x32x32xf32> to vector<32x32xf32>
    %310 = arith.mulf %307, %309 : vector<32x32xf32>
    %311 = arith.addf %306, %310 : vector<32x32xf32>
    %c1_i32 = arith.constant 1 : i32
    %312 = tpu.dynamic_rotate %298 by %c1_i32 dim 0 : vector<32x32xf32>, i32 -> vector<32x32xf32>
    %c2_187 = arith.constant 2 : index
    %c0_188 = arith.constant 0 : index
    %c0_189 = arith.constant 0 : index
    %313 = vector.load %arg10[%c2_187, %c0_188, %c0_189] : memref<7x32x32xf32, #tpu.memory_space<vmem>>, vector<1x32x32xf32>
    %314 = vector.shape_cast %313 : vector<1x32x32xf32> to vector<32x32xf32>
    %315 = arith.mulf %312, %314 : vector<32x32xf32>
    %316 = arith.addf %311, %315 : vector<32x32xf32>
    %c31_i32 = arith.constant 31 : i32
    %317 = tpu.dynamic_rotate %298 by %c31_i32 dim 0 : vector<32x32xf32>, i32 -> vector<32x32xf32>
    %c4_190 = arith.constant 4 : index
    %c0_191 = arith.constant 0 : index
    %c0_192 = arith.constant 0 : index
    %318 = vector.load %arg10[%c4_190, %c0_191, %c0_192] : memref<7x32x32xf32, #tpu.memory_space<vmem>>, vector<1x32x32xf32>
    %319 = vector.shape_cast %318 : vector<1x32x32xf32> to vector<32x32xf32>
    %320 = arith.mulf %317, %319 : vector<32x32xf32>
    %321 = arith.addf %316, %320 : vector<32x32xf32>
    %c30_i32 = arith.constant 30 : i32
    %322 = tpu.dynamic_rotate %298 by %c30_i32 dim 0 : vector<32x32xf32>, i32 -> vector<32x32xf32>
    %c5_193 = arith.constant 5 : index
    %c0_194 = arith.constant 0 : index
    %c0_195 = arith.constant 0 : index
    %323 = vector.load %arg10[%c5_193, %c0_194, %c0_195] : memref<7x32x32xf32, #tpu.memory_space<vmem>>, vector<1x32x32xf32>
    %324 = vector.shape_cast %323 : vector<1x32x32xf32> to vector<32x32xf32>
    %325 = arith.mulf %322, %324 : vector<32x32xf32>
    %326 = arith.addf %321, %325 : vector<32x32xf32>
    %c29_i32 = arith.constant 29 : i32
    %327 = tpu.dynamic_rotate %298 by %c29_i32 dim 0 : vector<32x32xf32>, i32 -> vector<32x32xf32>
    %c6_196 = arith.constant 6 : index
    %c0_197 = arith.constant 0 : index
    %c0_198 = arith.constant 0 : index
    %328 = vector.load %arg10[%c6_196, %c0_197, %c0_198] : memref<7x32x32xf32, #tpu.memory_space<vmem>>, vector<1x32x32xf32>
    %329 = vector.shape_cast %328 : vector<1x32x32xf32> to vector<32x32xf32>
    %330 = arith.mulf %327, %329 : vector<32x32xf32>
    %331 = arith.addf %326, %330 : vector<32x32xf32>
    %c9_199 = arith.constant 9 : index
    %c0_200 = arith.constant 0 : index
    %332 = vector.load %arg2[%c9_199, %c0_200] : memref<12x32xf32, #tpu.memory_space<vmem>>, vector<1x32xf32>
    %333 = vector.broadcast %332 : vector<1x32xf32> to vector<32x32xf32>
    %334 = arith.mulf %331, %333 : vector<32x32xf32>
    %c10_201 = arith.constant 10 : index
    %c0_202 = arith.constant 0 : index
    %335 = vector.load %arg2[%c10_201, %c0_202] : memref<12x32xf32, #tpu.memory_space<vmem>>, vector<1x32xf32>
    %336 = vector.broadcast %335 : vector<1x32xf32> to vector<32x32xf32>
    %337 = arith.addf %334, %336 : vector<32x32xf32>
    %338 = arith.negf %337 : vector<32x32xf32>
    %339 = math.exp %338 : vector<32x32xf32>
    %cst_203 = arith.constant 1.000000e+00 : f32
    %340 = vector.broadcast %cst_203 : f32 to vector<32x32xf32>
    %341 = arith.addf %340, %339 : vector<32x32xf32>
    %342 = arith.divf %340, %341 : vector<32x32xf32>
    %343 = arith.mulf %337, %342 : vector<32x32xf32>
    %c2_204 = arith.constant 2 : index
    %c0_205 = arith.constant 0 : index
    %c0_206 = arith.constant 0 : index
    %344 = vector.load %arg9[%c2_204, %c0_205, %c0_206] : memref<3x32x32xf32, #tpu.memory_space<vmem>>, vector<1x32x32xf32>
    %345 = vector.shape_cast %344 : vector<1x32x32xf32> to vector<32x32xf32>
    %cst_207 = arith.constant dense<0.000000e+00> : vector<32x32xf32>
    %346 = tpu.matmul %343, %345, %cst_207 {dimension_numbers = #tpu.dot_dimension_numbers<[1], [0], [0], [1], [0, 0, 1, 1], [], []>} : vector<32x32xf32>, vector<32x32xf32>, vector<32x32xf32> -> vector<32x32xf32>
    %c11_208 = arith.constant 11 : index
    %c0_209 = arith.constant 0 : index
    %347 = vector.load %arg2[%c11_208, %c0_209] : memref<12x32xf32, #tpu.memory_space<vmem>>, vector<1x32xf32>
    %348 = vector.broadcast %347 : vector<1x32xf32> to vector<32x32xf32>
    %349 = arith.addf %346, %348 : vector<32x32xf32>
    %350 = arith.addf %286, %349 : vector<32x32xf32>
    %c3_210 = arith.constant 3 : index
    %c0_211 = arith.constant 0 : index
    %351 = vector.load %arg2[%c3_210, %c0_211] : memref<12x32xf32, #tpu.memory_space<vmem>>, vector<1x32xf32>
    %c4_212 = arith.constant 4 : index
    %c0_213 = arith.constant 0 : index
    %352 = vector.load %arg2[%c4_212, %c0_213] : memref<12x32xf32, #tpu.memory_space<vmem>>, vector<1x32xf32>
    %cst_214 = arith.constant dense<0.000000e+00> : vector<32xf32>
    %353 = vector.multi_reduction <add>, %350, %cst_214 [1] : vector<32x32xf32> to vector<32xf32>
    %354 = vector.shape_cast %353 : vector<32xf32> to vector<32x1xf32>
    %cst_215 = arith.constant 3.200000e+01 : f32
    %355 = vector.broadcast %cst_215 : f32 to vector<32x1xf32>
    %356 = arith.divf %354, %355 : vector<32x1xf32>
    %357 = vector.broadcast %356 : vector<32x1xf32> to vector<32x32xf32>
    %358 = arith.subf %350, %357 : vector<32x32xf32>
    %359 = arith.mulf %358, %358 : vector<32x32xf32>
    %cst_216 = arith.constant dense<0.000000e+00> : vector<32xf32>
    %360 = vector.multi_reduction <add>, %359, %cst_216 [1] : vector<32x32xf32> to vector<32xf32>
    %361 = vector.shape_cast %360 : vector<32xf32> to vector<32x1xf32>
    %cst_217 = arith.constant 3.200000e+01 : f32
    %362 = vector.broadcast %cst_217 : f32 to vector<32x1xf32>
    %363 = arith.divf %361, %362 : vector<32x1xf32>
    %364 = vector.broadcast %356 : vector<32x1xf32> to vector<32x32xf32>
    %365 = arith.subf %350, %364 : vector<32x32xf32>
    %cst_218 = arith.constant 9.99999974E-6 : f32
    %366 = vector.broadcast %cst_218 : f32 to vector<32x1xf32>
    %367 = arith.addf %363, %366 : vector<32x1xf32>
    %368 = math.rsqrt %367 : vector<32x1xf32>
    %369 = vector.broadcast %368 : vector<32x1xf32> to vector<32x32xf32>
    %370 = arith.mulf %365, %369 : vector<32x32xf32>
    %371 = vector.broadcast %351 : vector<1x32xf32> to vector<32x32xf32>
    %372 = arith.mulf %370, %371 : vector<32x32xf32>
    %373 = vector.broadcast %352 : vector<1x32xf32> to vector<32x32xf32>
    %374 = arith.addf %372, %373 : vector<32x32xf32>
    %c1_219 = arith.constant 1 : index
    %c0_220 = arith.constant 0 : index
    %c0_221 = arith.constant 0 : index
    %375 = vector.load %arg4[%c1_219, %c0_220, %c0_221] : memref<2x32x64xf32, #tpu.memory_space<vmem>>, vector<1x32x64xf32>
    %376 = vector.shape_cast %375 : vector<1x32x64xf32> to vector<32x64xf32>
    %cst_222 = arith.constant dense<0.000000e+00> : vector<32x64xf32>
    %377 = tpu.matmul %374, %376, %cst_222 {dimension_numbers = #tpu.dot_dimension_numbers<[1], [0], [0], [1], [0, 0, 1, 1], [], []>} : vector<32x32xf32>, vector<32x64xf32>, vector<32x64xf32> -> vector<32x64xf32>
    %c1_223 = arith.constant 1 : index
    %c0_224 = arith.constant 0 : index
    %378 = vector.load %arg3[%c1_223, %c0_224] : memref<2x64xf32, #tpu.memory_space<vmem>>, vector<1x64xf32>
    %379 = vector.broadcast %378 : vector<1x64xf32> to vector<32x64xf32>
    %380 = arith.addf %377, %379 : vector<32x64xf32>
    %381 = arith.negf %380 : vector<32x64xf32>
    %382 = math.exp %381 : vector<32x64xf32>
    %cst_225 = arith.constant 1.000000e+00 : f32
    %383 = vector.broadcast %cst_225 : f32 to vector<32x64xf32>
    %384 = arith.addf %383, %382 : vector<32x64xf32>
    %385 = arith.divf %383, %384 : vector<32x64xf32>
    %386 = arith.mulf %380, %385 : vector<32x64xf32>
    %c1_226 = arith.constant 1 : index
    %c0_227 = arith.constant 0 : index
    %c0_228 = arith.constant 0 : index
    %387 = vector.load %arg5[%c1_226, %c0_227, %c0_228] : memref<2x64x32xf32, #tpu.memory_space<vmem>>, vector<1x64x32xf32>
    %388 = vector.shape_cast %387 : vector<1x64x32xf32> to vector<64x32xf32>
    %cst_229 = arith.constant dense<0.000000e+00> : vector<32x32xf32>
    %389 = tpu.matmul %386, %388, %cst_229 {dimension_numbers = #tpu.dot_dimension_numbers<[1], [0], [0], [1], [0, 0, 1, 1], [], []>} : vector<32x64xf32>, vector<64x32xf32>, vector<32x32xf32> -> vector<32x32xf32>
    %c5_230 = arith.constant 5 : index
    %c0_231 = arith.constant 0 : index
    %390 = vector.load %arg2[%c5_230, %c0_231] : memref<12x32xf32, #tpu.memory_space<vmem>>, vector<1x32xf32>
    %391 = vector.broadcast %390 : vector<1x32xf32> to vector<32x32xf32>
    %392 = arith.addf %389, %391 : vector<32x32xf32>
    %cst_232 = arith.constant 5.000000e-01 : f32
    %393 = vector.broadcast %cst_232 : f32 to vector<32x32xf32>
    %394 = arith.mulf %393, %392 : vector<32x32xf32>
    %395 = arith.addf %350, %394 : vector<32x32xf32>
    %c6_233 = arith.constant 6 : index
    %c0_234 = arith.constant 0 : index
    %396 = vector.load %arg2[%c6_233, %c0_234] : memref<12x32xf32, #tpu.memory_space<vmem>>, vector<1x32xf32>
    %c7_235 = arith.constant 7 : index
    %c0_236 = arith.constant 0 : index
    %397 = vector.load %arg2[%c7_235, %c0_236] : memref<12x32xf32, #tpu.memory_space<vmem>>, vector<1x32xf32>
    %cst_237 = arith.constant dense<0.000000e+00> : vector<32xf32>
    %398 = vector.multi_reduction <add>, %395, %cst_237 [1] : vector<32x32xf32> to vector<32xf32>
    %399 = vector.shape_cast %398 : vector<32xf32> to vector<32x1xf32>
    %cst_238 = arith.constant 3.200000e+01 : f32
    %400 = vector.broadcast %cst_238 : f32 to vector<32x1xf32>
    %401 = arith.divf %399, %400 : vector<32x1xf32>
    %402 = vector.broadcast %401 : vector<32x1xf32> to vector<32x32xf32>
    %403 = arith.subf %395, %402 : vector<32x32xf32>
    %404 = arith.mulf %403, %403 : vector<32x32xf32>
    %cst_239 = arith.constant dense<0.000000e+00> : vector<32xf32>
    %405 = vector.multi_reduction <add>, %404, %cst_239 [1] : vector<32x32xf32> to vector<32xf32>
    %406 = vector.shape_cast %405 : vector<32xf32> to vector<32x1xf32>
    %cst_240 = arith.constant 3.200000e+01 : f32
    %407 = vector.broadcast %cst_240 : f32 to vector<32x1xf32>
    %408 = arith.divf %406, %407 : vector<32x1xf32>
    %409 = vector.broadcast %401 : vector<32x1xf32> to vector<32x32xf32>
    %410 = arith.subf %395, %409 : vector<32x32xf32>
    %cst_241 = arith.constant 9.99999974E-6 : f32
    %411 = vector.broadcast %cst_241 : f32 to vector<32x1xf32>
    %412 = arith.addf %408, %411 : vector<32x1xf32>
    %413 = math.rsqrt %412 : vector<32x1xf32>
    %414 = vector.broadcast %413 : vector<32x1xf32> to vector<32x32xf32>
    %415 = arith.mulf %410, %414 : vector<32x32xf32>
    %416 = vector.broadcast %396 : vector<1x32xf32> to vector<32x32xf32>
    %417 = arith.mulf %415, %416 : vector<32x32xf32>
    %418 = vector.broadcast %397 : vector<1x32xf32> to vector<32x32xf32>
    %419 = arith.addf %417, %418 : vector<32x32xf32>
    %c0_242 = arith.constant 0 : index
    %c0_243 = arith.constant 0 : index
    %420 = vector.load %arg11[%c0_242, %c0_243] : memref<32x32xf32, #tpu.memory_space<vmem>>, vector<32x32xf32>
    tpu.vector_store %arg11[%c0_242, %c0_243], %419 {strides = array<i32>} : memref<32x32xf32, #tpu.memory_space<vmem>>, vector<32x32xf32>,
    return
  }
}

</mosaic_0001>

<llo_original>
// kernel: conformer_block.1
$region0: #{conformer_block.1}
  #allocation0 [shape = 'u32[]', space=smem, size = 0x4, offset = 0x4, fixed_abs, tag = 'smem constant byte address 0x4 - core index']
  #allocation1 [shape = 'u32[144,128]{1,0:T(1,128)}', space=vmem, size = 0x12000, scoped, tag = 'internal scratch']
  %s0 = inlined_call_operand.vmem [shape: f32[32,32], index: 0, kind: input, shape index: {}]
  %s1 = inlined_call_operand.vmem [shape: f32[2,32,8], index: 1, kind: input, shape index: {}]
  %s2 = inlined_call_operand.vmem [shape: f32[12,32], index: 2, kind: input, shape index: {}]
  %s3 = inlined_call_operand.vmem [shape: f32[2,64], index: 3, kind: input, shape index: {}]
  %s4 = inlined_call_operand.vmem [shape: f32[2,32,64], index: 4, kind: input, shape index: {}]
  %s5 = inlined_call_operand.vmem [shape: f32[2,64,32], index: 5, kind: input, shape index: {}]
  %s6 = inlined_call_operand.vmem [shape: f32[20,32,8], index: 6, kind: input, shape index: {}]
  %s7 = inlined_call_operand.vmem [shape: f32[4,8,32], index: 7, kind: input, shape index: {}]
  %s8 = inlined_call_operand.vmem [shape: f32[20,8], index: 8, kind: input, shape index: {}]
  %s9 = inlined_call_operand.vmem [shape: f32[3,32,32], index: 9, kind: input, shape index: {}]
  %s10 = inlined_call_operand.vmem [shape: f32[7,32,32], index: 10, kind: input, shape index: {}]
  %s11 = inlined_call_operand.hbm [shape: f32[32,32], index: 11, kind: output, shape index: {}]
  %s12 = sld [smem:[#allocation0]]
  $region54: #{conformer_block.1} parent=0
    _
  %s14 = ssub.s32 1, %s12
  %s15 = scalar_select 0, %s14, %s12
  $region1: #{conformer_block.1} parent=0
    #allocation2 [shape = 'u8[16384]{0}', space=vmem, size = 0x4000, scoped, tag = 'output window, operand 0, single buffered']
    #allocation3 [shape = 's32[1]{0}', space=sflag, size = 0x4, scoped, tag = 'scoped memory for conformer_block.1']
    %16 = vsyncpa [#allocation3], 0
    // Predicated region
    $region2: #{conformer_block.1} parent=1 // pred_check
      _
    $region3: #{conformer_block.1} parent=1 // pred_check_branch
      %18 = sbr.rel (0) target = $region5
    $region4: #{conformer_block.1} parent=1 // pred_region
      _
    $region5: #{conformer_block.1} parent=1 // pred_fallthru
      _
    // Predicated region
    $region6: #{conformer_block.1} parent=1 // pred_check
      _
    $region7: #{conformer_block.1} parent=1 // pred_check_branch
      %20 = sbr.rel (0) target = $region9
    $region8: #{conformer_block.1} parent=1 // pred_region
      _
    $region9: #{conformer_block.1} parent=1 // pred_fallthru
      _
    // Predicated region
    $region10: #{conformer_block.1} parent=1 // pred_check
      _
    $region11: #{conformer_block.1} parent=1 // pred_check_branch
      %22 = sbr.rel (0) target = $region13
    $region12: #{conformer_block.1} parent=1 // pred_region
      _
    $region13: #{conformer_block.1} parent=1 // pred_fallthru
      _
    // Predicated region
    $region14: #{conformer_block.1} parent=1 // pred_check
      _
    $region15: #{conformer_block.1} parent=1 // pred_check_branch
      %24 = sbr.rel (0) target = $region17
    $region16: #{conformer_block.1} parent=1 // pred_region
      _
    $region17: #{conformer_block.1} parent=1 // pred_fallthru
      _
    // Predicated region
    $region18: #{conformer_block.1} parent=1 // pred_check
      _
    $region19: #{conformer_block.1} parent=1 // pred_check_branch
      %26 = sbr.rel (0) target = $region21
    $region20: #{conformer_block.1} parent=1 // pred_region
      _
    $region21: #{conformer_block.1} parent=1 // pred_fallthru
      _
    // Predicated region
    $region22: #{conformer_block.1} parent=1 // pred_check
      _
    $region23: #{conformer_block.1} parent=1 // pred_check_branch
      %28 = sbr.rel (0) target = $region25
    $region24: #{conformer_block.1} parent=1 // pred_region
      _
    $region25: #{conformer_block.1} parent=1 // pred_fallthru
      _
    // Predicated region
    $region26: #{conformer_block.1} parent=1 // pred_check
      _
    $region27: #{conformer_block.1} parent=1 // pred_check_branch
      %30 = sbr.rel (0) target = $region29
    $region28: #{conformer_block.1} parent=1 // pred_region
      _
    $region29: #{conformer_block.1} parent=1 // pred_fallthru
      _
    // Predicated region
    $region30: #{conformer_block.1} parent=1 // pred_check
      _
    $region31: #{conformer_block.1} parent=1 // pred_check_branch
      %32 = sbr.rel (0) target = $region33
    $region32: #{conformer_block.1} parent=1 // pred_region
      _
    $region33: #{conformer_block.1} parent=1 // pred_fallthru
      _
    // Predicated region
    $region34: #{conformer_block.1} parent=1 // pred_check
      _
    $region35: #{conformer_block.1} parent=1 // pred_check_branch
      %34 = sbr.rel (0) target = $region37
    $region36: #{conformer_block.1} parent=1 // pred_region
      _
    $region37: #{conformer_block.1} parent=1 // pred_fallthru
      _
    // Predicated region
    $region38: #{conformer_block.1} parent=1 // pred_check
      _
    $region39: #{conformer_block.1} parent=1 // pred_check_branch
      %36 = sbr.rel (0) target = $region41
    $region40: #{conformer_block.1} parent=1 // pred_region
      _
    $region41: #{conformer_block.1} parent=1 // pred_fallthru
      _
    // Predicated region
    $region42: #{conformer_block.1} parent=1 // pred_check
      _
    $region43: #{conformer_block.1} parent=1 // pred_check_branch
      %38 = sbr.rel (0) target = $region45
    $region44: #{conformer_block.1} parent=1 // pred_region
      _
    $region45: #{conformer_block.1} parent=1 // pred_fallthru
      _
    %v39 = vld [vmem:[%s0] sm:$0xff]
    %v40 = vld [vmem:[%s0 + $0x8] sm:$0xff]
    %v41 = vld [vmem:[%s0 + $0x10] sm:$0xff]
    %v42 = vld [vmem:[%s0 + $0x18] sm:$0xff]
    %v43 = vld [vmem:[%s2] sm:$0x1]
    %v44 = vld [vmem:[%s2 + $0x1] sm:$0x1]
    %vm45 = vcmask 261120
    %v46 = vsel %vm45, %v39, 0.0
    %47 = vadd.xlane.f32.xlu0 %v46
    %v48 = vpop.xlane.xlu0 %47
    %v49 = vsel %vm45, %v40, 0.0
    %50 = vadd.xlane.f32.xlu0 %v49
    %v51 = vpop.xlane.xlu0 %50
    %v52 = vsel %vm45, %v41, 0.0
    %53 = vadd.xlane.f32.xlu0 %v52
    %v54 = vpop.xlane.xlu0 %53
    %v55 = vsel %vm45, %v42, 0.0
    %56 = vadd.xlane.f32.xlu0 %v55
    %v57 = vpop.xlane.xlu0 %56
    %v58 = vrcp.pop 32.0
    %v59 = vmul.f32 %v48, %v58
    %v60 = vmul.f32 %v51, %v58
    %v61 = vmul.f32 %v54, %v58
    %v62 = vmul.f32 %v57, %v58
    %v63 = vsub.f32 %v39, %v59
    %v64 = vsub.f32 %v40, %v60
    %v65 = vsub.f32 %v41, %v61
    %v66 = vsub.f32 %v42, %v62
    %v67 = vmul.f32 %v63, %v63
    %v68 = vmul.f32 %v64, %v64
    %v69 = vmul.f32 %v65, %v65
    %v70 = vmul.f32 %v66, %v66
    %v71 = vsel %vm45, %v67, 0.0
    %72 = vadd.xlane.f32.xlu0 %v71
    %v73 = vpop.xlane.xlu0 %72
    %v74 = vsel %vm45, %v68, 0.0
    %75 = vadd.xlane.f32.xlu0 %v74
    %v76 = vpop.xlane.xlu0 %75
    %v77 = vsel %vm45, %v69, 0.0
    %78 = vadd.xlane.f32.xlu0 %v77
    %v79 = vpop.xlane.xlu0 %78
    %v80 = vsel %vm45, %v70, 0.0
    %81 = vadd.xlane.f32.xlu0 %v80
    %v82 = vpop.xlane.xlu0 %81
    %v83 = vmul.f32 %v73, %v58
    %v84 = vmul.f32 %v76, %v58
    %v85 = vmul.f32 %v79, %v58
    %v86 = vmul.f32 %v82, %v58
    %v87 = vadd.f32 %v83, 1e-05
    %v88 = vadd.f32 %v84, 1e-05
    %v89 = vadd.f32 %v85, 1e-05
    %v90 = vadd.f32 %v86, 1e-05
    %v91 = vrsqrt.pop %v87
    %v92 = vrsqrt.pop %v88
    %v93 = vrsqrt.pop %v89
    %v94 = vrsqrt.pop %v90
    %v95 = vmul.f32 %v63, %v91
    %v96 = vmul.f32 %v64, %v92
    %v97 = vmul.f32 %v65, %v93
    %v98 = vmul.f32 %v66, %v94
    %v99 = vlaneseq
    %v100 = vshrl.u32 %v99, 7
    %v101 = vsub.s32 0, %v100
    %v102 = vrot.slane %v43, %v101
    %v103 = vmul.f32 %v95, %v102
    %v104 = vmul.f32 %v96, %v102
    %v105 = vmul.f32 %v97, %v102
    %v106 = vmul.f32 %v98, %v102
    %v107 = vlaneseq
    %v108 = vshrl.u32 %v107, 7
    %v109 = vsub.s32 0, %v108
    %v110 = vrot.slane %v44, %v109
    %v111 = vadd.f32 %v103, %v110
    %v112 = vadd.f32 %v104, %v110
    %v113 = vadd.f32 %v105, %v110
    %v114 = vadd.f32 %v106, %v110
    %v115 = vld [vmem:[%s4] sm:$0xff]
    %v116 = vld [vmem:[%s4 + $0x8] sm:$0xff]
    %v117 = vld [vmem:[%s4 + $0x10] sm:$0xff]
    %v118 = vld [vmem:[%s4 + $0x18] sm:$0xff]
    %v119 = vld [vmem:[%s3] sm:$0x1]
    %v120 = vlaneseq
    %v121 = vshrl.u32 %v120, 7
    %v122 = vsub.s32 0, %v121
    %v123 = vrot.slane %v119, %v122
    %v125 = vsel %vm45, %v111, 0
    %v128 = vsel %vm45, %v112, 0
    %v131 = vsel %vm45, %v113, 0
    %v134 = vsel %vm45, %v114, 0
    %136 = vmatprep.subr.mxu0 0.0
    %137 = vmatpush1.msra.mxu0 %v115
    %138 = vmatprep.subr.mxu0 0.0
    %139 = vmatpush1.msra.mxu0 %v116
    %140 = vmatprep.subr.mxu0 0.0
    %141 = vmatpush1.msra.mxu0 %v117
    %142 = vmatprep.subr.mxu0 0.0
    %143 = vmatpush1.msra.mxu0 %v118
    %144 = vmatprep.subr.mxu0 0.0
    %145 = vmatpush1.msra.mxu0 0.0
    %146 = vmatprep.subr.mxu0 0.0
    %147 = vmatpush1.msra.mxu0 0.0
    %148 = vmatprep.subr.mxu0 0.0
    %149 = vmatpush1.msra.mxu0 0.0
    %150 = vmatprep.subr.mxu0 0.0
    %151 = vmatpush1.msra.mxu0 0.0
    %152 = vmatprep.subr.mxu0 0.0
    %153 = vmatpush1.msra.mxu0 0.0
    %154 = vmatprep.subr.mxu0 0.0
    %155 = vmatpush1.msra.mxu0 0.0
    %156 = vmatprep.subr.mxu0 0.0
    %157 = vmatpush1.msra.mxu0 0.0
    %158 = vmatprep.subr.mxu0 0.0
    %159 = vmatpush1.msra.mxu0 0.0
    %160 = vmatprep.subr.mxu0 0.0
    %161 = vmatpush1.msra.mxu0 0.0
    %162 = vmatprep.subr.mxu0 0.0
    %163 = vmatpush1.msra.mxu0 0.0
    %164 = vmatprep.subr.mxu0 0.0
    %165 = vmatpush1.msra.mxu0 0.0
    %166 = vmatprep.subr.mxu0 0.0
    %167 = vmatpush1.msra.mxu0 0.0
    %168 = vmatprep.subr.mxu0 0.0
    %169 = vmatpush1.msra.mxu0 0.0
    %170 = vmatprep.subr.mxu0 0.0
    %171 = vmatpush1.msra.mxu0 0.0
    %172 = vmatprep.subr.mxu0 0.0
    %173 = vmatpush1.msra.mxu0 0.0
    %174 = vmatprep.subr.mxu0 0.0
    %175 = vmatpush1.msra.mxu0 0.0
    %176 = vmatprep.subr.mxu0 0.0
    %177 = vmatpush1.msra.mxu0 0.0
    %178 = vmatprep.subr.mxu0 0.0
    %179 = vmatpush1.msra.mxu0 0.0
    %180 = vmatprep.subr.mxu0 0.0
    %181 = vmatpush1.msra.mxu0 0.0
    %182 = vmatprep.subr.mxu0 0.0
    %183 = vmatpush1.msra.mxu0 0.0
    %184 = vmatprep.subr.mxu0 0.0
    %185 = vmatpush1.msra.mxu0 0.0
    %186 = vmatprep.subr.mxu0 0.0
    %187 = vmatpush1.msra.mxu0 0.0
    %188 = vmatprep.subr.mxu0 0.0
    %189 = vmatpush1.msra.mxu0 0.0
    %190 = vmatprep.subr.mxu0 0.0
    %191 = vmatpush1.msra.mxu0 0.0
    %192 = vmatprep.subr.mxu0 0.0
    %193 = vmatpush1.msra.mxu0 0.0
    %194 = vmatprep.subr.mxu0 0.0
    %195 = vmatpush1.msra.mxu0 0.0
    %196 = vmatprep.subr.mxu0 0.0
    %197 = vmatpush1.msra.mxu0 0.0
    %198 = vmatprep.subr.mxu0 0.0
    %199 = vmatpush1.msra.mxu0 0.0
    %200 = vmatprep.mubr.f32.mxu0 0.0
    %201 = vmatmul.mubr.f32.gmra.mrb[0].mxu0 %v125
    %v202 = vpop.f32.mrb[0].mxu0
    %v203 = vadd.f32 %v123, %v202
    %v204 = vpop.f32.mrb[0].mxu0
    %205 = vmatprep.mubr.f32.mxu0 0.0
    %206 = vmatmul.mubr.f32.gmra.mrb[0].mxu0 %v128
    %v207 = vpop.f32.mrb[0].mxu0
    %v208 = vadd.f32 %v123, %v207
    %v209 = vpop.f32.mrb[0].mxu0
    %210 = vmatprep.mubr.f32.mxu0 0.0
    %211 = vmatmul.mubr.f32.gmra.mrb[0].mxu0 %v131
    %v212 = vpop.f32.mrb[0].mxu0
    %v213 = vadd.f32 %v123, %v212
    %v214 = vpop.f32.mrb[0].mxu0
    %215 = vmatprep.mubr.f32.mxu0 0.0
    %216 = vmatmul.mubr.f32.gmra.mrb[0].mxu0 %v134
    %v217 = vpop.f32.mrb[0].mxu0
    %v218 = vadd.f32 %v123, %v217
    %v219 = vpop.f32.mrb[0].mxu0
    %220 = vdwg.mxu0
    %v221 = vxor.u32 %v203, 2147483648
    %v222 = vxor.u32 %v208, 2147483648
    %v223 = vxor.u32 %v213, 2147483648
    %v224 = vxor.u32 %v218, 2147483648
    %v225 = vmul.f32 %v221, 1.442695
    %v226 = vpow.pop %v225
    %v227 = vmul.f32 %v222, 1.442695
    %v228 = vpow.pop %v227
    %v229 = vmul.f32 %v223, 1.442695
    %v230 = vpow.pop %v229
    %v231 = vmul.f32 %v224, 1.442695
    %v232 = vpow.pop %v231
    %v233 = vadd.f32 %v226, 1.0
    %v234 = vadd.f32 %v228, 1.0
    %v235 = vadd.f32 %v230, 1.0
    %v236 = vadd.f32 %v232, 1.0
    %v237 = vrcp.pop %v233
    %v238 = vmul.f32 1.0, %v237
    %v239 = vrcp.pop %v234
    %v240 = vmul.f32 1.0, %v239
    %v241 = vrcp.pop %v235
    %v242 = vmul.f32 1.0, %v241
    %v243 = vrcp.pop %v236
    %v244 = vmul.f32 1.0, %v243
    %v245 = vmul.f32 %v203, %v238
    %v246 = vmul.f32 %v208, %v240
    %v247 = vmul.f32 %v213, %v242
    %v248 = vmul.f32 %v218, %v244
    %v249 = vld [vmem:[%s5] sm:$0xff]
    %v250 = vld [vmem:[%s5 + $0x8] sm:$0xff]
    %v251 = vld [vmem:[%s5 + $0x10] sm:$0xff]
    %v252 = vld [vmem:[%s5 + $0x18] sm:$0xff]
    %v253 = vld [vmem:[%s5 + $0x20] sm:$0xff]
    %v254 = vld [vmem:[%s5 + $0x28] sm:$0xff]
    %v255 = vld [vmem:[%s5 + $0x30] sm:$0xff]
    %v256 = vld [vmem:[%s5 + $0x38] sm:$0xff]
    %v257 = vld [vmem:[%s2 + $0x2] sm:$0x1]
    %v258 = vlaneseq
    %v259 = vshrl.u32 %v258, 7
    %v260 = vsub.s32 0, %v259
    %v261 = vrot.slane %v257, %v260
    %vm262 = vcmask 523264
    %v264 = vsel %vm262, %v245, 0
    %v267 = vsel %vm262, %v246, 0
    %v270 = vsel %vm262, %v247, 0
    %v273 = vsel %vm262, %v248, 0
    %275 = vmatprep.subr.mxu0 0.0
    %276 = vmatpush1.msra.mxu0 %v249
    %277 = vmatprep.subr.mxu0 0.0
    %278 = vmatpush1.msra.mxu0 %v250
    %279 = vmatprep.subr.mxu0 0.0
    %280 = vmatpush1.msra.mxu0 %v251
    %281 = vmatprep.subr.mxu0 0.0
    %282 = vmatpush1.msra.mxu0 %v252
    %283 = vmatprep.subr.mxu0 0.0
    %284 = vmatpush1.msra.mxu0 %v253
    %285 = vmatprep.subr.mxu0 0.0
    %286 = vmatpush1.msra.mxu0 %v254
    %287 = vmatprep.subr.mxu0 0.0
    %288 = vmatpush1.msra.mxu0 %v255
    %289 = vmatprep.subr.mxu0 0.0
    %290 = vmatpush1.msra.mxu0 %v256
    %291 = vmatprep.subr.mxu0 0.0
    %292 = vmatpush1.msra.mxu0 0.0
    %293 = vmatprep.subr.mxu0 0.0
    %294 = vmatpush1.msra.mxu0 0.0
    %295 = vmatprep.subr.mxu0 0.0
    %296 = vmatpush1.msra.mxu0 0.0
    %297 = vmatprep.subr.mxu0 0.0
    %298 = vmatpush1.msra.mxu0 0.0
    %299 = vmatprep.subr.mxu0 0.0
    %300 = vmatpush1.msra.mxu0 0.0
    %301 = vmatprep.subr.mxu0 0.0
    %302 = vmatpush1.msra.mxu0 0.0
    %303 = vmatprep.subr.mxu0 0.0
    %304 = vmatpush1.msra.mxu0 0.0
    %305 = vmatprep.subr.mxu0 0.0
    %306 = vmatpush1.msra.mxu0 0.0
    %307 = vmatprep.subr.mxu0 0.0
    %308 = vmatpush1.msra.mxu0 0.0
    %309 = vmatprep.subr.mxu0 0.0
    %310 = vmatpush1.msra.mxu0 0.0
    %311 = vmatprep.subr.mxu0 0.0
    %312 = vmatpush1.msra.mxu0 0.0
    %313 = vmatprep.subr.mxu0 0.0
    %314 = vmatpush1.msra.mxu0 0.0
    %315 = vmatprep.subr.mxu0 0.0
    %316 = vmatpush1.msra.mxu0 0.0
    %317 = vmatprep.subr.mxu0 0.0
    %318 = vmatpush1.msra.mxu0 0.0
    %319 = vmatprep.subr.mxu0 0.0
    %320 = vmatpush1.msra.mxu0 0.0
    %321 = vmatprep.subr.mxu0 0.0
    %322 = vmatpush1.msra.mxu0 0.0
    %323 = vmatprep.subr.mxu0 0.0
    %324 = vmatpush1.msra.mxu0 0.0
    %325 = vmatprep.subr.mxu0 0.0
    %326 = vmatpush1.msra.mxu0 0.0
    %327 = vmatprep.subr.mxu0 0.0
    %328 = vmatpush1.msra.mxu0 0.0
    %329 = vmatprep.subr.mxu0 0.0
    %330 = vmatpush1.msra.mxu0 0.0
    %331 = vmatprep.subr.mxu0 0.0
    %332 = vmatpush1.msra.mxu0 0.0
    %333 = vmatprep.subr.mxu0 0.0
    %334 = vmatpush1.msra.mxu0 0.0
    %335 = vmatprep.subr.mxu0 0.0
    %336 = vmatpush1.msra.mxu0 0.0
    %337 = vmatprep.subr.mxu0 0.0
    %338 = vmatpush1.msra.mxu0 0.0
    %339 = vmatprep.mubr.f32.mxu0 0.0
    %340 = vmatmul.mubr.f32.gmra.mrb[0].mxu0 %v264
    %v341 = vpop.f32.mrb[0].mxu0
    %v342 = vadd.f32 %v261, %v341
    %v343 = vpop.f32.mrb[0].mxu0
    %344 = vmatprep.mubr.f32.mxu0 0.0
    %345 = vmatmul.mubr.f32.gmra.mrb[0].mxu0 %v267
    %v346 = vpop.f32.mrb[0].mxu0
    %v347 = vadd.f32 %v261, %v346
    %v348 = vpop.f32.mrb[0].mxu0
    %349 = vmatprep.mubr.f32.mxu0 0.0
    %350 = vmatmul.mubr.f32.gmra.mrb[0].mxu0 %v270
    %v351 = vpop.f32.mrb[0].mxu0
    %v352 = vadd.f32 %v261, %v351
    %v353 = vpop.f32.mrb[0].mxu0
    %354 = vmatprep.mubr.f32.mxu0 0.0
    %355 = vmatmul.mubr.f32.gmra.mrb[0].mxu0 %v273
    %v356 = vpop.f32.mrb[0].mxu0
    %v357 = vadd.f32 %v261, %v356
    %v358 = vpop.f32.mrb[0].mxu0
    %359 = vdwg.mxu0
    %v360 = vmul.f32 %v342, 0.5
    %v361 = vmul.f32 %v347, 0.5
    %v362 = vmul.f32 %v352, 0.5
    %v363 = vmul.f32 %v357, 0.5
    %v364 = vadd.f32 %v39, %v360
    %v365 = vadd.f32 %v40, %v361
    %v366 = vadd.f32 %v41, %v362
    %v367 = vadd.f32 %v42, %v363
    %v368 = vld [vmem:[%s1] sm:$0xff]
    %v369 = vld [vmem:[%s1 + $0x8] sm:$0xff]
    %v370 = vld [vmem:[%s1 + $0x10] sm:$0xff]
    %v371 = vld [vmem:[%s1 + $0x18] sm:$0xff]
    %s372 = scalar_lea.vmem %s1, 32
    %v373 = vld [vmem:[%s372] sm:$0xff]
    %v374 = vld [vmem:[%s372 + $0x8] sm:$0xff]
    %v375 = vld [vmem:[%s372 + $0x10] sm:$0xff]
    %v376 = vld [vmem:[%s372 + $0x18] sm:$0xff]
    %v377 = vld [vmem:[%s6] sm:$0xff]
    %v378 = vld [vmem:[%s6 + $0x8] sm:$0xff]
    %v379 = vld [vmem:[%s6 + $0x10] sm:$0xff]
    %v380 = vld [vmem:[%s6 + $0x18] sm:$0xff]
    %v381 = vld [vmem:[%s8] sm:$0x1]
    %v382 = vlaneseq
    %v383 = vshrl.u32 %v382, 7
    %v384 = vsub.s32 0, %v383
    %v385 = vrot.slane %v381, %v384
    %v387 = vsel %vm45, %v364, 0
    %v390 = vsel %vm45, %v365, 0
    %v393 = vsel %vm45, %v366, 0
    %v396 = vsel %vm45, %v367, 0
    %398 = vmatprep.subr.mxu0 0.0
    %399 = vmatpush1.msra.mxu0 %v377
    %400 = vmatprep.subr.mxu0 0.0
    %401 = vmatpush1.msra.mxu0 %v378
    %402 = vmatprep.subr.mxu0 0.0
    %403 = vmatpush1.msra.mxu0 %v379
    %404 = vmatprep.subr.mxu0 0.0
    %405 = vmatpush1.msra.mxu0 %v380
    %406 = vmatprep.subr.mxu0 0.0
    %407 = vmatpush1.msra.mxu0 0.0
    %408 = vmatprep.subr.mxu0 0.0
    %409 = vmatpush1.msra.mxu0 0.0
    %410 = vmatprep.subr.mxu0 0.0
    %411 = vmatpush1.msra.mxu0 0.0
    %412 = vmatprep.subr.mxu0 0.0
    %413 = vmatpush1.msra.mxu0 0.0
    %414 = vmatprep.subr.mxu0 0.0
    %415 = vmatpush1.msra.mxu0 0.0
    %416 = vmatprep.subr.mxu0 0.0
    %417 = vmatpush1.msra.mxu0 0.0
    %418 = vmatprep.subr.mxu0 0.0
    %419 = vmatpush1.msra.mxu0 0.0
    %420 = vmatprep.subr.mxu0 0.0
    %421 = vmatpush1.msra.mxu0 0.0
    %422 = vmatprep.subr.mxu0 0.0
    %423 = vmatpush1.msra.mxu0 0.0
    %424 = vmatprep.subr.mxu0 0.0
    %425 = vmatpush1.msra.mxu0 0.0
    %426 = vmatprep.subr.mxu0 0.0
    %427 = vmatpush1.msra.mxu0 0.0
    %428 = vmatprep.subr.mxu0 0.0
    %429 = vmatpush1.msra.mxu0 0.0
    %430 = vmatprep.subr.mxu0 0.0
    %431 = vmatpush1.msra.mxu0 0.0
    %432 = vmatprep.subr.mxu0 0.0
    %433 = vmatpush1.msra.mxu0 0.0
    %434 = vmatprep.subr.mxu0 0.0
    %435 = vmatpush1.msra.mxu0 0.0
    %436 = vmatprep.subr.mxu0 0.0
    %437 = vmatpush1.msra.mxu0 0.0
    %438 = vmatprep.subr.mxu0 0.0
    %439 = vmatpush1.msra.mxu0 0.0
    %440 = vmatprep.subr.mxu0 0.0
    %441 = vmatpush1.msra.mxu0 0.0
    %442 = vmatprep.subr.mxu0 0.0
    %443 = vmatpush1.msra.mxu0 0.0
    %444 = vmatprep.subr.mxu0 0.0
    %445 = vmatpush1.msra.mxu0 0.0
    %446 = vmatprep.subr.mxu0 0.0
    %447 = vmatpush1.msra.mxu0 0.0
    %448 = vmatprep.subr.mxu0 0.0
    %449 = vmatpush1.msra.mxu0 0.0
    %450 = vmatprep.subr.mxu0 0.0
    %451 = vmatpush1.msra.mxu0 0.0
    %452 = vmatprep.subr.mxu0 0.0
    %453 = vmatpush1.msra.mxu0 0.0
    %454 = vmatprep.subr.mxu0 0.0
    %455 = vmatpush1.msra.mxu0 0.0
    %456 = vmatprep.subr.mxu0 0.0
    %457 = vmatpush1.msra.mxu0 0.0
    %458 = vmatprep.subr.mxu0 0.0
    %459 = vmatpush1.msra.mxu0 0.0
    %460 = vmatprep.subr.mxu0 0.0
    %461 = vmatpush1.msra.mxu0 0.0
    %462 = vmatprep.mubr.f32.mxu0 0.0
    %463 = vmatmul.mubr.f32.gmra.mrb[0].mxu0 %v387
    %v464 = vpop.f32.mrb[0].mxu0
    %v465 = vadd.f32 %v385, %v464
    %v466 = vpop.f32.mrb[0].mxu0
    %467 = vmatprep.mubr.f32.mxu0 0.0
    %468 = vmatmul.mubr.f32.gmra.mrb[0].mxu0 %v390
    %v469 = vpop.f32.mrb[0].mxu0
    %v470 = vadd.f32 %v385, %v469
    %v471 = vpop.f32.mrb[0].mxu0
    %472 = vmatprep.mubr.f32.mxu0 0.0
    %473 = vmatmul.mubr.f32.gmra.mrb[0].mxu0 %v393
    %v474 = vpop.f32.mrb[0].mxu0
    %v475 = vadd.f32 %v385, %v474
    %v476 = vpop.f32.mrb[0].mxu0
    %477 = vmatprep.mubr.f32.mxu0 0.0
    %478 = vmatmul.mubr.f32.gmra.mrb[0].mxu0 %v396
    %v479 = vpop.f32.mrb[0].mxu0
    %v480 = vadd.f32 %v385, %v479
    %v481 = vpop.f32.mrb[0].mxu0
    %482 = vdwg.mxu0
    %v483 = vmul.f32 %v465, %v368
    %v484 = vmul.f32 %v470, %v369
    %v485 = vmul.f32 %v475, %v370
    %v486 = vmul.f32 %v480, %v371
    %s487 = scalar_lea.vmem %s6, 128
    %v488 = vld [vmem:[%s487] sm:$0xff]
    %v489 = vld [vmem:[%s487 + $0x8] sm:$0xff]
    %v490 = vld [vmem:[%s487 + $0x10] sm:$0xff]
    %v491 = vld [vmem:[%s487 + $0x18] sm:$0xff]
    %v492 = vld [vmem:[%s8 + $0x4] sm:$0x1]
    %v493 = vlaneseq
    %v494 = vshrl.u32 %v493, 7
    %v495 = vsub.s32 0, %v494
    %v496 = vrot.slane %v492, %v495
    %497 = vmatprep.subr.mxu0 0.0
    %498 = vmatpush1.msra.mxu0 %v488
    %499 = vmatprep.subr.mxu0 0.0
    %500 = vmatpush1.msra.mxu0 %v489
    %501 = vmatprep.subr.mxu0 0.0
    %502 = vmatpush1.msra.mxu0 %v490
    %503 = vmatprep.subr.mxu0 0.0
    %504 = vmatpush1.msra.mxu0 %v491
    %505 = vmatprep.subr.mxu0 0.0
    %506 = vmatpush1.msra.mxu0 0.0
    %507 = vmatprep.subr.mxu0 0.0
    %508 = vmatpush1.msra.mxu0 0.0
    %509 = vmatprep.subr.mxu0 0.0
    %510 = vmatpush1.msra.mxu0 0.0
    %511 = vmatprep.subr.mxu0 0.0
    %512 = vmatpush1.msra.mxu0 0.0
    %513 = vmatprep.subr.mxu0 0.0
    %514 = vmatpush1.msra.mxu0 0.0
    %515 = vmatprep.subr.mxu0 0.0
    %516 = vmatpush1.msra.mxu0 0.0
    %517 = vmatprep.subr.mxu0 0.0
    %518 = vmatpush1.msra.mxu0 0.0
    %519 = vmatprep.subr.mxu0 0.0
    %520 = vmatpush1.msra.mxu0 0.0
    %521 = vmatprep.subr.mxu0 0.0
    %522 = vmatpush1.msra.mxu0 0.0
    %523 = vmatprep.subr.mxu0 0.0
    %524 = vmatpush1.msra.mxu0 0.0
    %525 = vmatprep.subr.mxu0 0.0
    %526 = vmatpush1.msra.mxu0 0.0
    %527 = vmatprep.subr.mxu0 0.0
    %528 = vmatpush1.msra.mxu0 0.0
    %529 = vmatprep.subr.mxu0 0.0
    %530 = vmatpush1.msra.mxu0 0.0
    %531 = vmatprep.subr.mxu0 0.0
    %532 = vmatpush1.msra.mxu0 0.0
    %533 = vmatprep.subr.mxu0 0.0
    %534 = vmatpush1.msra.mxu0 0.0
    %535 = vmatprep.subr.mxu0 0.0
    %536 = vmatpush1.msra.mxu0 0.0
    %537 = vmatprep.subr.mxu0 0.0
    %538 = vmatpush1.msra.mxu0 0.0
    %539 = vmatprep.subr.mxu0 0.0
    %540 = vmatpush1.msra.mxu0 0.0
    %541 = vmatprep.subr.mxu0 0.0
    %542 = vmatpush1.msra.mxu0 0.0
    %543 = vmatprep.subr.mxu0 0.0
    %544 = vmatpush1.msra.mxu0 0.0
    %545 = vmatprep.subr.mxu0 0.0
    %546 = vmatpush1.msra.mxu0 0.0
    %547 = vmatprep.subr.mxu0 0.0
    %548 = vmatpush1.msra.mxu0 0.0
    %549 = vmatprep.subr.mxu0 0.0
    %550 = vmatpush1.msra.mxu0 0.0
    %551 = vmatprep.subr.mxu0 0.0
    %552 = vmatpush1.msra.mxu0 0.0
    %553 = vmatprep.subr.mxu0 0.0
    %554 = vmatpush1.msra.mxu0 0.0
    %555 = vmatprep.subr.mxu0 0.0
    %556 = vmatpush1.msra.mxu0 0.0
    %557 = vmatprep.subr.mxu0 0.0
    %558 = vmatpush1.msra.mxu0 0.0
    %559 = vmatprep.subr.mxu0 0.0
    %560 = vmatpush1.msra.mxu0 0.0
    %561 = vmatprep.mubr.f32.mxu0 0.0
    %562 = vmatmul.mubr.f32.gmra.mrb[0].mxu0 %v387
    %v563 = vpop.f32.mrb[0].mxu0
    %v564 = vadd.f32 %v496, %v563
    %v565 = vpop.f32.mrb[0].mxu0
    %566 = vmatprep.mubr.f32.mxu0 0.0
    %567 = vmatmul.mubr.f32.gmra.mrb[0].mxu0 %v390
    %v568 = vpop.f32.mrb[0].mxu0
    %v569 = vadd.f32 %v496, %v568
    %v570 = vpop.f32.mrb[0].mxu0
    %571 = vmatprep.mubr.f32.mxu0 0.0
    %572 = vmatmul.mubr.f32.gmra.mrb[0].mxu0 %v393
    %v573 = vpop.f32.mrb[0].mxu0
    %v574 = vadd.f32 %v496, %v573
    %v575 = vpop.f32.mrb[0].mxu0
    %576 = vmatprep.mubr.f32.mxu0 0.0
    %577 = vmatmul.mubr.f32.gmra.mrb[0].mxu0 %v396
    %v578 = vpop.f32.mrb[0].mxu0
    %v579 = vadd.f32 %v496, %v578
    %v580 = vpop.f32.mrb[0].mxu0
    %581 = vdwg.mxu0
    %v582 = vmul.f32 %v564, %v373
    %v583 = vmul.f32 %v569, %v374
    %v584 = vmul.f32 %v574, %v375
    %v585 = vmul.f32 %v579, %v376
    %v586 = vadd.f32 %v483, %v582
    %v587 = vadd.f32 %v484, %v583
    %v588 = vadd.f32 %v485, %v584
    %v589 = vadd.f32 %v486, %v585
    %s590 = scalar_lea.vmem %s6, 256
    %v591 = vld [vmem:[%s590] sm:$0xff]
    %v592 = vld [vmem:[%s590 + $0x8] sm:$0xff]
    %v593 = vld [vmem:[%s590 + $0x10] sm:$0xff]
    %v594 = vld [vmem:[%s590 + $0x18] sm:$0xff]
    %v595 = vld [vmem:[%s8 + $0x8] sm:$0x1]
    %v596 = vlaneseq
    %v597 = vshrl.u32 %v596, 7
    %v598 = vsub.s32 0, %v597
    %v599 = vrot.slane %v595, %v598
    %600 = vmatprep.subr.mxu0 0.0
    %601 = vmatpush1.msra.mxu0 %v591
    %602 = vmatprep.subr.mxu0 0.0
    %603 = vmatpush1.msra.mxu0 %v592
    %604 = vmatprep.subr.mxu0 0.0
    %605 = vmatpush1.msra.mxu0 %v593
    %606 = vmatprep.subr.mxu0 0.0
    %607 = vmatpush1.msra.mxu0 %v594
    %608 = vmatprep.subr.mxu0 0.0
    %609 = vmatpush1.msra.mxu0 0.0
    %610 = vmatprep.subr.mxu0 0.0
    %611 = vmatpush1.msra.mxu0 0.0
    %612 = vmatprep.subr.mxu0 0.0
    %613 = vmatpush1.msra.mxu0 0.0
    %614 = vmatprep.subr.mxu0 0.0
    %615 = vmatpush1.msra.mxu0 0.0
    %616 = vmatprep.subr.mxu0 0.0
    %617 = vmatpush1.msra.mxu0 0.0
    %618 = vmatprep.subr.mxu0 0.0
    %619 = vmatpush1.msra.mxu0 0.0
    %620 = vmatprep.subr.mxu0 0.0
    %621 = vmatpush1.msra.mxu0 0.0
    %622 = vmatprep.subr.mxu0 0.0
    %623 = vmatpush1.msra.mxu0 0.0
    %624 = vmatprep.subr.mxu0 0.0
    %625 = vmatpush1.msra.mxu0 0.0
    %626 = vmatprep.subr.mxu0 0.0
    %627 = vmatpush1.msra.mxu0 0.0
    %628 = vmatprep.subr.mxu0 0.0
    %629 = vmatpush1.msra.mxu0 0.0
    %630 = vmatprep.subr.mxu0 0.0
    %631 = vmatpush1.msra.mxu0 0.0
    %632 = vmatprep.subr.mxu0 0.0
    %633 = vmatpush1.msra.mxu0 0.0
    %634 = vmatprep.subr.mxu0 0.0
    %635 = vmatpush1.msra.mxu0 0.0
    %636 = vmatprep.subr.mxu0 0.0
    %637 = vmatpush1.msra.mxu0 0.0
    %638 = vmatprep.subr.mxu0 0.0
    %639 = vmatpush1.msra.mxu0 0.0
    %640 = vmatprep.subr.mxu0 0.0
    %641 = vmatpush1.msra.mxu0 0.0
    %642 = vmatprep.subr.mxu0 0.0
    %643 = vmatpush1.msra.mxu0 0.0
    %644 = vmatprep.subr.mxu0 0.0
    %645 = vmatpush1.msra.mxu0 0.0
    %646 = vmatprep.subr.mxu0 0.0
    %647 = vmatpush1.msra.mxu0 0.0
    %648 = vmatprep.subr.mxu0 0.0
    %649 = vmatpush1.msra.mxu0 0.0
    %650 = vmatprep.subr.mxu0 0.0
    %651 = vmatpush1.msra.mxu0 0.0
    %652 = vmatprep.subr.mxu0 0.0
    %653 = vmatpush1.msra.mxu0 0.0
    %654 = vmatprep.subr.mxu0 0.0
    %655 = vmatpush1.msra.mxu0 0.0
    %656 = vmatprep.subr.mxu0 0.0
    %657 = vmatpush1.msra.mxu0 0.0
    %658 = vmatprep.subr.mxu0 0.0
    %659 = vmatpush1.msra.mxu0 0.0
    %660 = vmatprep.subr.mxu0 0.0
    %661 = vmatpush1.msra.mxu0 0.0
    %662 = vmatprep.subr.mxu0 0.0
    %663 = vmatpush1.msra.mxu0 0.0
    %664 = vmatprep.mubr.f32.mxu0 0.0
    %665 = vmatmul.mubr.f32.gmra.mrb[0].mxu0 %v387
    %v666 = vpop.f32.mrb[0].mxu0
    %v667 = vadd.f32 %v599, %v666
    %v668 = vpop.f32.mrb[0].mxu0
    %669 = vmatprep.mubr.f32.mxu0 0.0
    %670 = vmatmul.mubr.f32.gmra.mrb[0].mxu0 %v390
    %v671 = vpop.f32.mrb[0].mxu0
    %v672 = vadd.f32 %v599, %v671
    %v673 = vpop.f32.mrb[0].mxu0
    %674 = vmatprep.mubr.f32.mxu0 0.0
    %675 = vmatmul.mubr.f32.gmra.mrb[0].mxu0 %v393
    %v676 = vpop.f32.mrb[0].mxu0
    %v677 = vadd.f32 %v599, %v676
    %v678 = vpop.f32.mrb[0].mxu0
    %679 = vmatprep.mubr.f32.mxu0 0.0
    %680 = vmatmul.mubr.f32.gmra.mrb[0].mxu0 %v396
    %v681 = vpop.f32.mrb[0].mxu0
    %v682 = vadd.f32 %v599, %v681
    %v683 = vpop.f32.mrb[0].mxu0
    %684 = vdwg.mxu0
    %v685 = vmul.f32 %v667, %v368
    %v686 = vmul.f32 %v672, %v369
    %v687 = vmul.f32 %v677, %v370
    %v688 = vmul.f32 %v682, %v371
    %s689 = scalar_lea.vmem %s6, 384
    %v690 = vld [vmem:[%s689] sm:$0xff]
    %v691 = vld [vmem:[%s689 + $0x8] sm:$0xff]
    %v692 = vld [vmem:[%s689 + $0x10] sm:$0xff]
    %v693 = vld [vmem:[%s689 + $0x18] sm:$0xff]
    %v694 = vld [vmem:[%s8 + $0xc] sm:$0x1]
    %v695 = vlaneseq
    %v696 = vshrl.u32 %v695, 7
    %v697 = vsub.s32 0, %v696
    %v698 = vrot.slane %v694, %v697
    %699 = vmatprep.subr.mxu0 0.0
    %700 = vmatpush1.msra.mxu0 %v690
    %701 = vmatprep.subr.mxu0 0.0
    %702 = vmatpush1.msra.mxu0 %v691
    %703 = vmatprep.subr.mxu0 0.0
    %704 = vmatpush1.msra.mxu0 %v692
    %705 = vmatprep.subr.mxu0 0.0
    %706 = vmatpush1.msra.mxu0 %v693
    %707 = vmatprep.subr.mxu0 0.0
    %708 = vmatpush1.msra.mxu0 0.0
    %709 = vmatprep.subr.mxu0 0.0
    %710 = vmatpush1.msra.mxu0 0.0
    %711 = vmatprep.subr.mxu0 0.0
    %712 = vmatpush1.msra.mxu0 0.0
    %713 = vmatprep.subr.mxu0 0.0
    %714 = vmatpush1.msra.mxu0 0.0
    %715 = vmatprep.subr.mxu0 0.0
    %716 = vmatpush1.msra.mxu0 0.0
    %717 = vmatprep.subr.mxu0 0.0
    %718 = vmatpush1.msra.mxu0 0.0
    %719 = vmatprep.subr.mxu0 0.0
    %720 = vmatpush1.msra.mxu0 0.0
    %721 = vmatprep.subr.mxu0 0.0
    %722 = vmatpush1.msra.mxu0 0.0
    %723 = vmatprep.subr.mxu0 0.0
    %724 = vmatpush1.msra.mxu0 0.0
    %725 = vmatprep.subr.mxu0 0.0
    %726 = vmatpush1.msra.mxu0 0.0
    %727 = vmatprep.subr.mxu0 0.0
    %728 = vmatpush1.msra.mxu0 0.0
    %729 = vmatprep.subr.mxu0 0.0
    %730 = vmatpush1.msra.mxu0 0.0
    %731 = vmatprep.subr.mxu0 0.0
    %732 = vmatpush1.msra.mxu0 0.0
    %733 = vmatprep.subr.mxu0 0.0
    %734 = vmatpush1.msra.mxu0 0.0
    %735 = vmatprep.subr.mxu0 0.0
    %736 = vmatpush1.msra.mxu0 0.0
    %737 = vmatprep.subr.mxu0 0.0
    %738 = vmatpush1.msra.mxu0 0.0
    %739 = vmatprep.subr.mxu0 0.0
    %740 = vmatpush1.msra.mxu0 0.0
    %741 = vmatprep.subr.mxu0 0.0
    %742 = vmatpush1.msra.mxu0 0.0
    %743 = vmatprep.subr.mxu0 0.0
    %744 = vmatpush1.msra.mxu0 0.0
    %745 = vmatprep.subr.mxu0 0.0
    %746 = vmatpush1.msra.mxu0 0.0
    %747 = vmatprep.subr.mxu0 0.0
    %748 = vmatpush1.msra.mxu0 0.0
    %749 = vmatprep.subr.mxu0 0.0
    %750 = vmatpush1.msra.mxu0 0.0
    %751 = vmatprep.subr.mxu0 0.0
    %752 = vmatpush1.msra.mxu0 0.0
    %753 = vmatprep.subr.mxu0 0.0
    %754 = vmatpush1.msra.mxu0 0.0
    %755 = vmatprep.subr.mxu0 0.0
    %756 = vmatpush1.msra.mxu0 0.0
    %757 = vmatprep.subr.mxu0 0.0
    %758 = vmatpush1.msra.mxu0 0.0
    %759 = vmatprep.subr.mxu0 0.0
    %760 = vmatpush1.msra.mxu0 0.0
    %761 = vmatprep.subr.mxu0 0.0
    %762 = vmatpush1.msra.mxu0 0.0
    %763 = vmatprep.mubr.f32.mxu0 0.0
    %764 = vmatmul.mubr.f32.gmra.mrb[0].mxu0 %v387
    %v765 = vpop.f32.mrb[0].mxu0
    %v766 = vadd.f32 %v698, %v765
    %v767 = vpop.f32.mrb[0].mxu0
    %768 = vmatprep.mubr.f32.mxu0 0.0
    %769 = vmatmul.mubr.f32.gmra.mrb[0].mxu0 %v390
    %v770 = vpop.f32.mrb[0].mxu0
    %v771 = vadd.f32 %v698, %v770
    %v772 = vpop.f32.mrb[0].mxu0
    %773 = vmatprep.mubr.f32.mxu0 0.0
    %774 = vmatmul.mubr.f32.gmra.mrb[0].mxu0 %v393
    %v775 = vpop.f32.mrb[0].mxu0
    %v776 = vadd.f32 %v698, %v775
    %v777 = vpop.f32.mrb[0].mxu0
    %778 = vmatprep.mubr.f32.mxu0 0.0
    %779 = vmatmul.mubr.f32.gmra.mrb[0].mxu0 %v396
    %v780 = vpop.f32.mrb[0].mxu0
    %v781 = vadd.f32 %v698, %v780
    %v782 = vpop.f32.mrb[0].mxu0
    %783 = vdwg.mxu0
    %v784 = vmul.f32 %v766, %v373
    %v785 = vmul.f32 %v771, %v374
    %v786 = vmul.f32 %v776, %v375
    %v787 = vmul.f32 %v781, %v376
    %v788 = vadd.f32 %v685, %v784
    %v789 = vadd.f32 %v686, %v785
    %v790 = vadd.f32 %v687, %v786
    %v791 = vadd.f32 %v688, %v787
    %s792 = scalar_lea.vmem %s6, 512
    %v793 = vld [vmem:[%s792] sm:$0xff]
    %v794 = vld [vmem:[%s792 + $0x8] sm:$0xff]
    %v795 = vld [vmem:[%s792 + $0x10] sm:$0xff]
    %v796 = vld [vmem:[%s792 + $0x18] sm:$0xff]
    %v797 = vld [vmem:[%s8 + $0x10] sm:$0x1]
    %v798 = vlaneseq
    %v799 = vshrl.u32 %v798, 7
    %v800 = vsub.s32 0, %v799
    %v801 = vrot.slane %v797, %v800
    %802 = vmatprep.subr.mxu0 0.0
    %803 = vmatpush1.msra.mxu0 %v793
    %804 = vmatprep.subr.mxu0 0.0
    %805 = vmatpush1.msra.mxu0 %v794
    %806 = vmatprep.subr.mxu0 0.0
    %807 = vmatpush1.msra.mxu0 %v795
    %808 = vmatprep.subr.mxu0 0.0
    %809 = vmatpush1.msra.mxu0 %v796
    %810 = vmatprep.subr.mxu0 0.0
    %811 = vmatpush1.msra.mxu0 0.0
    %812 = vmatprep.subr.mxu0 0.0
    %813 = vmatpush1.msra.mxu0 0.0
    %814 = vmatprep.subr.mxu0 0.0
    %815 = vmatpush1.msra.mxu0 0.0
    %816 = vmatprep.subr.mxu0 0.0
    %817 = vmatpush1.msra.mxu0 0.0
    %818 = vmatprep.subr.mxu0 0.0
    %819 = vmatpush1.msra.mxu0 0.0
    %820 = vmatprep.subr.mxu0 0.0
    %821 = vmatpush1.msra.mxu0 0.0
    %822 = vmatprep.subr.mxu0 0.0
    %823 = vmatpush1.msra.mxu0 0.0
    %824 = vmatprep.subr.mxu0 0.0
    %825 = vmatpush1.msra.mxu0 0.0
    %826 = vmatprep.subr.mxu0 0.0
    %827 = vmatpush1.msra.mxu0 0.0
    %828 = vmatprep.subr.mxu0 0.0
    %829 = vmatpush1.msra.mxu0 0.0
    %830 = vmatprep.subr.mxu0 0.0
    %831 = vmatpush1.msra.mxu0 0.0
    %832 = vmatprep.subr.mxu0 0.0
    %833 = vmatpush1.msra.mxu0 0.0
    %834 = vmatprep.subr.mxu0 0.0
    %835 = vmatpush1.msra.mxu0 0.0
    %836 = vmatprep.subr.mxu0 0.0
    %837 = vmatpush1.msra.mxu0 0.0
    %838 = vmatprep.subr.mxu0 0.0
    %839 = vmatpush1.msra.mxu0 0.0
    %840 = vmatprep.subr.mxu0 0.0
    %841 = vmatpush1.msra.mxu0 0.0
    %842 = vmatprep.subr.mxu0 0.0
    %843 = vmatpush1.msra.mxu0 0.0
    %844 = vmatprep.subr.mxu0 0.0
    %845 = vmatpush1.msra.mxu0 0.0
    %846 = vmatprep.subr.mxu0 0.0
    %847 = vmatpush1.msra.mxu0 0.0
    %848 = vmatprep.subr.mxu0 0.0
    %849 = vmatpush1.msra.mxu0 0.0
    %850 = vmatprep.subr.mxu0 0.0
    %851 = vmatpush1.msra.mxu0 0.0
    %852 = vmatprep.subr.mxu0 0.0
    %853 = vmatpush1.msra.mxu0 0.0
    %854 = vmatprep.subr.mxu0 0.0
    %855 = vmatpush1.msra.mxu0 0.0
    %856 = vmatprep.subr.mxu0 0.0
    %857 = vmatpush1.msra.mxu0 0.0
    %858 = vmatprep.subr.mxu0 0.0
    %859 = vmatpush1.msra.mxu0 0.0
    %860 = vmatprep.subr.mxu0 0.0
    %861 = vmatpush1.msra.mxu0 0.0
    %862 = vmatprep.subr.mxu0 0.0
    %863 = vmatpush1.msra.mxu0 0.0
    %864 = vmatprep.subr.mxu0 0.0
    %865 = vmatpush1.msra.mxu0 0.0
    %866 = vmatprep.mubr.f32.mxu0 0.0
    %867 = vmatmul.mubr.f32.gmra.mrb[0].mxu0 %v387
    %v868 = vpop.f32.mrb[0].mxu0
    %v869 = vadd.f32 %v801, %v868
    %v870 = vpop.f32.mrb[0].mxu0
    %871 = vmatprep.mubr.f32.mxu0 0.0
    %872 = vmatmul.mubr.f32.gmra.mrb[0].mxu0 %v390
    %v873 = vpop.f32.mrb[0].mxu0
    %v874 = vadd.f32 %v801, %v873
    %v875 = vpop.f32.mrb[0].mxu0
    %876 = vmatprep.mubr.f32.mxu0 0.0
    %877 = vmatmul.mubr.f32.gmra.mrb[0].mxu0 %v393
    %v878 = vpop.f32.mrb[0].mxu0
    %v879 = vadd.f32 %v801, %v878
    %v880 = vpop.f32.mrb[0].mxu0
    %881 = vmatprep.mubr.f32.mxu0 0.0
    %882 = vmatmul.mubr.f32.gmra.mrb[0].mxu0 %v396
    %v883 = vpop.f32.mrb[0].mxu0
    %v884 = vadd.f32 %v801, %v883
    %v885 = vpop.f32.mrb[0].mxu0
    %886 = vdwg.mxu0
    %vm887 = vcmask 64512
    %v889 = vsel %vm887, %v586, 0
    %v892 = vsel %vm887, %v587, 0
    %v895 = vsel %vm887, %v788, 0
    %v898 = vsel %vm887, %v789, 0
    %900 = vmatprep.subr.mxu0 0.0
    %901 = vmatpush1.xpose.msra.mxu0 %v895
    %902 = vmatprep.subr.mxu0 0.0
    %903 = vmatpush1.xpose.msra.mxu0 %v898
    %904 = vmatprep.subr.mxu0 0.0
    %905 = vmatpush1.xpose.msra.mxu0 0.0
    %906 = vmatprep.subr.mxu0 0.0
    %907 = vmatpush1.xpose.msra.mxu0 0.0
    %908 = vmatprep.subr.mxu0 0.0
    %909 = vmatpush1.xpose.msra.mxu0 0.0
    %910 = vmatprep.subr.mxu0 0.0
    %911 = vmatpush1.xpose.msra.mxu0 0.0
    %912 = vmatprep.subr.mxu0 0.0
    %913 = vmatpush1.xpose.msra.mxu0 0.0
    %914 = vmatprep.subr.mxu0 0.0
    %915 = vmatpush1.xpose.msra.mxu0 0.0
    %916 = vmatprep.subr.mxu0 0.0
    %917 = vmatpush1.xpose.msra.mxu0 0.0
    %918 = vmatprep.subr.mxu0 0.0
    %919 = vmatpush1.xpose.msra.mxu0 0.0
    %920 = vmatprep.subr.mxu0 0.0
    %921 = vmatpush1.xpose.msra.mxu0 0.0
    %922 = vmatprep.subr.mxu0 0.0
    %923 = vmatpush1.xpose.msra.mxu0 0.0
    %924 = vmatprep.subr.mxu0 0.0
    %925 = vmatpush1.xpose.msra.mxu0 0.0
    %926 = vmatprep.subr.mxu0 0.0
    %927 = vmatpush1.xpose.msra.mxu0 0.0
    %928 = vmatprep.subr.mxu0 0.0
    %929 = vmatpush1.xpose.msra.mxu0 0.0
    %930 = vmatprep.subr.mxu0 0.0
    %931 = vmatpush1.xpose.msra.mxu0 0.0
    %932 = vmatprep.subr.mxu0 0.0
    %933 = vmatpush1.xpose.msra.mxu0 0.0
    %934 = vmatprep.subr.mxu0 0.0
    %935 = vmatpush1.xpose.msra.mxu0 0.0
    %936 = vmatprep.subr.mxu0 0.0
    %937 = vmatpush1.xpose.msra.mxu0 0.0
    %938 = vmatprep.subr.mxu0 0.0
    %939 = vmatpush1.xpose.msra.mxu0 0.0
    %940 = vmatprep.subr.mxu0 0.0
    %941 = vmatpush1.xpose.msra.mxu0 0.0
    %942 = vmatprep.subr.mxu0 0.0
    %943 = vmatpush1.xpose.msra.mxu0 0.0
    %944 = vmatprep.subr.mxu0 0.0
    %945 = vmatpush1.xpose.msra.mxu0 0.0
    %946 = vmatprep.subr.mxu0 0.0
    %947 = vmatpush1.xpose.msra.mxu0 0.0
    %948 = vmatprep.subr.mxu0 0.0
    %949 = vmatpush1.xpose.msra.mxu0 0.0
    %950 = vmatprep.subr.mxu0 0.0
    %951 = vmatpush1.xpose.msra.mxu0 0.0
    %952 = vmatprep.subr.mxu0 0.0
    %953 = vmatpush1.xpose.msra.mxu0 0.0
    %954 = vmatprep.subr.mxu0 0.0
    %955 = vmatpush1.xpose.msra.mxu0 0.0
    %956 = vmatprep.subr.mxu0 0.0
    %957 = vmatpush1.xpose.msra.mxu0 0.0
    %958 = vmatprep.subr.mxu0 0.0
    %959 = vmatpush1.xpose.msra.mxu0 0.0
    %960 = vmatprep.subr.mxu0 0.0
    %961 = vmatpush1.xpose.msra.mxu0 0.0
    %962 = vmatprep.subr.mxu0 0.0
    %963 = vmatpush1.xpose.msra.mxu0 0.0
    %964 = vmatprep.mubr.f32.mxu0 0.0
    %965 = vmatmul.mubr.f32.gmra.mrb[0].mxu0 %v889
    %v966 = vpop.f32.mrb[0].mxu0
    %v967 = vadd.f32 0.0, %v966
    %v968 = vpop.f32.mrb[0].mxu0
    %969 = vmatprep.mubr.f32.mxu0 0.0
    %970 = vmatmul.mubr.f32.gmra.mrb[0].mxu0 %v892
    %v971 = vpop.f32.mrb[0].mxu0
    %v972 = vadd.f32 0.0, %v971
    %v973 = vpop.f32.mrb[0].mxu0
    %974 = vdwg.mxu0
    %v976 = vsel %vm887, %v588, 0
    %v979 = vsel %vm887, %v589, 0
    %v982 = vsel %vm887, %v790, 0
    %v985 = vsel %vm887, %v791, 0
    %987 = vmatprep.subr.mxu0 0.0
    %988 = vmatpush1.xpose.msra.mxu0 %v982
    %989 = vmatprep.subr.mxu0 0.0
    %990 = vmatpush1.xpose.msra.mxu0 %v985
    %991 = vmatprep.subr.mxu0 0.0
    %992 = vmatpush1.xpose.msra.mxu0 0.0
    %993 = vmatprep.subr.mxu0 0.0
    %994 = vmatpush1.xpose.msra.mxu0 0.0
    %995 = vmatprep.subr.mxu0 0.0
    %996 = vmatpush1.xpose.msra.mxu0 0.0
    %997 = vmatprep.subr.mxu0 0.0
    %998 = vmatpush1.xpose.msra.mxu0 0.0
    %999 = vmatprep.subr.mxu0 0.0
    %1000 = vmatpush1.xpose.msra.mxu0 0.0
    %1001 = vmatprep.subr.mxu0 0.0
    %1002 = vmatpush1.xpose.msra.mxu0 0.0
    %1003 = vmatprep.subr.mxu0 0.0
    %1004 = vmatpush1.xpose.msra.mxu0 0.0
    %1005 = vmatprep.subr.mxu0 0.0
    %1006 = vmatpush1.xpose.msra.mxu0 0.0
    %1007 = vmatprep.subr.mxu0 0.0
    %1008 = vmatpush1.xpose.msra.mxu0 0.0
    %1009 = vmatprep.subr.mxu0 0.0
    %1010 = vmatpush1.xpose.msra.mxu0 0.0
    %1011 = vmatprep.subr.mxu0 0.0
    %1012 = vmatpush1.xpose.msra.mxu0 0.0
    %1013 = vmatprep.subr.mxu0 0.0
    %1014 = vmatpush1.xpose.msra.mxu0 0.0
    %1015 = vmatprep.subr.mxu0 0.0
    %1016 = vmatpush1.xpose.msra.mxu0 0.0
    %1017 = vmatprep.subr.mxu0 0.0
    %1018 = vmatpush1.xpose.msra.mxu0 0.0
    %1019 = vmatprep.subr.mxu0 0.0
    %1020 = vmatpush1.xpose.msra.mxu0 0.0
    %1021 = vmatprep.subr.mxu0 0.0
    %1022 = vmatpush1.xpose.msra.mxu0 0.0
    %1023 = vmatprep.subr.mxu0 0.0
    %1024 = vmatpush1.xpose.msra.mxu0 0.0
    %1025 = vmatprep.subr.mxu0 0.0
    %1026 = vmatpush1.xpose.msra.mxu0 0.0
    %1027 = vmatprep.subr.mxu0 0.0
    %1028 = vmatpush1.xpose.msra.mxu0 0.0
    %1029 = vmatprep.subr.mxu0 0.0
    %1030 = vmatpush1.xpose.msra.mxu0 0.0
    %1031 = vmatprep.subr.mxu0 0.0
    %1032 = vmatpush1.xpose.msra.mxu0 0.0
    %1033 = vmatprep.subr.mxu0 0.0
    %1034 = vmatpush1.xpose.msra.mxu0 0.0
    %1035 = vmatprep.subr.mxu0 0.0
    %1036 = vmatpush1.xpose.msra.mxu0 0.0
    %1037 = vmatprep.subr.mxu0 0.0
    %1038 = vmatpush1.xpose.msra.mxu0 0.0
    %1039 = vmatprep.subr.mxu0 0.0
    %1040 = vmatpush1.xpose.msra.mxu0 0.0
    %1041 = vmatprep.subr.mxu0 0.0
    %1042 = vmatpush1.xpose.msra.mxu0 0.0
    %1043 = vmatprep.subr.mxu0 0.0
    %1044 = vmatpush1.xpose.msra.mxu0 0.0
    %1045 = vmatprep.subr.mxu0 0.0
    %1046 = vmatpush1.xpose.msra.mxu0 0.0
    %1047 = vmatprep.subr.mxu0 0.0
    %1048 = vmatpush1.xpose.msra.mxu0 0.0
    %1049 = vmatprep.subr.mxu0 0.0
    %1050 = vmatpush1.xpose.msra.mxu0 0.0
    %1051 = vmatprep.mubr.f32.mxu0 0.0
    %1052 = vmatmul.mubr.f32.gmra.mrb[0].mxu0 %v976
    %v1053 = vpop.f32.mrb[0].mxu0
    %v1054 = vadd.f32 0.0, %v1053
    %v1055 = vpop.f32.mrb[0].mxu0
    %1056 = vmatprep.mubr.f32.mxu0 0.0
    %1057 = vmatmul.mubr.f32.gmra.mrb[0].mxu0 %v979
    %v1058 = vpop.f32.mrb[0].mxu0
    %v1059 = vadd.f32 0.0, %v1058
    %v1060 = vpop.f32.mrb[0].mxu0
    %1061 = vdwg.mxu0
    %v1062 = vmul.f32 %v967, 0.35355338
    %v1063 = vmul.f32 %v972, 0.35355338
    %v1064 = vmul.f32 %v1054, 0.35355338
    %v1065 = vmul.f32 %v1059, 0.35355338
    %vm1066 = vcmask 130048
    %v1067 = vsel %vm1066, %v1062, -inf
    %1068 = vmax.xlane.f32.xlu0 %v1067
    %v1069 = vpop.xlane.xlu0 %1068
    %v1070 = vsel %vm1066, %v1063, -inf
    %1071 = vmax.xlane.f32.xlu0 %v1070
    %v1072 = vpop.xlane.xlu0 %1071
    %v1073 = vsel %vm1066, %v1064, -inf
    %1074 = vmax.xlane.f32.xlu0 %v1073
    %v1075 = vpop.xlane.xlu0 %1074
    %v1076 = vsel %vm1066, %v1065, -inf
    %1077 = vmax.xlane.f32.xlu0 %v1076
    %v1078 = vpop.xlane.xlu0 %1077
    %v1079 = vsub.f32 %v1062, %v1069
    %v1080 = vsub.f32 %v1063, %v1072
    %v1081 = vsub.f32 %v1064, %v1075
    %v1082 = vsub.f32 %v1065, %v1078
    %v1083 = vmul.f32 %v1079, 1.442695
    %v1084 = vpow.pop %v1083
    %v1085 = vmul.f32 %v1080, 1.442695
    %v1086 = vpow.pop %v1085
    %v1087 = vmul.f32 %v1081, 1.442695
    %v1088 = vpow.pop %v1087
    %v1089 = vmul.f32 %v1082, 1.442695
    %v1090 = vpow.pop %v1089
    %v1091 = vsel %vm1066, %v1084, 0.0
    %1092 = vadd.xlane.f32.xlu0 %v1091
    %v1093 = vpop.xlane.xlu0 %1092
    %v1094 = vsel %vm1066, %v1086, 0.0
    %1095 = vadd.xlane.f32.xlu0 %v1094
    %v1096 = vpop.xlane.xlu0 %1095
    %v1097 = vsel %vm1066, %v1088, 0.0
    %1098 = vadd.xlane.f32.xlu0 %v1097
    %v1099 = vpop.xlane.xlu0 %1098
    %v1100 = vsel %vm1066, %v1090, 0.0
    %1101 = vadd.xlane.f32.xlu0 %v1100
    %v1102 = vpop.xlane.xlu0 %1101
    %v1103 = vrcp.pop %v1093
    %v1104 = vrcp.pop %v1096
    %v1105 = vrcp.pop %v1099
    %v1106 = vrcp.pop %v1102
    %v1107 = vmul.f32 %v1084, %v1103
    %v1108 = vmul.f32 %v1086, %v1104
    %v1109 = vmul.f32 %v1088, %v1105
    %v1110 = vmul.f32 %v1090, %v1106
    %v1112 = vsel %vm1066, %v1107, 0
    %v1115 = vsel %vm1066, %v1108, 0
    %1117 = vmatprep.subr.mxu0 0.0
    %1118 = vmatpush1.msra.mxu0 %v869
    %1119 = vmatprep.subr.mxu0 0.0
    %1120 = vmatpush1.msra.mxu0 %v874
    %1121 = vmatprep.subr.mxu0 0.0
    %1122 = vmatpush1.msra.mxu0 0.0
    %1123 = vmatprep.subr.mxu0 0.0
    %1124 = vmatpush1.msra.mxu0 0.0
    %1125 = vmatprep.subr.mxu0 0.0
    %1126 = vmatpush1.msra.mxu0 0.0
    %1127 = vmatprep.subr.mxu0 0.0
    %1128 = vmatpush1.msra.mxu0 0.0
    %1129 = vmatprep.subr.mxu0 0.0
    %1130 = vmatpush1.msra.mxu0 0.0
    %1131 = vmatprep.subr.mxu0 0.0
    %1132 = vmatpush1.msra.mxu0 0.0
    %1133 = vmatprep.subr.mxu0 0.0
    %1134 = vmatpush1.msra.mxu0 0.0
    %1135 = vmatprep.subr.mxu0 0.0
    %1136 = vmatpush1.msra.mxu0 0.0
    %1137 = vmatprep.subr.mxu0 0.0
    %1138 = vmatpush1.msra.mxu0 0.0
    %1139 = vmatprep.subr.mxu0 0.0
    %1140 = vmatpush1.msra.mxu0 0.0
    %1141 = vmatprep.subr.mxu0 0.0
    %1142 = vmatpush1.msra.mxu0 0.0
    %1143 = vmatprep.subr.mxu0 0.0
    %1144 = vmatpush1.msra.mxu0 0.0
    %1145 = vmatprep.subr.mxu0 0.0
    %1146 = vmatpush1.msra.mxu0 0.0
    %1147 = vmatprep.subr.mxu0 0.0
    %1148 = vmatpush1.msra.mxu0 0.0
    %1149 = vmatprep.subr.mxu0 0.0
    %1150 = vmatpush1.msra.mxu0 0.0
    %1151 = vmatprep.subr.mxu0 0.0
    %1152 = vmatpush1.msra.mxu0 0.0
    %1153 = vmatprep.subr.mxu0 0.0
    %1154 = vmatpush1.msra.mxu0 0.0
    %1155 = vmatprep.subr.mxu0 0.0
    %1156 = vmatpush1.msra.mxu0 0.0
    %1157 = vmatprep.subr.mxu0 0.0
    %1158 = vmatpush1.msra.mxu0 0.0
    %1159 = vmatprep.subr.mxu0 0.0
    %1160 = vmatpush1.msra.mxu0 0.0
    %1161 = vmatprep.subr.mxu0 0.0
    %1162 = vmatpush1.msra.mxu0 0.0
    %1163 = vmatprep.subr.mxu0 0.0
    %1164 = vmatpush1.msra.mxu0 0.0
    %1165 = vmatprep.subr.mxu0 0.0
    %1166 = vmatpush1.msra.mxu0 0.0
    %1167 = vmatprep.subr.mxu0 0.0
    %1168 = vmatpush1.msra.mxu0 0.0
    %1169 = vmatprep.subr.mxu0 0.0
    %1170 = vmatpush1.msra.mxu0 0.0
    %1171 = vmatprep.subr.mxu0 0.0
    %1172 = vmatpush1.msra.mxu0 0.0
    %1173 = vmatprep.subr.mxu0 0.0
    %1174 = vmatpush1.msra.mxu0 0.0
    %1175 = vmatprep.subr.mxu0 0.0
    %1176 = vmatpush1.msra.mxu0 0.0
    %1177 = vmatprep.subr.mxu0 0.0
    %1178 = vmatpush1.msra.mxu0 0.0
    %1179 = vmatprep.subr.mxu0 0.0
    %1180 = vmatpush1.msra.mxu0 0.0
    %1181 = vmatprep.mubr.f32.mxu0 0.0
    %1182 = vmatmul.mubr.f32.gmra.mrb[0].mxu0 %v1112
    %v1183 = vpop.f32.mrb[0].mxu0
    %v1184 = vadd.f32 0.0, %v1183
    %v1185 = vpop.f32.mrb[0].mxu0
    %1186 = vmatprep.mubr.f32.mxu0 0.0
    %1187 = vmatmul.mubr.f32.gmra.mrb[0].mxu0 %v1115
    %v1188 = vpop.f32.mrb[0].mxu0
    %v1189 = vadd.f32 0.0, %v1188
    %v1190 = vpop.f32.mrb[0].mxu0
    %1191 = vdwg.mxu0
    %v1193 = vsel %vm1066, %v1109, 0
    %v1196 = vsel %vm1066, %v1110, 0
    %1198 = vmatprep.subr.mxu0 0.0
    %1199 = vmatpush1.msra.mxu0 %v879
    %1200 = vmatprep.subr.mxu0 0.0
    %1201 = vmatpush1.msra.mxu0 %v884
    %1202 = vmatprep.subr.mxu0 0.0
    %1203 = vmatpush1.msra.mxu0 0.0
    %1204 = vmatprep.subr.mxu0 0.0
    %1205 = vmatpush1.msra.mxu0 0.0
    %1206 = vmatprep.subr.mxu0 0.0
    %1207 = vmatpush1.msra.mxu0 0.0
    %1208 = vmatprep.subr.mxu0 0.0
    %1209 = vmatpush1.msra.mxu0 0.0
    %1210 = vmatprep.subr.mxu0 0.0
    %1211 = vmatpush1.msra.mxu0 0.0
    %1212 = vmatprep.subr.mxu0 0.0
    %1213 = vmatpush1.msra.mxu0 0.0
    %1214 = vmatprep.subr.mxu0 0.0
    %1215 = vmatpush1.msra.mxu0 0.0
    %1216 = vmatprep.subr.mxu0 0.0
    %1217 = vmatpush1.msra.mxu0 0.0
    %1218 = vmatprep.subr.mxu0 0.0
    %1219 = vmatpush1.msra.mxu0 0.0
    %1220 = vmatprep.subr.mxu0 0.0
    %1221 = vmatpush1.msra.mxu0 0.0
    %1222 = vmatprep.subr.mxu0 0.0
    %1223 = vmatpush1.msra.mxu0 0.0
    %1224 = vmatprep.subr.mxu0 0.0
    %1225 = vmatpush1.msra.mxu0 0.0
    %1226 = vmatprep.subr.mxu0 0.0
    %1227 = vmatpush1.msra.mxu0 0.0
    %1228 = vmatprep.subr.mxu0 0.0
    %1229 = vmatpush1.msra.mxu0 0.0
    %1230 = vmatprep.subr.mxu0 0.0
    %1231 = vmatpush1.msra.mxu0 0.0
    %1232 = vmatprep.subr.mxu0 0.0
    %1233 = vmatpush1.msra.mxu0 0.0
    %1234 = vmatprep.subr.mxu0 0.0
    %1235 = vmatpush1.msra.mxu0 0.0
    %1236 = vmatprep.subr.mxu0 0.0
    %1237 = vmatpush1.msra.mxu0 0.0
    %1238 = vmatprep.subr.mxu0 0.0
    %1239 = vmatpush1.msra.mxu0 0.0
    %1240 = vmatprep.subr.mxu0 0.0
    %1241 = vmatpush1.msra.mxu0 0.0
    %1242 = vmatprep.subr.mxu0 0.0
    %1243 = vmatpush1.msra.mxu0 0.0
    %1244 = vmatprep.subr.mxu0 0.0
    %1245 = vmatpush1.msra.mxu0 0.0
    %1246 = vmatprep.subr.mxu0 0.0
    %1247 = vmatpush1.msra.mxu0 0.0
    %1248 = vmatprep.subr.mxu0 0.0
    %1249 = vmatpush1.msra.mxu0 0.0
    %1250 = vmatprep.subr.mxu0 0.0
    %1251 = vmatpush1.msra.mxu0 0.0
    %1252 = vmatprep.subr.mxu0 0.0
    %1253 = vmatpush1.msra.mxu0 0.0
    %1254 = vmatprep.subr.mxu0 0.0
    %1255 = vmatpush1.msra.mxu0 0.0
    %1256 = vmatprep.subr.mxu0 0.0
    %1257 = vmatpush1.msra.mxu0 0.0
    %1258 = vmatprep.subr.mxu0 0.0
    %1259 = vmatpush1.msra.mxu0 0.0
    %1260 = vmatprep.subr.mxu0 0.0
    %1261 = vmatpush1.msra.mxu0 0.0
    %1262 = vmatprep.mubr.f32.mxu0 0.0
    %1263 = vmatmul.mubr.f32.gmra.mrb[0].mxu0 %v1193
    %v1264 = vpop.f32.mrb[0].mxu0
    %v1265 = vadd.f32 0.0, %v1264
    %v1266 = vpop.f32.mrb[0].mxu0
    %1267 = vmatprep.mubr.f32.mxu0 0.0
    %1268 = vmatmul.mubr.f32.gmra.mrb[0].mxu0 %v1196
    %v1269 = vpop.f32.mrb[0].mxu0
    %v1270 = vadd.f32 0.0, %v1269
    %v1271 = vpop.f32.mrb[0].mxu0
    %1272 = vdwg.mxu0
    %v1273 = vld [vmem:[%s7] sm:$0xff]
    %s1274 = scalar_lea.vmem %s6, 32
    %v1275 = vld [vmem:[%s1274] sm:$0xff]
    %v1276 = vld [vmem:[%s1274 + $0x8] sm:$0xff]
    %v1277 = vld [vmem:[%s1274 + $0x10] sm:$0xff]
    %v1278 = vld [vmem:[%s1274 + $0x18] sm:$0xff]
    %v1279 = vld [vmem:[%s8 + $0x1] sm:$0x1]
    %v1280 = vlaneseq
    %v1281 = vshrl.u32 %v1280, 7
    %v1282 = vsub.s32 0, %v1281
    %v1283 = vrot.slane %v1279, %v1282
    %1284 = vmatprep.subr.mxu0 0.0
    %1285 = vmatpush1.msra.mxu0 %v1275
    %1286 = vmatprep.subr.mxu0 0.0
    %1287 = vmatpush1.msra.mxu0 %v1276
    %1288 = vmatprep.subr.mxu0 0.0
    %1289 = vmatpush1.msra.mxu0 %v1277
    %1290 = vmatprep.subr.mxu0 0.0
    %1291 = vmatpush1.msra.mxu0 %v1278
    %1292 = vmatprep.subr.mxu0 0.0
    %1293 = vmatpush1.msra.mxu0 0.0
    %1294 = vmatprep.subr.mxu0 0.0
    %1295 = vmatpush1.msra.mxu0 0.0
    %1296 = vmatprep.subr.mxu0 0.0
    %1297 = vmatpush1.msra.mxu0 0.0
    %1298 = vmatprep.subr.mxu0 0.0
    %1299 = vmatpush1.msra.mxu0 0.0
    %1300 = vmatprep.subr.mxu0 0.0
    %1301 = vmatpush1.msra.mxu0 0.0
    %1302 = vmatprep.subr.mxu0 0.0
    %1303 = vmatpush1.msra.mxu0 0.0
    %1304 = vmatprep.subr.mxu0 0.0
    %1305 = vmatpush1.msra.mxu0 0.0
    %1306 = vmatprep.subr.mxu0 0.0
    %1307 = vmatpush1.msra.mxu0 0.0
    %1308 = vmatprep.subr.mxu0 0.0
    %1309 = vmatpush1.msra.mxu0 0.0
    %1310 = vmatprep.subr.mxu0 0.0
    %1311 = vmatpush1.msra.mxu0 0.0
    %1312 = vmatprep.subr.mxu0 0.0
    %1313 = vmatpush1.msra.mxu0 0.0
    %1314 = vmatprep.subr.mxu0 0.0
    %1315 = vmatpush1.msra.mxu0 0.0
    %1316 = vmatprep.subr.mxu0 0.0
    %1317 = vmatpush1.msra.mxu0 0.0
    %1318 = vmatprep.subr.mxu0 0.0
    %1319 = vmatpush1.msra.mxu0 0.0
    %1320 = vmatprep.subr.mxu0 0.0
    %1321 = vmatpush1.msra.mxu0 0.0
    %1322 = vmatprep.subr.mxu0 0.0
    %1323 = vmatpush1.msra.mxu0 0.0
    %1324 = vmatprep.subr.mxu0 0.0
    %1325 = vmatpush1.msra.mxu0 0.0
    %1326 = vmatprep.subr.mxu0 0.0
    %1327 = vmatpush1.msra.mxu0 0.0
    %1328 = vmatprep.subr.mxu0 0.0
    %1329 = vmatpush1.msra.mxu0 0.0
    %1330 = vmatprep.subr.mxu0 0.0
    %1331 = vmatpush1.msra.mxu0 0.0
    %1332 = vmatprep.subr.mxu0 0.0
    %1333 = vmatpush1.msra.mxu0 0.0
    %1334 = vmatprep.subr.mxu0 0.0
    %1335 = vmatpush1.msra.mxu0 0.0
    %1336 = vmatprep.subr.mxu0 0.0
    %1337 = vmatpush1.msra.mxu0 0.0
    %1338 = vmatprep.subr.mxu0 0.0
    %1339 = vmatpush1.msra.mxu0 0.0
    %1340 = vmatprep.subr.mxu0 0.0
    %1341 = vmatpush1.msra.mxu0 0.0
    %1342 = vmatprep.subr.mxu0 0.0
    %1343 = vmatpush1.msra.mxu0 0.0
    %1344 = vmatprep.subr.mxu0 0.0
    %1345 = vmatpush1.msra.mxu0 0.0
    %1346 = vmatprep.subr.mxu0 0.0
    %1347 = vmatpush1.msra.mxu0 0.0
    %1348 = vmatprep.mubr.f32.mxu0 0.0
    %1349 = vmatmul.mubr.f32.gmra.mrb[0].mxu0 %v387
    %v1350 = vpop.f32.mrb[0].mxu0
    %v1351 = vadd.f32 %v1283, %v1350
    %v1352 = vpop.f32.mrb[0].mxu0
    %1353 = vmatprep.mubr.f32.mxu0 0.0
    %1354 = vmatmul.mubr.f32.gmra.mrb[0].mxu0 %v390
    %v1355 = vpop.f32.mrb[0].mxu0
    %v1356 = vadd.f32 %v1283, %v1355
    %v1357 = vpop.f32.mrb[0].mxu0
    %1358 = vmatprep.mubr.f32.mxu0 0.0
    %1359 = vmatmul.mubr.f32.gmra.mrb[0].mxu0 %v393
    %v1360 = vpop.f32.mrb[0].mxu0
    %v1361 = vadd.f32 %v1283, %v1360
    %v1362 = vpop.f32.mrb[0].mxu0
    %1363 = vmatprep.mubr.f32.mxu0 0.0
    %1364 = vmatmul.mubr.f32.gmra.mrb[0].mxu0 %v396
    %v1365 = vpop.f32.mrb[0].mxu0
    %v1366 = vadd.f32 %v1283, %v1365
    %v1367 = vpop.f32.mrb[0].mxu0
    %1368 = vdwg.mxu0
    %v1369 = vmul.f32 %v1351, %v368
    %v1370 = vmul.f32 %v1356, %v369
    %v1371 = vmul.f32 %v1361, %v370
    %v1372 = vmul.f32 %v1366, %v371
    %s1373 = scalar_lea.vmem %s6, 160
    %v1374 = vld [vmem:[%s1373] sm:$0xff]
    %v1375 = vld [vmem:[%s1373 + $0x8] sm:$0xff]
    %v1376 = vld [vmem:[%s1373 + $0x10] sm:$0xff]
    %v1377 = vld [vmem:[%s1373 + $0x18] sm:$0xff]
    %v1378 = vld [vmem:[%s8 + $0x5] sm:$0x1]
    %v1379 = vlaneseq
    %v1380 = vshrl.u32 %v1379, 7
    %v1381 = vsub.s32 0, %v1380
    %v1382 = vrot.slane %v1378, %v1381
    %1383 = vmatprep.subr.mxu0 0.0
    %1384 = vmatpush1.msra.mxu0 %v1374
    %1385 = vmatprep.subr.mxu0 0.0
    %1386 = vmatpush1.msra.mxu0 %v1375
    %1387 = vmatprep.subr.mxu0 0.0
    %1388 = vmatpush1.msra.mxu0 %v1376
    %1389 = vmatprep.subr.mxu0 0.0
    %1390 = vmatpush1.msra.mxu0 %v1377
    %1391 = vmatprep.subr.mxu0 0.0
    %1392 = vmatpush1.msra.mxu0 0.0
    %1393 = vmatprep.subr.mxu0 0.0
    %1394 = vmatpush1.msra.mxu0 0.0
    %1395 = vmatprep.subr.mxu0 0.0
    %1396 = vmatpush1.msra.mxu0 0.0
    %1397 = vmatprep.subr.mxu0 0.0
    %1398 = vmatpush1.msra.mxu0 0.0
    %1399 = vmatprep.subr.mxu0 0.0
    %1400 = vmatpush1.msra.mxu0 0.0
    %1401 = vmatprep.subr.mxu0 0.0
    %1402 = vmatpush1.msra.mxu0 0.0
    %1403 = vmatprep.subr.mxu0 0.0
    %1404 = vmatpush1.msra.mxu0 0.0
    %1405 = vmatprep.subr.mxu0 0.0
    %1406 = vmatpush1.msra.mxu0 0.0
    %1407 = vmatprep.subr.mxu0 0.0
    %1408 = vmatpush1.msra.mxu0 0.0
    %1409 = vmatprep.subr.mxu0 0.0
    %1410 = vmatpush1.msra.mxu0 0.0
    %1411 = vmatprep.subr.mxu0 0.0
    %1412 = vmatpush1.msra.mxu0 0.0
    %1413 = vmatprep.subr.mxu0 0.0
    %1414 = vmatpush1.msra.mxu0 0.0
    %1415 = vmatprep.subr.mxu0 0.0
    %1416 = vmatpush1.msra.mxu0 0.0
    %1417 = vmatprep.subr.mxu0 0.0
    %1418 = vmatpush1.msra.mxu0 0.0
    %1419 = vmatprep.subr.mxu0 0.0
    %1420 = vmatpush1.msra.mxu0 0.0
    %1421 = vmatprep.subr.mxu0 0.0
    %1422 = vmatpush1.msra.mxu0 0.0
    %1423 = vmatprep.subr.mxu0 0.0
    %1424 = vmatpush1.msra.mxu0 0.0
    %1425 = vmatprep.subr.mxu0 0.0
    %1426 = vmatpush1.msra.mxu0 0.0
    %1427 = vmatprep.subr.mxu0 0.0
    %1428 = vmatpush1.msra.mxu0 0.0
    %1429 = vmatprep.subr.mxu0 0.0
    %1430 = vmatpush1.msra.mxu0 0.0
    %1431 = vmatprep.subr.mxu0 0.0
    %1432 = vmatpush1.msra.mxu0 0.0
    %1433 = vmatprep.subr.mxu0 0.0
    %1434 = vmatpush1.msra.mxu0 0.0
    %1435 = vmatprep.subr.mxu0 0.0
    %1436 = vmatpush1.msra.mxu0 0.0
    %1437 = vmatprep.subr.mxu0 0.0
    %1438 = vmatpush1.msra.mxu0 0.0
    %1439 = vmatprep.subr.mxu0 0.0
    %1440 = vmatpush1.msra.mxu0 0.0
    %1441 = vmatprep.subr.mxu0 0.0
    %1442 = vmatpush1.msra.mxu0 0.0
    %1443 = vmatprep.subr.mxu0 0.0
    %1444 = vmatpush1.msra.mxu0 0.0
    %1445 = vmatprep.subr.mxu0 0.0
    %1446 = vmatpush1.msra.mxu0 0.0
    %1447 = vmatprep.mubr.f32.mxu0 0.0
    %1448 = vmatmul.mubr.f32.gmra.mrb[0].mxu0 %v387
    %v1449 = vpop.f32.mrb[0].mxu0
    %v1450 = vadd.f32 %v1382, %v1449
    %v1451 = vpop.f32.mrb[0].mxu0
    %1452 = vmatprep.mubr.f32.mxu0 0.0
    %1453 = vmatmul.mubr.f32.gmra.mrb[0].mxu0 %v390
    %v1454 = vpop.f32.mrb[0].mxu0
    %v1455 = vadd.f32 %v1382, %v1454
    %v1456 = vpop.f32.mrb[0].mxu0
    %1457 = vmatprep.mubr.f32.mxu0 0.0
    %1458 = vmatmul.mubr.f32.gmra.mrb[0].mxu0 %v393
    %v1459 = vpop.f32.mrb[0].mxu0
    %v1460 = vadd.f32 %v1382, %v1459
    %v1461 = vpop.f32.mrb[0].mxu0
    %1462 = vmatprep.mubr.f32.mxu0 0.0
    %1463 = vmatmul.mubr.f32.gmra.mrb[0].mxu0 %v396
    %v1464 = vpop.f32.mrb[0].mxu0
    %v1465 = vadd.f32 %v1382, %v1464
    %v1466 = vpop.f32.mrb[0].mxu0
    %1467 = vdwg.mxu0
    %v1468 = vmul.f32 %v1450, %v373
    %v1469 = vmul.f32 %v1455, %v374
    %v1470 = vmul.f32 %v1460, %v375
    %v1471 = vmul.f32 %v1465, %v376
    %v1472 = vadd.f32 %v1369, %v1468
    %v1473 = vadd.f32 %v1370, %v1469
    %v1474 = vadd.f32 %v1371, %v1470
    %v1475 = vadd.f32 %v1372, %v1471
    %s1476 = scalar_lea.vmem %s6, 288
    %v1477 = vld [vmem:[%s1476] sm:$0xff]
    %v1478 = vld [vmem:[%s1476 + $0x8] sm:$0xff]
    %v1479 = vld [vmem:[%s1476 + $0x10] sm:$0xff]
    %v1480 = vld [vmem:[%s1476 + $0x18] sm:$0xff]
    %v1481 = vld [vmem:[%s8 + $0x9] sm:$0x1]
    %v1482 = vlaneseq
    %v1483 = vshrl.u32 %v1482, 7
    %v1484 = vsub.s32 0, %v1483
    %v1485 = vrot.slane %v1481, %v1484
    %1486 = vmatprep.subr.mxu0 0.0
    %1487 = vmatpush1.msra.mxu0 %v1477
    %1488 = vmatprep.subr.mxu0 0.0
    %1489 = vmatpush1.msra.mxu0 %v1478
    %1490 = vmatprep.subr.mxu0 0.0
    %1491 = vmatpush1.msra.mxu0 %v1479
    %1492 = vmatprep.subr.mxu0 0.0
    %1493 = vmatpush1.msra.mxu0 %v1480
    %1494 = vmatprep.subr.mxu0 0.0
    %1495 = vmatpush1.msra.mxu0 0.0
    %1496 = vmatprep.subr.mxu0 0.0
    %1497 = vmatpush1.msra.mxu0 0.0
    %1498 = vmatprep.subr.mxu0 0.0
    %1499 = vmatpush1.msra.mxu0 0.0
    %1500 = vmatprep.subr.mxu0 0.0
    %1501 = vmatpush1.msra.mxu0 0.0
    %1502 = vmatprep.subr.mxu0 0.0
    %1503 = vmatpush1.msra.mxu0 0.0
    %1504 = vmatprep.subr.mxu0 0.0
    %1505 = vmatpush1.msra.mxu0 0.0
    %1506 = vmatprep.subr.mxu0 0.0
    %1507 = vmatpush1.msra.mxu0 0.0
    %1508 = vmatprep.subr.mxu0 0.0
    %1509 = vmatpush1.msra.mxu0 0.0
    %1510 = vmatprep.subr.mxu0 0.0
    %1511 = vmatpush1.msra.mxu0 0.0
    %1512 = vmatprep.subr.mxu0 0.0
    %1513 = vmatpush1.msra.mxu0 0.0
    %1514 = vmatprep.subr.mxu0 0.0
    %1515 = vmatpush1.msra.mxu0 0.0
    %1516 = vmatprep.subr.mxu0 0.0
    %1517 = vmatpush1.msra.mxu0 0.0
    %1518 = vmatprep.subr.mxu0 0.0
    %1519 = vmatpush1.msra.mxu0 0.0
    %1520 = vmatprep.subr.mxu0 0.0
    %1521 = vmatpush1.msra.mxu0 0.0
    %1522 = vmatprep.subr.mxu0 0.0
    %1523 = vmatpush1.msra.mxu0 0.0
    %1524 = vmatprep.subr.mxu0 0.0
    %1525 = vmatpush1.msra.mxu0 0.0
    %1526 = vmatprep.subr.mxu0 0.0
    %1527 = vmatpush1.msra.mxu0 0.0
    %1528 = vmatprep.subr.mxu0 0.0
    %1529 = vmatpush1.msra.mxu0 0.0
    %1530 = vmatprep.subr.mxu0 0.0
    %1531 = vmatpush1.msra.mxu0 0.0
    %1532 = vmatprep.subr.mxu0 0.0
    %1533 = vmatpush1.msra.mxu0 0.0
    %1534 = vmatprep.subr.mxu0 0.0
    %1535 = vmatpush1.msra.mxu0 0.0
    %1536 = vmatprep.subr.mxu0 0.0
    %1537 = vmatpush1.msra.mxu0 0.0
    %1538 = vmatprep.subr.mxu0 0.0
    %1539 = vmatpush1.msra.mxu0 0.0
    %1540 = vmatprep.subr.mxu0 0.0
    %1541 = vmatpush1.msra.mxu0 0.0
    %1542 = vmatprep.subr.mxu0 0.0
    %1543 = vmatpush1.msra.mxu0 0.0
    %1544 = vmatprep.subr.mxu0 0.0
    %1545 = vmatpush1.msra.mxu0 0.0
    %1546 = vmatprep.subr.mxu0 0.0
    %1547 = vmatpush1.msra.mxu0 0.0
    %1548 = vmatprep.subr.mxu0 0.0
    %1549 = vmatpush1.msra.mxu0 0.0
    %1550 = vmatprep.mubr.f32.mxu0 0.0
    %1551 = vmatmul.mubr.f32.gmra.mrb[0].mxu0 %v387
    %v1552 = vpop.f32.mrb[0].mxu0
    %v1553 = vadd.f32 %v1485, %v1552
    %v1554 = vpop.f32.mrb[0].mxu0
    %1555 = vmatprep.mubr.f32.mxu0 0.0
    %1556 = vmatmul.mubr.f32.gmra.mrb[0].mxu0 %v390
    %v1557 = vpop.f32.mrb[0].mxu0
    %v1558 = vadd.f32 %v1485, %v1557
    %v1559 = vpop.f32.mrb[0].mxu0
    %1560 = vmatprep.mubr.f32.mxu0 0.0
    %1561 = vmatmul.mubr.f32.gmra.mrb[0].mxu0 %v393
    %v1562 = vpop.f32.mrb[0].mxu0
    %v1563 = vadd.f32 %v1485, %v1562
    %v1564 = vpop.f32.mrb[0].mxu0
    %1565 = vmatprep.mubr.f32.mxu0 0.0
    %1566 = vmatmul.mubr.f32.gmra.mrb[0].mxu0 %v396
    %v1567 = vpop.f32.mrb[0].mxu0
    %v1568 = vadd.f32 %v1485, %v1567
    %v1569 = vpop.f32.mrb[0].mxu0
    %1570 = vdwg.mxu0
    %v1571 = vmul.f32 %v1553, %v368
    %v1572 = vmul.f32 %v1558, %v369
    %v1573 = vmul.f32 %v1563, %v370
    %v1574 = vmul.f32 %v1568, %v371
    %s1575 = scalar_lea.vmem %s6, 416
    %v1576 = vld [vmem:[%s1575] sm:$0xff]
    %v1577 = vld [vmem:[%s1575 + $0x8] sm:$0xff]
    %v1578 = vld [vmem:[%s1575 + $0x10] sm:$0xff]
    %v1579 = vld [vmem:[%s1575 + $0x18] sm:$0xff]
    %v1580 = vld [vmem:[%s8 + $0xd] sm:$0x1]
    %v1581 = vlaneseq
    %v1582 = vshrl.u32 %v1581, 7
    %v1583 = vsub.s32 0, %v1582
    %v1584 = vrot.slane %v1580, %v1583
    %1585 = vmatprep.subr.mxu0 0.0
    %1586 = vmatpush1.msra.mxu0 %v1576
    %1587 = vmatprep.subr.mxu0 0.0
    %1588 = vmatpush1.msra.mxu0 %v1577
    %1589 = vmatprep.subr.mxu0 0.0
    %1590 = vmatpush1.msra.mxu0 %v1578
    %1591 = vmatprep.subr.mxu0 0.0
    %1592 = vmatpush1.msra.mxu0 %v1579
    %1593 = vmatprep.subr.mxu0 0.0
    %1594 = vmatpush1.msra.mxu0 0.0
    %1595 = vmatprep.subr.mxu0 0.0
    %1596 = vmatpush1.msra.mxu0 0.0
    %1597 = vmatprep.subr.mxu0 0.0
    %1598 = vmatpush1.msra.mxu0 0.0
    %1599 = vmatprep.subr.mxu0 0.0
    %1600 = vmatpush1.msra.mxu0 0.0
    %1601 = vmatprep.subr.mxu0 0.0
    %1602 = vmatpush1.msra.mxu0 0.0
    %1603 = vmatprep.subr.mxu0 0.0
    %1604 = vmatpush1.msra.mxu0 0.0
    %1605 = vmatprep.subr.mxu0 0.0
    %1606 = vmatpush1.msra.mxu0 0.0
    %1607 = vmatprep.subr.mxu0 0.0
    %1608 = vmatpush1.msra.mxu0 0.0
    %1609 = vmatprep.subr.mxu0 0.0
    %1610 = vmatpush1.msra.mxu0 0.0
    %1611 = vmatprep.subr.mxu0 0.0
    %1612 = vmatpush1.msra.mxu0 0.0
    %1613 = vmatprep.subr.mxu0 0.0
    %1614 = vmatpush1.msra.mxu0 0.0
    %1615 = vmatprep.subr.mxu0 0.0
    %1616 = vmatpush1.msra.mxu0 0.0
    %1617 = vmatprep.subr.mxu0 0.0
    %1618 = vmatpush1.msra.mxu0 0.0
    %1619 = vmatprep.subr.mxu0 0.0
    %1620 = vmatpush1.msra.mxu0 0.0
    %1621 = vmatprep.subr.mxu0 0.0
    %1622 = vmatpush1.msra.mxu0 0.0
    %1623 = vmatprep.subr.mxu0 0.0
    %1624 = vmatpush1.msra.mxu0 0.0
    %1625 = vmatprep.subr.mxu0 0.0
    %1626 = vmatpush1.msra.mxu0 0.0
    %1627 = vmatprep.subr.mxu0 0.0
    %1628 = vmatpush1.msra.mxu0 0.0
    %1629 = vmatprep.subr.mxu0 0.0
    %1630 = vmatpush1.msra.mxu0 0.0
    %1631 = vmatprep.subr.mxu0 0.0
    %1632 = vmatpush1.msra.mxu0 0.0
    %1633 = vmatprep.subr.mxu0 0.0
    %1634 = vmatpush1.msra.mxu0 0.0
    %1635 = vmatprep.subr.mxu0 0.0
    %1636 = vmatpush1.msra.mxu0 0.0
    %1637 = vmatprep.subr.mxu0 0.0
    %1638 = vmatpush1.msra.mxu0 0.0
    %1639 = vmatprep.subr.mxu0 0.0
    %1640 = vmatpush1.msra.mxu0 0.0
    %1641 = vmatprep.subr.mxu0 0.0
    %1642 = vmatpush1.msra.mxu0 0.0
    %1643 = vmatprep.subr.mxu0 0.0
    %1644 = vmatpush1.msra.mxu0 0.0
    %1645 = vmatprep.subr.mxu0 0.0
    %1646 = vmatpush1.msra.mxu0 0.0
    %1647 = vmatprep.subr.mxu0 0.0
    %1648 = vmatpush1.msra.mxu0 0.0
    %1649 = vmatprep.mubr.f32.mxu0 0.0
    %1650 = vmatmul.mubr.f32.gmra.mrb[0].mxu0 %v387
    %v1651 = vpop.f32.mrb[0].mxu0
    %v1652 = vadd.f32 %v1584, %v1651
    %v1653 = vpop.f32.mrb[0].mxu0
    %1654 = vmatprep.mubr.f32.mxu0 0.0
    %1655 = vmatmul.mubr.f32.gmra.mrb[0].mxu0 %v390
    %v1656 = vpop.f32.mrb[0].mxu0
    %v1657 = vadd.f32 %v1584, %v1656
    %v1658 = vpop.f32.mrb[0].mxu0
    %1659 = vmatprep.mubr.f32.mxu0 0.0
    %1660 = vmatmul.mubr.f32.gmra.mrb[0].mxu0 %v393
    %v1661 = vpop.f32.mrb[0].mxu0
    %v1662 = vadd.f32 %v1584, %v1661
    %v1663 = vpop.f32.mrb[0].mxu0
    %1664 = vmatprep.mubr.f32.mxu0 0.0
    %1665 = vmatmul.mubr.f32.gmra.mrb[0].mxu0 %v396
    %v1666 = vpop.f32.mrb[0].mxu0
    %v1667 = vadd.f32 %v1584, %v1666
    %v1668 = vpop.f32.mrb[0].mxu0
    %1669 = vdwg.mxu0
    %v1670 = vmul.f32 %v1652, %v373
    %v1671 = vmul.f32 %v1657, %v374
    %v1672 = vmul.f32 %v1662, %v375
    %v1673 = vmul.f32 %v1667, %v376
    %v1674 = vadd.f32 %v1571, %v1670
    %v1675 = vadd.f32 %v1572, %v1671
    %v1676 = vadd.f32 %v1573, %v1672
    %v1677 = vadd.f32 %v1574, %v1673
    %s1678 = scalar_lea.vmem %s6, 544
    %v1679 = vld [vmem:[%s1678] sm:$0xff]
    %v1680 = vld [vmem:[%s1678 + $0x8] sm:$0xff]
    %v1681 = vld [vmem:[%s1678 + $0x10] sm:$0xff]
    %v1682 = vld [vmem:[%s1678 + $0x18] sm:$0xff]
    %v1683 = vld [vmem:[%s8 + $0x11] sm:$0x1]
    %v1684 = vlaneseq
    %v1685 = vshrl.u32 %v1684, 7
    %v1686 = vsub.s32 0, %v1685
    %v1687 = vrot.slane %v1683, %v1686
    %1688 = vmatprep.subr.mxu0 0.0
    %1689 = vmatpush1.msra.mxu0 %v1679
    %1690 = vmatprep.subr.mxu0 0.0
    %1691 = vmatpush1.msra.mxu0 %v1680
    %1692 = vmatprep.subr.mxu0 0.0
    %1693 = vmatpush1.msra.mxu0 %v1681
    %1694 = vmatprep.subr.mxu0 0.0
    %1695 = vmatpush1.msra.mxu0 %v1682
    %1696 = vmatprep.subr.mxu0 0.0
    %1697 = vmatpush1.msra.mxu0 0.0
    %1698 = vmatprep.subr.mxu0 0.0
    %1699 = vmatpush1.msra.mxu0 0.0
    %1700 = vmatprep.subr.mxu0 0.0
    %1701 = vmatpush1.msra.mxu0 0.0
    %1702 = vmatprep.subr.mxu0 0.0
    %1703 = vmatpush1.msra.mxu0 0.0
    %1704 = vmatprep.subr.mxu0 0.0
    %1705 = vmatpush1.msra.mxu0 0.0
    %1706 = vmatprep.subr.mxu0 0.0
    %1707 = vmatpush1.msra.mxu0 0.0
    %1708 = vmatprep.subr.mxu0 0.0
    %1709 = vmatpush1.msra.mxu0 0.0
    %1710 = vmatprep.subr.mxu0 0.0
    %1711 = vmatpush1.msra.mxu0 0.0
    %1712 = vmatprep.subr.mxu0 0.0
    %1713 = vmatpush1.msra.mxu0 0.0
    %1714 = vmatprep.subr.mxu0 0.0
    %1715 = vmatpush1.msra.mxu0 0.0
    %1716 = vmatprep.subr.mxu0 0.0
    %1717 = vmatpush1.msra.mxu0 0.0
    %1718 = vmatprep.subr.mxu0 0.0
    %1719 = vmatpush1.msra.mxu0 0.0
    %1720 = vmatprep.subr.mxu0 0.0
    %1721 = vmatpush1.msra.mxu0 0.0
    %1722 = vmatprep.subr.mxu0 0.0
    %1723 = vmatpush1.msra.mxu0 0.0
    %1724 = vmatprep.subr.mxu0 0.0
    %1725 = vmatpush1.msra.mxu0 0.0
    %1726 = vmatprep.subr.mxu0 0.0
    %1727 = vmatpush1.msra.mxu0 0.0
    %1728 = vmatprep.subr.mxu0 0.0
    %1729 = vmatpush1.msra.mxu0 0.0
    %1730 = vmatprep.subr.mxu0 0.0
    %1731 = vmatpush1.msra.mxu0 0.0
    %1732 = vmatprep.subr.mxu0 0.0
    %1733 = vmatpush1.msra.mxu0 0.0
    %1734 = vmatprep.subr.mxu0 0.0
    %1735 = vmatpush1.msra.mxu0 0.0
    %1736 = vmatprep.subr.mxu0 0.0
    %1737 = vmatpush1.msra.mxu0 0.0
    %1738 = vmatprep.subr.mxu0 0.0
    %1739 = vmatpush1.msra.mxu0 0.0
    %1740 = vmatprep.subr.mxu0 0.0
    %1741 = vmatpush1.msra.mxu0 0.0
    %1742 = vmatprep.subr.mxu0 0.0
    %1743 = vmatpush1.msra.mxu0 0.0
    %1744 = vmatprep.subr.mxu0 0.0
    %1745 = vmatpush1.msra.mxu0 0.0
    %1746 = vmatprep.subr.mxu0 0.0
    %1747 = vmatpush1.msra.mxu0 0.0
    %1748 = vmatprep.subr.mxu0 0.0
    %1749 = vmatpush1.msra.mxu0 0.0
    %1750 = vmatprep.subr.mxu0 0.0
    %1751 = vmatpush1.msra.mxu0 0.0
    %1752 = vmatprep.mubr.f32.mxu0 0.0
    %1753 = vmatmul.mubr.f32.gmra.mrb[0].mxu0 %v387
    %v1754 = vpop.f32.mrb[0].mxu0
    %v1755 = vadd.f32 %v1687, %v1754
    %v1756 = vpop.f32.mrb[0].mxu0
    %1757 = vmatprep.mubr.f32.mxu0 0.0
    %1758 = vmatmul.mubr.f32.gmra.mrb[0].mxu0 %v390
    %v1759 = vpop.f32.mrb[0].mxu0
    %v1760 = vadd.f32 %v1687, %v1759
    %v1761 = vpop.f32.mrb[0].mxu0
    %1762 = vmatprep.mubr.f32.mxu0 0.0
    %1763 = vmatmul.mubr.f32.gmra.mrb[0].mxu0 %v393
    %v1764 = vpop.f32.mrb[0].mxu0
    %v1765 = vadd.f32 %v1687, %v1764
    %v1766 = vpop.f32.mrb[0].mxu0
    %1767 = vmatprep.mubr.f32.mxu0 0.0
    %1768 = vmatmul.mubr.f32.gmra.mrb[0].mxu0 %v396
    %v1769 = vpop.f32.mrb[0].mxu0
    %v1770 = vadd.f32 %v1687, %v1769
    %v1771 = vpop.f32.mrb[0].mxu0
    %1772 = vdwg.mxu0
    %v1774 = vsel %vm887, %v1472, 0
    %v1777 = vsel %vm887, %v1473, 0
    %v1780 = vsel %vm887, %v1674, 0
    %v1783 = vsel %vm887, %v1675, 0
    %1785 = vmatprep.subr.mxu0 0.0
    %1786 = vmatpush1.xpose.msra.mxu0 %v1780
    %1787 = vmatprep.subr.mxu0 0.0
    %1788 = vmatpush1.xpose.msra.mxu0 %v1783
    %1789 = vmatprep.subr.mxu0 0.0
    %1790 = vmatpush1.xpose.msra.mxu0 0.0
    %1791 = vmatprep.subr.mxu0 0.0
    %1792 = vmatpush1.xpose.msra.mxu0 0.0
    %1793 = vmatprep.subr.mxu0 0.0
    %1794 = vmatpush1.xpose.msra.mxu0 0.0
    %1795 = vmatprep.subr.mxu0 0.0
    %1796 = vmatpush1.xpose.msra.mxu0 0.0
    %1797 = vmatprep.subr.mxu0 0.0
    %1798 = vmatpush1.xpose.msra.mxu0 0.0
    %1799 = vmatprep.subr.mxu0 0.0
    %1800 = vmatpush1.xpose.msra.mxu0 0.0
    %1801 = vmatprep.subr.mxu0 0.0
    %1802 = vmatpush1.xpose.msra.mxu0 0.0
    %1803 = vmatprep.subr.mxu0 0.0
    %1804 = vmatpush1.xpose.msra.mxu0 0.0
    %1805 = vmatprep.subr.mxu0 0.0
    %1806 = vmatpush1.xpose.msra.mxu0 0.0
    %1807 = vmatprep.subr.mxu0 0.0
    %1808 = vmatpush1.xpose.msra.mxu0 0.0
    %1809 = vmatprep.subr.mxu0 0.0
    %1810 = vmatpush1.xpose.msra.mxu0 0.0
    %1811 = vmatprep.subr.mxu0 0.0
    %1812 = vmatpush1.xpose.msra.mxu0 0.0
    %1813 = vmatprep.subr.mxu0 0.0
    %1814 = vmatpush1.xpose.msra.mxu0 0.0
    %1815 = vmatprep.subr.mxu0 0.0
    %1816 = vmatpush1.xpose.msra.mxu0 0.0
    %1817 = vmatprep.subr.mxu0 0.0
    %1818 = vmatpush1.xpose.msra.mxu0 0.0
    %1819 = vmatprep.subr.mxu0 0.0
    %1820 = vmatpush1.xpose.msra.mxu0 0.0
    %1821 = vmatprep.subr.mxu0 0.0
    %1822 = vmatpush1.xpose.msra.mxu0 0.0
    %1823 = vmatprep.subr.mxu0 0.0
    %1824 = vmatpush1.xpose.msra.mxu0 0.0
    %1825 = vmatprep.subr.mxu0 0.0
    %1826 = vmatpush1.xpose.msra.mxu0 0.0
    %1827 = vmatprep.subr.mxu0 0.0
    %1828 = vmatpush1.xpose.msra.mxu0 0.0
    %1829 = vmatprep.subr.mxu0 0.0
    %1830 = vmatpush1.xpose.msra.mxu0 0.0
    %1831 = vmatprep.subr.mxu0 0.0
    %1832 = vmatpush1.xpose.msra.mxu0 0.0
    %1833 = vmatprep.subr.mxu0 0.0
    %1834 = vmatpush1.xpose.msra.mxu0 0.0
    %1835 = vmatprep.subr.mxu0 0.0
    %1836 = vmatpush1.xpose.msra.mxu0 0.0
    %1837 = vmatprep.subr.mxu0 0.0
    %1838 = vmatpush1.xpose.msra.mxu0 0.0
    %1839 = vmatprep.subr.mxu0 0.0
    %1840 = vmatpush1.xpose.msra.mxu0 0.0
    %1841 = vmatprep.subr.mxu0 0.0
    %1842 = vmatpush1.xpose.msra.mxu0 0.0
    %1843 = vmatprep.subr.mxu0 0.0
    %1844 = vmatpush1.xpose.msra.mxu0 0.0
    %1845 = vmatprep.subr.mxu0 0.0
    %1846 = vmatpush1.xpose.msra.mxu0 0.0
    %1847 = vmatprep.subr.mxu0 0.0
    %1848 = vmatpush1.xpose.msra.mxu0 0.0
    %1849 = vmatprep.mubr.f32.mxu0 0.0
    %1850 = vmatmul.mubr.f32.gmra.mrb[0].mxu0 %v1774
    %v1851 = vpop.f32.mrb[0].mxu0
    %v1852 = vadd.f32 0.0, %v1851
    %v1853 = vpop.f32.mrb[0].mxu0
    %1854 = vmatprep.mubr.f32.mxu0 0.0
    %1855 = vmatmul.mubr.f32.gmra.mrb[0].mxu0 %v1777
    %v1856 = vpop.f32.mrb[0].mxu0
    %v1857 = vadd.f32 0.0, %v1856
    %v1858 = vpop.f32.mrb[0].mxu0
    %1859 = vdwg.mxu0
    %v1861 = vsel %vm887, %v1474, 0
    %v1864 = vsel %vm887, %v1475, 0
    %v1867 = vsel %vm887, %v1676, 0
    %v1870 = vsel %vm887, %v1677, 0
    %1872 = vmatprep.subr.mxu0 0.0
    %1873 = vmatpush1.xpose.msra.mxu0 %v1867
    %1874 = vmatprep.subr.mxu0 0.0
    %1875 = vmatpush1.xpose.msra.mxu0 %v1870
    %1876 = vmatprep.subr.mxu0 0.0
    %1877 = vmatpush1.xpose.msra.mxu0 0.0
    %1878 = vmatprep.subr.mxu0 0.0
    %1879 = vmatpush1.xpose.msra.mxu0 0.0
    %1880 = vmatprep.subr.mxu0 0.0
    %1881 = vmatpush1.xpose.msra.mxu0 0.0
    %1882 = vmatprep.subr.mxu0 0.0
    %1883 = vmatpush1.xpose.msra.mxu0 0.0
    %1884 = vmatprep.subr.mxu0 0.0
    %1885 = vmatpush1.xpose.msra.mxu0 0.0
    %1886 = vmatprep.subr.mxu0 0.0
    %1887 = vmatpush1.xpose.msra.mxu0 0.0
    %1888 = vmatprep.subr.mxu0 0.0
    %1889 = vmatpush1.xpose.msra.mxu0 0.0
    %1890 = vmatprep.subr.mxu0 0.0
    %1891 = vmatpush1.xpose.msra.mxu0 0.0
    %1892 = vmatprep.subr.mxu0 0.0
    %1893 = vmatpush1.xpose.msra.mxu0 0.0
    %1894 = vmatprep.subr.mxu0 0.0
    %1895 = vmatpush1.xpose.msra.mxu0 0.0
    %1896 = vmatprep.subr.mxu0 0.0
    %1897 = vmatpush1.xpose.msra.mxu0 0.0
    %1898 = vmatprep.subr.mxu0 0.0
    %1899 = vmatpush1.xpose.msra.mxu0 0.0
    %1900 = vmatprep.subr.mxu0 0.0
    %1901 = vmatpush1.xpose.msra.mxu0 0.0
    %1902 = vmatprep.subr.mxu0 0.0
    %1903 = vmatpush1.xpose.msra.mxu0 0.0
    %1904 = vmatprep.subr.mxu0 0.0
    %1905 = vmatpush1.xpose.msra.mxu0 0.0
    %1906 = vmatprep.subr.mxu0 0.0
    %1907 = vmatpush1.xpose.msra.mxu0 0.0
    %1908 = vmatprep.subr.mxu0 0.0
    %1909 = vmatpush1.xpose.msra.mxu0 0.0
    %1910 = vmatprep.subr.mxu0 0.0
    %1911 = vmatpush1.xpose.msra.mxu0 0.0
    %1912 = vmatprep.subr.mxu0 0.0
    %1913 = vmatpush1.xpose.msra.mxu0 0.0
    %1914 = vmatprep.subr.mxu0 0.0
    %1915 = vmatpush1.xpose.msra.mxu0 0.0
    %1916 = vmatprep.subr.mxu0 0.0
    %1917 = vmatpush1.xpose.msra.mxu0 0.0
    %1918 = vmatprep.subr.mxu0 0.0
    %1919 = vmatpush1.xpose.msra.mxu0 0.0
    %1920 = vmatprep.subr.mxu0 0.0
    %1921 = vmatpush1.xpose.msra.mxu0 0.0
    %1922 = vmatprep.subr.mxu0 0.0
    %1923 = vmatpush1.xpose.msra.mxu0 0.0
    %1924 = vmatprep.subr.mxu0 0.0
    %1925 = vmatpush1.xpose.msra.mxu0 0.0
    %1926 = vmatprep.subr.mxu0 0.0
    %1927 = vmatpush1.xpose.msra.mxu0 0.0
    %1928 = vmatprep.subr.mxu0 0.0
    %1929 = vmatpush1.xpose.msra.mxu0 0.0
    %1930 = vmatprep.subr.mxu0 0.0
    %1931 = vmatpush1.xpose.msra.mxu0 0.0
    %1932 = vmatprep.subr.mxu0 0.0
    %1933 = vmatpush1.xpose.msra.mxu0 0.0
    %1934 = vmatprep.subr.mxu0 0.0
    %1935 = vmatpush1.xpose.msra.mxu0 0.0
    %1936 = vmatprep.mubr.f32.mxu0 0.0
    %1937 = vmatmul.mubr.f32.gmra.mrb[0].mxu0 %v1861
    %v1938 = vpop.f32.mrb[0].mxu0
    %v1939 = vadd.f32 0.0, %v1938
    %v1940 = vpop.f32.mrb[0].mxu0
    %1941 = vmatprep.mubr.f32.mxu0 0.0
    %1942 = vmatmul.mubr.f32.gmra.mrb[0].mxu0 %v1864
    %v1943 = vpop.f32.mrb[0].mxu0
    %v1944 = vadd.f32 0.0, %v1943
    %v1945 = vpop.f32.mrb[0].mxu0
    %1946 = vdwg.mxu0
    %v1947 = vmul.f32 %v1852, 0.35355338
    %v1948 = vmul.f32 %v1857, 0.35355338
    %v1949 = vmul.f32 %v1939, 0.35355338
    %v1950 = vmul.f32 %v1944, 0.35355338
    %v1951 = vsel %vm1066, %v1947, -inf
    %1952 = vmax.xlane.f32.xlu0 %v1951
    %v1953 = vpop.xlane.xlu0 %1952
    %v1954 = vsel %vm1066, %v1948, -inf
    %1955 = vmax.xlane.f32.xlu0 %v1954
    %v1956 = vpop.xlane.xlu0 %1955
    %v1957 = vsel %vm1066, %v1949, -inf
    %1958 = vmax.xlane.f32.xlu0 %v1957
    %v1959 = vpop.xlane.xlu0 %1958
    %v1960 = vsel %vm1066, %v1950, -inf
    %1961 = vmax.xlane.f32.xlu0 %v1960
    %v1962 = vpop.xlane.xlu0 %1961
    %v1963 = vsub.f32 %v1947, %v1953
    %v1964 = vsub.f32 %v1948, %v1956
    %v1965 = vsub.f32 %v1949, %v1959
    %v1966 = vsub.f32 %v1950, %v1962
    %v1967 = vmul.f32 %v1963, 1.442695
    %v1968 = vpow.pop %v1967
    %v1969 = vmul.f32 %v1964, 1.442695
    %v1970 = vpow.pop %v1969
    %v1971 = vmul.f32 %v1965, 1.442695
    %v1972 = vpow.pop %v1971
    %v1973 = vmul.f32 %v1966, 1.442695
    %v1974 = vpow.pop %v1973
    %v1975 = vsel %vm1066, %v1968, 0.0
    %1976 = vadd.xlane.f32.xlu0 %v1975
    %v1977 = vpop.xlane.xlu0 %1976
    %v1978 = vsel %vm1066, %v1970, 0.0
    %1979 = vadd.xlane.f32.xlu0 %v1978
    %v1980 = vpop.xlane.xlu0 %1979
    %v1981 = vsel %vm1066, %v1972, 0.0
    %1982 = vadd.xlane.f32.xlu0 %v1981
    %v1983 = vpop.xlane.xlu0 %1982
    %v1984 = vsel %vm1066, %v1974, 0.0
    %1985 = vadd.xlane.f32.xlu0 %v1984
    %v1986 = vpop.xlane.xlu0 %1985
    %v1987 = vrcp.pop %v1977
    %v1988 = vrcp.pop %v1980
    %v1989 = vrcp.pop %v1983
    %v1990 = vrcp.pop %v1986
    %v1991 = vmul.f32 %v1968, %v1987
    %v1992 = vmul.f32 %v1970, %v1988
    %v1993 = vmul.f32 %v1972, %v1989
    %v1994 = vmul.f32 %v1974, %v1990
    %v1996 = vsel %vm1066, %v1991, 0
    %v1999 = vsel %vm1066, %v1992, 0
    %2001 = vmatprep.subr.mxu0 0.0
    %2002 = vmatpush1.msra.mxu0 %v1755
    %2003 = vmatprep.subr.mxu0 0.0
    %2004 = vmatpush1.msra.mxu0 %v1760
    %2005 = vmatprep.subr.mxu0 0.0
    %2006 = vmatpush1.msra.mxu0 0.0
    %2007 = vmatprep.subr.mxu0 0.0
    %2008 = vmatpush1.msra.mxu0 0.0
    %2009 = vmatprep.subr.mxu0 0.0
    %2010 = vmatpush1.msra.mxu0 0.0
    %2011 = vmatprep.subr.mxu0 0.0
    %2012 = vmatpush1.msra.mxu0 0.0
    %2013 = vmatprep.subr.mxu0 0.0
    %2014 = vmatpush1.msra.mxu0 0.0
    %2015 = vmatprep.subr.mxu0 0.0
    %2016 = vmatpush1.msra.mxu0 0.0
    %2017 = vmatprep.subr.mxu0 0.0
    %2018 = vmatpush1.msra.mxu0 0.0
    %2019 = vmatprep.subr.mxu0 0.0
    %2020 = vmatpush1.msra.mxu0 0.0
    %2021 = vmatprep.subr.mxu0 0.0
    %2022 = vmatpush1.msra.mxu0 0.0
    %2023 = vmatprep.subr.mxu0 0.0
    %2024 = vmatpush1.msra.mxu0 0.0
    %2025 = vmatprep.subr.mxu0 0.0
    %2026 = vmatpush1.msra.mxu0 0.0
    %2027 = vmatprep.subr.mxu0 0.0
    %2028 = vmatpush1.msra.mxu0 0.0
    %2029 = vmatprep.subr.mxu0 0.0
    %2030 = vmatpush1.msra.mxu0 0.0
    %2031 = vmatprep.subr.mxu0 0.0
    %2032 = vmatpush1.msra.mxu0 0.0
    %2033 = vmatprep.subr.mxu0 0.0
    %2034 = vmatpush1.msra.mxu0 0.0
    %2035 = vmatprep.subr.mxu0 0.0
    %2036 = vmatpush1.msra.mxu0 0.0
    %2037 = vmatprep.subr.mxu0 0.0
    %2038 = vmatpush1.msra.mxu0 0.0
    %2039 = vmatprep.subr.mxu0 0.0
    %2040 = vmatpush1.msra.mxu0 0.0
    %2041 = vmatprep.subr.mxu0 0.0
    %2042 = vmatpush1.msra.mxu0 0.0
    %2043 = vmatprep.subr.mxu0 0.0
    %2044 = vmatpush1.msra.mxu0 0.0
    %2045 = vmatprep.subr.mxu0 0.0
    %2046 = vmatpush1.msra.mxu0 0.0
    %2047 = vmatprep.subr.mxu0 0.0
    %2048 = vmatpush1.msra.mxu0 0.0
    %2049 = vmatprep.subr.mxu0 0.0
    %2050 = vmatpush1.msra.mxu0 0.0
    %2051 = vmatprep.subr.mxu0 0.0
    %2052 = vmatpush1.msra.mxu0 0.0
    %2053 = vmatprep.subr.mxu0 0.0
    %2054 = vmatpush1.msra.mxu0 0.0
    %2055 = vmatprep.subr.mxu0 0.0
    %2056 = vmatpush1.msra.mxu0 0.0
    %2057 = vmatprep.subr.mxu0 0.0
    %2058 = vmatpush1.msra.mxu0 0.0
    %2059 = vmatprep.subr.mxu0 0.0
    %2060 = vmatpush1.msra.mxu0 0.0
    %2061 = vmatprep.subr.mxu0 0.0
    %2062 = vmatpush1.msra.mxu0 0.0
    %2063 = vmatprep.subr.mxu0 0.0
    %2064 = vmatpush1.msra.mxu0 0.0
    %2065 = vmatprep.mubr.f32.mxu0 0.0
    %2066 = vmatmul.mubr.f32.gmra.mrb[0].mxu0 %v1996
    %v2067 = vpop.f32.mrb[0].mxu0
    %v2068 = vadd.f32 0.0, %v2067
    %v2069 = vpop.f32.mrb[0].mxu0
    %2070 = vmatprep.mubr.f32.mxu0 0.0
    %2071 = vmatmul.mubr.f32.gmra.mrb[0].mxu0 %v1999
    %v2072 = vpop.f32.mrb[0].mxu0
    %v2073 = vadd.f32 0.0, %v2072
    %v2074 = vpop.f32.mrb[0].mxu0
    %2075 = vdwg.mxu0
    %v2077 = vsel %vm1066, %v1993, 0
    %v2080 = vsel %vm1066, %v1994, 0
    %2082 = vmatprep.subr.mxu0 0.0
    %2083 = vmatpush1.msra.mxu0 %v1765
    %2084 = vmatprep.subr.mxu0 0.0
    %2085 = vmatpush1.msra.mxu0 %v1770
    %2086 = vmatprep.subr.mxu0 0.0
    %2087 = vmatpush1.msra.mxu0 0.0
    %2088 = vmatprep.subr.mxu0 0.0
    %2089 = vmatpush1.msra.mxu0 0.0
    %2090 = vmatprep.subr.mxu0 0.0
    %2091 = vmatpush1.msra.mxu0 0.0
    %2092 = vmatprep.subr.mxu0 0.0
    %2093 = vmatpush1.msra.mxu0 0.0
    %2094 = vmatprep.subr.mxu0 0.0
    %2095 = vmatpush1.msra.mxu0 0.0
    %2096 = vmatprep.subr.mxu0 0.0
    %2097 = vmatpush1.msra.mxu0 0.0
    %2098 = vmatprep.subr.mxu0 0.0
    %2099 = vmatpush1.msra.mxu0 0.0
    %2100 = vmatprep.subr.mxu0 0.0
    %2101 = vmatpush1.msra.mxu0 0.0
    %2102 = vmatprep.subr.mxu0 0.0
    %2103 = vmatpush1.msra.mxu0 0.0
    %2104 = vmatprep.subr.mxu0 0.0
    %2105 = vmatpush1.msra.mxu0 0.0
    %2106 = vmatprep.subr.mxu0 0.0
    %2107 = vmatpush1.msra.mxu0 0.0
    %2108 = vmatprep.subr.mxu0 0.0
    %2109 = vmatpush1.msra.mxu0 0.0
    %2110 = vmatprep.subr.mxu0 0.0
    %2111 = vmatpush1.msra.mxu0 0.0
    %2112 = vmatprep.subr.mxu0 0.0
    %2113 = vmatpush1.msra.mxu0 0.0
    %2114 = vmatprep.subr.mxu0 0.0
    %2115 = vmatpush1.msra.mxu0 0.0
    %2116 = vmatprep.subr.mxu0 0.0
    %2117 = vmatpush1.msra.mxu0 0.0
    %2118 = vmatprep.subr.mxu0 0.0
    %2119 = vmatpush1.msra.mxu0 0.0
    %2120 = vmatprep.subr.mxu0 0.0
    %2121 = vmatpush1.msra.mxu0 0.0
    %2122 = vmatprep.subr.mxu0 0.0
    %2123 = vmatpush1.msra.mxu0 0.0
    %2124 = vmatprep.subr.mxu0 0.0
    %2125 = vmatpush1.msra.mxu0 0.0
    %2126 = vmatprep.subr.mxu0 0.0
    %2127 = vmatpush1.msra.mxu0 0.0
    %2128 = vmatprep.subr.mxu0 0.0
    %2129 = vmatpush1.msra.mxu0 0.0
    %2130 = vmatprep.subr.mxu0 0.0
    %2131 = vmatpush1.msra.mxu0 0.0
    %2132 = vmatprep.subr.mxu0 0.0
    %2133 = vmatpush1.msra.mxu0 0.0
    %2134 = vmatprep.subr.mxu0 0.0
    %2135 = vmatpush1.msra.mxu0 0.0
    %2136 = vmatprep.subr.mxu0 0.0
    %2137 = vmatpush1.msra.mxu0 0.0
    %2138 = vmatprep.subr.mxu0 0.0
    %2139 = vmatpush1.msra.mxu0 0.0
    %2140 = vmatprep.subr.mxu0 0.0
    %2141 = vmatpush1.msra.mxu0 0.0
    %2142 = vmatprep.subr.mxu0 0.0
    %2143 = vmatpush1.msra.mxu0 0.0
    %2144 = vmatprep.subr.mxu0 0.0
    %2145 = vmatpush1.msra.mxu0 0.0
    %2146 = vmatprep.mubr.f32.mxu0 0.0
    %2147 = vmatmul.mubr.f32.gmra.mrb[0].mxu0 %v2077
    %v2148 = vpop.f32.mrb[0].mxu0
    %v2149 = vadd.f32 0.0, %v2148
    %v2150 = vpop.f32.mrb[0].mxu0
    %2151 = vmatprep.mubr.f32.mxu0 0.0
    %2152 = vmatmul.mubr.f32.gmra.mrb[0].mxu0 %v2080
    %v2153 = vpop.f32.mrb[0].mxu0
    %v2154 = vadd.f32 0.0, %v2153
    %v2155 = vpop.f32.mrb[0].mxu0
    %2156 = vdwg.mxu0
    %s2157 = scalar_lea.vmem %s7, 8
    %v2158 = vld [vmem:[%s2157] sm:$0xff]
    %v2160 = vsel %vm887, %v2068, 0
    %v2163 = vsel %vm887, %v2073, 0
    %v2166 = vsel %vm887, %v2149, 0
    %v2169 = vsel %vm887, %v2154, 0
    %2171 = vmatprep.subr.mxu0 0.0
    %2172 = vmatpush1.msra.mxu0 %v2158
    %2173 = vmatprep.subr.mxu0 0.0
    %2174 = vmatpush1.msra.mxu0 0.0
    %2175 = vmatprep.subr.mxu0 0.0
    %2176 = vmatpush1.msra.mxu0 0.0
    %2177 = vmatprep.subr.mxu0 0.0
    %2178 = vmatpush1.msra.mxu0 0.0
    %2179 = vmatprep.subr.mxu0 0.0
    %2180 = vmatpush1.msra.mxu0 0.0
    %2181 = vmatprep.subr.mxu0 0.0
    %2182 = vmatpush1.msra.mxu0 0.0
    %2183 = vmatprep.subr.mxu0 0.0
    %2184 = vmatpush1.msra.mxu0 0.0
    %2185 = vmatprep.subr.mxu0 0.0
    %2186 = vmatpush1.msra.mxu0 0.0
    %2187 = vmatprep.subr.mxu0 0.0
    %2188 = vmatpush1.msra.mxu0 0.0
    %2189 = vmatprep.subr.mxu0 0.0
    %2190 = vmatpush1.msra.mxu0 0.0
    %2191 = vmatprep.subr.mxu0 0.0
    %2192 = vmatpush1.msra.mxu0 0.0
    %2193 = vmatprep.subr.mxu0 0.0
    %2194 = vmatpush1.msra.mxu0 0.0
    %2195 = vmatprep.subr.mxu0 0.0
    %2196 = vmatpush1.msra.mxu0 0.0
    %2197 = vmatprep.subr.mxu0 0.0
    %2198 = vmatpush1.msra.mxu0 0.0
    %2199 = vmatprep.subr.mxu0 0.0
    %2200 = vmatpush1.msra.mxu0 0.0
    %2201 = vmatprep.subr.mxu0 0.0
    %2202 = vmatpush1.msra.mxu0 0.0
    %2203 = vmatprep.subr.mxu0 0.0
    %2204 = vmatpush1.msra.mxu0 0.0
    %2205 = vmatprep.subr.mxu0 0.0
    %2206 = vmatpush1.msra.mxu0 0.0
    %2207 = vmatprep.subr.mxu0 0.0
    %2208 = vmatpush1.msra.mxu0 0.0
    %2209 = vmatprep.subr.mxu0 0.0
    %2210 = vmatpush1.msra.mxu0 0.0
    %2211 = vmatprep.subr.mxu0 0.0
    %2212 = vmatpush1.msra.mxu0 0.0
    %2213 = vmatprep.subr.mxu0 0.0
    %2214 = vmatpush1.msra.mxu0 0.0
    %2215 = vmatprep.subr.mxu0 0.0
    %2216 = vmatpush1.msra.mxu0 0.0
    %2217 = vmatprep.subr.mxu0 0.0
    %2218 = vmatpush1.msra.mxu0 0.0
    %2219 = vmatprep.subr.mxu0 0.0
    %2220 = vmatpush1.msra.mxu0 0.0
    %2221 = vmatprep.subr.mxu0 0.0
    %2222 = vmatpush1.msra.mxu0 0.0
    %2223 = vmatprep.subr.mxu0 0.0
    %2224 = vmatpush1.msra.mxu0 0.0
    %2225 = vmatprep.subr.mxu0 0.0
    %2226 = vmatpush1.msra.mxu0 0.0
    %2227 = vmatprep.subr.mxu0 0.0
    %2228 = vmatpush1.msra.mxu0 0.0
    %2229 = vmatprep.subr.mxu0 0.0
    %2230 = vmatpush1.msra.mxu0 0.0
    %2231 = vmatprep.subr.mxu0 0.0
    %2232 = vmatpush1.msra.mxu0 0.0
    %2233 = vmatprep.subr.mxu0 0.0
    %2234 = vmatpush1.msra.mxu0 0.0
    %2235 = vmatprep.mubr.f32.mxu0 0.0
    %2236 = vmatmul.mubr.f32.gmra.mrb[0].mxu0 %v2160
    %v2237 = vpop.f32.mrb[0].mxu0
    %v2238 = vadd.f32 0.0, %v2237
    %v2239 = vpop.f32.mrb[0].mxu0
    %2240 = vmatprep.mubr.f32.mxu0 0.0
    %2241 = vmatmul.mubr.f32.gmra.mrb[0].mxu0 %v2163
    %v2242 = vpop.f32.mrb[0].mxu0
    %v2243 = vadd.f32 0.0, %v2242
    %v2244 = vpop.f32.mrb[0].mxu0
    %2245 = vmatprep.mubr.f32.mxu0 0.0
    %2246 = vmatmul.mubr.f32.gmra.mrb[0].mxu0 %v2166
    %v2247 = vpop.f32.mrb[0].mxu0
    %v2248 = vadd.f32 0.0, %v2247
    %v2249 = vpop.f32.mrb[0].mxu0
    %2250 = vmatprep.mubr.f32.mxu0 0.0
    %2251 = vmatmul.mubr.f32.gmra.mrb[0].mxu0 %v2169
    %v2252 = vpop.f32.mrb[0].mxu0
    %v2253 = vadd.f32 0.0, %v2252
    %v2254 = vpop.f32.mrb[0].mxu0
    %2255 = vdwg.mxu0
    %v2257 = vsel %vm887, %v1184, 0
    %v2260 = vsel %vm887, %v1189, 0
    %v2263 = vsel %vm887, %v1265, 0
    %v2266 = vsel %vm887, %v1270, 0
    %2268 = vmatprep.subr.mxu0 0.0
    %2269 = vmatpush1.msra.mxu0 %v1273
    %2270 = vmatprep.subr.mxu0 0.0
    %2271 = vmatpush1.msra.mxu0 0.0
    %2272 = vmatprep.subr.mxu0 0.0
    %2273 = vmatpush1.msra.mxu0 0.0
    %2274 = vmatprep.subr.mxu0 0.0
    %2275 = vmatpush1.msra.mxu0 0.0
    %2276 = vmatprep.subr.mxu0 0.0
    %2277 = vmatpush1.msra.mxu0 0.0
    %2278 = vmatprep.subr.mxu0 0.0
    %2279 = vmatpush1.msra.mxu0 0.0
    %2280 = vmatprep.subr.mxu0 0.0
    %2281 = vmatpush1.msra.mxu0 0.0
    %2282 = vmatprep.subr.mxu0 0.0
    %2283 = vmatpush1.msra.mxu0 0.0
    %2284 = vmatprep.subr.mxu0 0.0
    %2285 = vmatpush1.msra.mxu0 0.0
    %2286 = vmatprep.subr.mxu0 0.0
    %2287 = vmatpush1.msra.mxu0 0.0
    %2288 = vmatprep.subr.mxu0 0.0
    %2289 = vmatpush1.msra.mxu0 0.0
    %2290 = vmatprep.subr.mxu0 0.0
    %2291 = vmatpush1.msra.mxu0 0.0
    %2292 = vmatprep.subr.mxu0 0.0
    %2293 = vmatpush1.msra.mxu0 0.0
    %2294 = vmatprep.subr.mxu0 0.0
    %2295 = vmatpush1.msra.mxu0 0.0
    %2296 = vmatprep.subr.mxu0 0.0
    %2297 = vmatpush1.msra.mxu0 0.0
    %2298 = vmatprep.subr.mxu0 0.0
    %2299 = vmatpush1.msra.mxu0 0.0
    %2300 = vmatprep.subr.mxu0 0.0
    %2301 = vmatpush1.msra.mxu0 0.0
    %2302 = vmatprep.subr.mxu0 0.0
    %2303 = vmatpush1.msra.mxu0 0.0
    %2304 = vmatprep.subr.mxu0 0.0
    %2305 = vmatpush1.msra.mxu0 0.0
    %2306 = vmatprep.subr.mxu0 0.0
    %2307 = vmatpush1.msra.mxu0 0.0
    %2308 = vmatprep.subr.mxu0 0.0
    %2309 = vmatpush1.msra.mxu0 0.0
    %2310 = vmatprep.subr.mxu0 0.0
    %2311 = vmatpush1.msra.mxu0 0.0
    %2312 = vmatprep.subr.mxu0 0.0
    %2313 = vmatpush1.msra.mxu0 0.0
    %2314 = vmatprep.subr.mxu0 0.0
    %2315 = vmatpush1.msra.mxu0 0.0
    %2316 = vmatprep.subr.mxu0 0.0
    %2317 = vmatpush1.msra.mxu0 0.0
    %2318 = vmatprep.subr.mxu0 0.0
    %2319 = vmatpush1.msra.mxu0 0.0
    %2320 = vmatprep.subr.mxu0 0.0
    %2321 = vmatpush1.msra.mxu0 0.0
    %2322 = vmatprep.subr.mxu0 0.0
    %2323 = vmatpush1.msra.mxu0 0.0
    %2324 = vmatprep.subr.mxu0 0.0
    %2325 = vmatpush1.msra.mxu0 0.0
    %2326 = vmatprep.subr.mxu0 0.0
    %2327 = vmatpush1.msra.mxu0 0.0
    %2328 = vmatprep.subr.mxu0 0.0
    %2329 = vmatpush1.msra.mxu0 0.0
    %2330 = vmatprep.subr.mxu0 0.0
    %2331 = vmatpush1.msra.mxu0 0.0
    %2332 = vmatprep.mubr.f32.mxu0 0.0
    %2333 = vmatmul.mubr.f32.gmra.mrb[0].mxu0 %v2257
    %v2334 = vpop.f32.mrb[0].mxu0
    %v2335 = vadd.f32 %v2238, %v2334
    %v2336 = vpop.f32.mrb[0].mxu0
    %2337 = vmatprep.mubr.f32.mxu0 0.0
    %2338 = vmatmul.mubr.f32.gmra.mrb[0].mxu0 %v2260
    %v2339 = vpop.f32.mrb[0].mxu0
    %v2340 = vadd.f32 %v2243, %v2339
    %v2341 = vpop.f32.mrb[0].mxu0
    %2342 = vmatprep.mubr.f32.mxu0 0.0
    %2343 = vmatmul.mubr.f32.gmra.mrb[0].mxu0 %v2263
    %v2344 = vpop.f32.mrb[0].mxu0
    %v2345 = vadd.f32 %v2248, %v2344
    %v2346 = vpop.f32.mrb[0].mxu0
    %2347 = vmatprep.mubr.f32.mxu0 0.0
    %2348 = vmatmul.mubr.f32.gmra.mrb[0].mxu0 %v2266
    %v2349 = vpop.f32.mrb[0].mxu0
    %v2350 = vadd.f32 %v2253, %v2349
    %v2351 = vpop.f32.mrb[0].mxu0
    %2352 = vdwg.mxu0
    %s2353 = scalar_lea.vmem %s6, 64
    %v2354 = vld [vmem:[%s2353] sm:$0xff]
    %v2355 = vld [vmem:[%s2353 + $0x8] sm:$0xff]
    %v2356 = vld [vmem:[%s2353 + $0x10] sm:$0xff]
    %v2357 = vld [vmem:[%s2353 + $0x18] sm:$0xff]
    %v2358 = vld [vmem:[%s8 + $0x2] sm:$0x1]
    %v2359 = vlaneseq
    %v2360 = vshrl.u32 %v2359, 7
    %v2361 = vsub.s32 0, %v2360
    %v2362 = vrot.slane %v2358, %v2361
    %2363 = vmatprep.subr.mxu0 0.0
    %2364 = vmatpush1.msra.mxu0 %v2354
    %2365 = vmatprep.subr.mxu0 0.0
    %2366 = vmatpush1.msra.mxu0 %v2355
    %2367 = vmatprep.subr.mxu0 0.0
    %2368 = vmatpush1.msra.mxu0 %v2356
    %2369 = vmatprep.subr.mxu0 0.0
    %2370 = vmatpush1.msra.mxu0 %v2357
    %2371 = vmatprep.subr.mxu0 0.0
    %2372 = vmatpush1.msra.mxu0 0.0
    %2373 = vmatprep.subr.mxu0 0.0
    %2374 = vmatpush1.msra.mxu0 0.0
    %2375 = vmatprep.subr.mxu0 0.0
    %2376 = vmatpush1.msra.mxu0 0.0
    %2377 = vmatprep.subr.mxu0 0.0
    %2378 = vmatpush1.msra.mxu0 0.0
    %2379 = vmatprep.subr.mxu0 0.0
    %2380 = vmatpush1.msra.mxu0 0.0
    %2381 = vmatprep.subr.mxu0 0.0
    %2382 = vmatpush1.msra.mxu0 0.0
    %2383 = vmatprep.subr.mxu0 0.0
    %2384 = vmatpush1.msra.mxu0 0.0
    %2385 = vmatprep.subr.mxu0 0.0
    %2386 = vmatpush1.msra.mxu0 0.0
    %2387 = vmatprep.subr.mxu0 0.0
    %2388 = vmatpush1.msra.mxu0 0.0
    %2389 = vmatprep.subr.mxu0 0.0
    %2390 = vmatpush1.msra.mxu0 0.0
    %2391 = vmatprep.subr.mxu0 0.0
    %2392 = vmatpush1.msra.mxu0 0.0
    %2393 = vmatprep.subr.mxu0 0.0
    %2394 = vmatpush1.msra.mxu0 0.0
    %2395 = vmatprep.subr.mxu0 0.0
    %2396 = vmatpush1.msra.mxu0 0.0
    %2397 = vmatprep.subr.mxu0 0.0
    %2398 = vmatpush1.msra.mxu0 0.0
    %2399 = vmatprep.subr.mxu0 0.0
    %2400 = vmatpush1.msra.mxu0 0.0
    %2401 = vmatprep.subr.mxu0 0.0
    %2402 = vmatpush1.msra.mxu0 0.0
    %2403 = vmatprep.subr.mxu0 0.0
    %2404 = vmatpush1.msra.mxu0 0.0
    %2405 = vmatprep.subr.mxu0 0.0
    %2406 = vmatpush1.msra.mxu0 0.0
    %2407 = vmatprep.subr.mxu0 0.0
    %2408 = vmatpush1.msra.mxu0 0.0
    %2409 = vmatprep.subr.mxu0 0.0
    %2410 = vmatpush1.msra.mxu0 0.0
    %2411 = vmatprep.subr.mxu0 0.0
    %2412 = vmatpush1.msra.mxu0 0.0
    %2413 = vmatprep.subr.mxu0 0.0
    %2414 = vmatpush1.msra.mxu0 0.0
    %2415 = vmatprep.subr.mxu0 0.0
    %2416 = vmatpush1.msra.mxu0 0.0
    %2417 = vmatprep.subr.mxu0 0.0
    %2418 = vmatpush1.msra.mxu0 0.0
    %2419 = vmatprep.subr.mxu0 0.0
    %2420 = vmatpush1.msra.mxu0 0.0
    %2421 = vmatprep.subr.mxu0 0.0
    %2422 = vmatpush1.msra.mxu0 0.0
    %2423 = vmatprep.subr.mxu0 0.0
    %2424 = vmatpush1.msra.mxu0 0.0
    %2425 = vmatprep.subr.mxu0 0.0
    %2426 = vmatpush1.msra.mxu0 0.0
    %2427 = vmatprep.mubr.f32.mxu0 0.0
    %2428 = vmatmul.mubr.f32.gmra.mrb[0].mxu0 %v387
    %v2429 = vpop.f32.mrb[0].mxu0
    %v2430 = vadd.f32 %v2362, %v2429
    %v2431 = vpop.f32.mrb[0].mxu0
    %2432 = vmatprep.mubr.f32.mxu0 0.0
    %2433 = vmatmul.mubr.f32.gmra.mrb[0].mxu0 %v390
    %v2434 = vpop.f32.mrb[0].mxu0
    %v2435 = vadd.f32 %v2362, %v2434
    %v2436 = vpop.f32.mrb[0].mxu0
    %2437 = vmatprep.mubr.f32.mxu0 0.0
    %2438 = vmatmul.mubr.f32.gmra.mrb[0].mxu0 %v393
    %v2439 = vpop.f32.mrb[0].mxu0
    %v2440 = vadd.f32 %v2362, %v2439
    %v2441 = vpop.f32.mrb[0].mxu0
    %2442 = vmatprep.mubr.f32.mxu0 0.0
    %2443 = vmatmul.mubr.f32.gmra.mrb[0].mxu0 %v396
    %v2444 = vpop.f32.mrb[0].mxu0
    %v2445 = vadd.f32 %v2362, %v2444
    %v2446 = vpop.f32.mrb[0].mxu0
    %2447 = vdwg.mxu0
    %v2448 = vmul.f32 %v2430, %v368
    %v2449 = vmul.f32 %v2435, %v369
    %v2450 = vmul.f32 %v2440, %v370
    %v2451 = vmul.f32 %v2445, %v371
    %s2452 = scalar_lea.vmem %s6, 192
    %v2453 = vld [vmem:[%s2452] sm:$0xff]
    %v2454 = vld [vmem:[%s2452 + $0x8] sm:$0xff]
    %v2455 = vld [vmem:[%s2452 + $0x10] sm:$0xff]
    %v2456 = vld [vmem:[%s2452 + $0x18] sm:$0xff]
    %v2457 = vld [vmem:[%s8 + $0x6] sm:$0x1]
    %v2458 = vlaneseq
    %v2459 = vshrl.u32 %v2458, 7
    %v2460 = vsub.s32 0, %v2459
    %v2461 = vrot.slane %v2457, %v2460
    %2462 = vmatprep.subr.mxu0 0.0
    %2463 = vmatpush1.msra.mxu0 %v2453
    %2464 = vmatprep.subr.mxu0 0.0
    %2465 = vmatpush1.msra.mxu0 %v2454
    %2466 = vmatprep.subr.mxu0 0.0
    %2467 = vmatpush1.msra.mxu0 %v2455
    %2468 = vmatprep.subr.mxu0 0.0
    %2469 = vmatpush1.msra.mxu0 %v2456
    %2470 = vmatprep.subr.mxu0 0.0
    %2471 = vmatpush1.msra.mxu0 0.0
    %2472 = vmatprep.subr.mxu0 0.0
    %2473 = vmatpush1.msra.mxu0 0.0
    %2474 = vmatprep.subr.mxu0 0.0
    %2475 = vmatpush1.msra.mxu0 0.0
    %2476 = vmatprep.subr.mxu0 0.0
    %2477 = vmatpush1.msra.mxu0 0.0
    %2478 = vmatprep.subr.mxu0 0.0
    %2479 = vmatpush1.msra.mxu0 0.0
    %2480 = vmatprep.subr.mxu0 0.0
    %2481 = vmatpush1.msra.mxu0 0.0
    %2482 = vmatprep.subr.mxu0 0.0
    %2483 = vmatpush1.msra.mxu0 0.0
    %2484 = vmatprep.subr.mxu0 0.0
    %2485 = vmatpush1.msra.mxu0 0.0
    %2486 = vmatprep.subr.mxu0 0.0
    %2487 = vmatpush1.msra.mxu0 0.0
    %2488 = vmatprep.subr.mxu0 0.0
    %2489 = vmatpush1.msra.mxu0 0.0
    %2490 = vmatprep.subr.mxu0 0.0
    %2491 = vmatpush1.msra.mxu0 0.0
    %2492 = vmatprep.subr.mxu0 0.0
    %2493 = vmatpush1.msra.mxu0 0.0
    %2494 = vmatprep.subr.mxu0 0.0
    %2495 = vmatpush1.msra.mxu0 0.0
    %2496 = vmatprep.subr.mxu0 0.0
    %2497 = vmatpush1.msra.mxu0 0.0
    %2498 = vmatprep.subr.mxu0 0.0
    %2499 = vmatpush1.msra.mxu0 0.0
    %2500 = vmatprep.subr.mxu0 0.0
    %2501 = vmatpush1.msra.mxu0 0.0
    %2502 = vmatprep.subr.mxu0 0.0
    %2503 = vmatpush1.msra.mxu0 0.0
    %2504 = vmatprep.subr.mxu0 0.0
    %2505 = vmatpush1.msra.mxu0 0.0
    %2506 = vmatprep.subr.mxu0 0.0
    %2507 = vmatpush1.msra.mxu0 0.0
    %2508 = vmatprep.subr.mxu0 0.0
    %2509 = vmatpush1.msra.mxu0 0.0
    %2510 = vmatprep.subr.mxu0 0.0
    %2511 = vmatpush1.msra.mxu0 0.0
    %2512 = vmatprep.subr.mxu0 0.0
    %2513 = vmatpush1.msra.mxu0 0.0
    %2514 = vmatprep.subr.mxu0 0.0
    %2515 = vmatpush1.msra.mxu0 0.0
    %2516 = vmatprep.subr.mxu0 0.0
    %2517 = vmatpush1.msra.mxu0 0.0
    %2518 = vmatprep.subr.mxu0 0.0
    %2519 = vmatpush1.msra.mxu0 0.0
    %2520 = vmatprep.subr.mxu0 0.0
    %2521 = vmatpush1.msra.mxu0 0.0
    %2522 = vmatprep.subr.mxu0 0.0
    %2523 = vmatpush1.msra.mxu0 0.0
    %2524 = vmatprep.subr.mxu0 0.0
    %2525 = vmatpush1.msra.mxu0 0.0
    %2526 = vmatprep.mubr.f32.mxu0 0.0
    %2527 = vmatmul.mubr.f32.gmra.mrb[0].mxu0 %v387
    %v2528 = vpop.f32.mrb[0].mxu0
    %v2529 = vadd.f32 %v2461, %v2528
    %v2530 = vpop.f32.mrb[0].mxu0
    %2531 = vmatprep.mubr.f32.mxu0 0.0
    %2532 = vmatmul.mubr.f32.gmra.mrb[0].mxu0 %v390
    %v2533 = vpop.f32.mrb[0].mxu0
    %v2534 = vadd.f32 %v2461, %v2533
    %v2535 = vpop.f32.mrb[0].mxu0
    %2536 = vmatprep.mubr.f32.mxu0 0.0
    %2537 = vmatmul.mubr.f32.gmra.mrb[0].mxu0 %v393
    %v2538 = vpop.f32.mrb[0].mxu0
    %v2539 = vadd.f32 %v2461, %v2538
    %v2540 = vpop.f32.mrb[0].mxu0
    %2541 = vmatprep.mubr.f32.mxu0 0.0
    %2542 = vmatmul.mubr.f32.gmra.mrb[0].mxu0 %v396
    %v2543 = vpop.f32.mrb[0].mxu0
    %v2544 = vadd.f32 %v2461, %v2543
    %v2545 = vpop.f32.mrb[0].mxu0
    %2546 = vdwg.mxu0
    %v2547 = vmul.f32 %v2529, %v373
    %v2548 = vmul.f32 %v2534, %v374
    %v2549 = vmul.f32 %v2539, %v375
    %v2550 = vmul.f32 %v2544, %v376
    %v2551 = vadd.f32 %v2448, %v2547
    %v2552 = vadd.f32 %v2449, %v2548
    %v2553 = vadd.f32 %v2450, %v2549
    %v2554 = vadd.f32 %v2451, %v2550
    %s2555 = scalar_lea.vmem %s6, 320
    %v2556 = vld [vmem:[%s2555] sm:$0xff]
    %v2557 = vld [vmem:[%s2555 + $0x8] sm:$0xff]
    %v2558 = vld [vmem:[%s2555 + $0x10] sm:$0xff]
    %v2559 = vld [vmem:[%s2555 + $0x18] sm:$0xff]
    %v2560 = vld [vmem:[%s8 + $0xa] sm:$0x1]
    %v2561 = vlaneseq
    %v2562 = vshrl.u32 %v2561, 7
    %v2563 = vsub.s32 0, %v2562
    %v2564 = vrot.slane %v2560, %v2563
    %2565 = vmatprep.subr.mxu0 0.0
    %2566 = vmatpush1.msra.mxu0 %v2556
    %2567 = vmatprep.subr.mxu0 0.0
    %2568 = vmatpush1.msra.mxu0 %v2557
    %2569 = vmatprep.subr.mxu0 0.0
    %2570 = vmatpush1.msra.mxu0 %v2558
    %2571 = vmatprep.subr.mxu0 0.0
    %2572 = vmatpush1.msra.mxu0 %v2559
    %2573 = vmatprep.subr.mxu0 0.0
    %2574 = vmatpush1.msra.mxu0 0.0
    %2575 = vmatprep.subr.mxu0 0.0
    %2576 = vmatpush1.msra.mxu0 0.0
    %2577 = vmatprep.subr.mxu0 0.0
    %2578 = vmatpush1.msra.mxu0 0.0
    %2579 = vmatprep.subr.mxu0 0.0
    %2580 = vmatpush1.msra.mxu0 0.0
    %2581 = vmatprep.subr.mxu0 0.0
    %2582 = vmatpush1.msra.mxu0 0.0
    %2583 = vmatprep.subr.mxu0 0.0
    %2584 = vmatpush1.msra.mxu0 0.0
    %2585 = vmatprep.subr.mxu0 0.0
    %2586 = vmatpush1.msra.mxu0 0.0
    %2587 = vmatprep.subr.mxu0 0.0
    %2588 = vmatpush1.msra.mxu0 0.0
    %2589 = vmatprep.subr.mxu0 0.0
    %2590 = vmatpush1.msra.mxu0 0.0
    %2591 = vmatprep.subr.mxu0 0.0
    %2592 = vmatpush1.msra.mxu0 0.0
    %2593 = vmatprep.subr.mxu0 0.0
    %2594 = vmatpush1.msra.mxu0 0.0
    %2595 = vmatprep.subr.mxu0 0.0
    %2596 = vmatpush1.msra.mxu0 0.0
    %2597 = vmatprep.subr.mxu0 0.0
    %2598 = vmatpush1.msra.mxu0 0.0
    %2599 = vmatprep.subr.mxu0 0.0
    %2600 = vmatpush1.msra.mxu0 0.0
    %2601 = vmatprep.subr.mxu0 0.0
    %2602 = vmatpush1.msra.mxu0 0.0
    %2603 = vmatprep.subr.mxu0 0.0
    %2604 = vmatpush1.msra.mxu0 0.0
    %2605 = vmatprep.subr.mxu0 0.0
    %2606 = vmatpush1.msra.mxu0 0.0
    %2607 = vmatprep.subr.mxu0 0.0
    %2608 = vmatpush1.msra.mxu0 0.0
    %2609 = vmatprep.subr.mxu0 0.0
    %2610 = vmatpush1.msra.mxu0 0.0
    %2611 = vmatprep.subr.mxu0 0.0
    %2612 = vmatpush1.msra.mxu0 0.0
    %2613 = vmatprep.subr.mxu0 0.0
    %2614 = vmatpush1.msra.mxu0 0.0
    %2615 = vmatprep.subr.mxu0 0.0
    %2616 = vmatpush1.msra.mxu0 0.0
    %2617 = vmatprep.subr.mxu0 0.0
    %2618 = vmatpush1.msra.mxu0 0.0
    %2619 = vmatprep.subr.mxu0 0.0
    %2620 = vmatpush1.msra.mxu0 0.0
    %2621 = vmatprep.subr.mxu0 0.0
    %2622 = vmatpush1.msra.mxu0 0.0
    %2623 = vmatprep.subr.mxu0 0.0
    %2624 = vmatpush1.msra.mxu0 0.0
    %2625 = vmatprep.subr.mxu0 0.0
    %2626 = vmatpush1.msra.mxu0 0.0
    %2627 = vmatprep.subr.mxu0 0.0
    %2628 = vmatpush1.msra.mxu0 0.0
    %2629 = vmatprep.mubr.f32.mxu0 0.0
    %2630 = vmatmul.mubr.f32.gmra.mrb[0].mxu0 %v387
    %v2631 = vpop.f32.mrb[0].mxu0
    %v2632 = vadd.f32 %v2564, %v2631
    %v2633 = vpop.f32.mrb[0].mxu0
    %2634 = vmatprep.mubr.f32.mxu0 0.0
    %2635 = vmatmul.mubr.f32.gmra.mrb[0].mxu0 %v390
    %v2636 = vpop.f32.mrb[0].mxu0
    %v2637 = vadd.f32 %v2564, %v2636
    %v2638 = vpop.f32.mrb[0].mxu0
    %2639 = vmatprep.mubr.f32.mxu0 0.0
    %2640 = vmatmul.mubr.f32.gmra.mrb[0].mxu0 %v393
    %v2641 = vpop.f32.mrb[0].mxu0
    %v2642 = vadd.f32 %v2564, %v2641
    %v2643 = vpop.f32.mrb[0].mxu0
    %2644 = vmatprep.mubr.f32.mxu0 0.0
    %2645 = vmatmul.mubr.f32.gmra.mrb[0].mxu0 %v396
    %v2646 = vpop.f32.mrb[0].mxu0
    %v2647 = vadd.f32 %v2564, %v2646
    %v2648 = vpop.f32.mrb[0].mxu0
    %2649 = vdwg.mxu0
    %v2650 = vmul.f32 %v2632, %v368
    %v2651 = vmul.f32 %v2637, %v369
    %v2652 = vmul.f32 %v2642, %v370
    %v2653 = vmul.f32 %v2647, %v371
    %s2654 = scalar_lea.vmem %s6, 448
    %v2655 = vld [vmem:[%s2654] sm:$0xff]
    %v2656 = vld [vmem:[%s2654 + $0x8] sm:$0xff]
    %v2657 = vld [vmem:[%s2654 + $0x10] sm:$0xff]
    %v2658 = vld [vmem:[%s2654 + $0x18] sm:$0xff]
    %v2659 = vld [vmem:[%s8 + $0xe] sm:$0x1]
    %v2660 = vlaneseq
    %v2661 = vshrl.u32 %v2660, 7
    %v2662 = vsub.s32 0, %v2661
    %v2663 = vrot.slane %v2659, %v2662
    %2664 = vmatprep.subr.mxu0 0.0
    %2665 = vmatpush1.msra.mxu0 %v2655
    %2666 = vmatprep.subr.mxu0 0.0
    %2667 = vmatpush1.msra.mxu0 %v2656
    %2668 = vmatprep.subr.mxu0 0.0
    %2669 = vmatpush1.msra.mxu0 %v2657
    %2670 = vmatprep.subr.mxu0 0.0
    %2671 = vmatpush1.msra.mxu0 %v2658
    %2672 = vmatprep.subr.mxu0 0.0
    %2673 = vmatpush1.msra.mxu0 0.0
    %2674 = vmatprep.subr.mxu0 0.0
    %2675 = vmatpush1.msra.mxu0 0.0
    %2676 = vmatprep.subr.mxu0 0.0
    %2677 = vmatpush1.msra.mxu0 0.0
    %2678 = vmatprep.subr.mxu0 0.0
    %2679 = vmatpush1.msra.mxu0 0.0
    %2680 = vmatprep.subr.mxu0 0.0
    %2681 = vmatpush1.msra.mxu0 0.0
    %2682 = vmatprep.subr.mxu0 0.0
    %2683 = vmatpush1.msra.mxu0 0.0
    %2684 = vmatprep.subr.mxu0 0.0
    %2685 = vmatpush1.msra.mxu0 0.0
    %2686 = vmatprep.subr.mxu0 0.0
    %2687 = vmatpush1.msra.mxu0 0.0
    %2688 = vmatprep.subr.mxu0 0.0
    %2689 = vmatpush1.msra.mxu0 0.0
    %2690 = vmatprep.subr.mxu0 0.0
    %2691 = vmatpush1.msra.mxu0 0.0
    %2692 = vmatprep.subr.mxu0 0.0
    %2693 = vmatpush1.msra.mxu0 0.0
    %2694 = vmatprep.subr.mxu0 0.0
    %2695 = vmatpush1.msra.mxu0 0.0
    %2696 = vmatprep.subr.mxu0 0.0
    %2697 = vmatpush1.msra.mxu0 0.0
    %2698 = vmatprep.subr.mxu0 0.0
    %2699 = vmatpush1.msra.mxu0 0.0
    %2700 = vmatprep.subr.mxu0 0.0
    %2701 = vmatpush1.msra.mxu0 0.0
    %2702 = vmatprep.subr.mxu0 0.0
    %2703 = vmatpush1.msra.mxu0 0.0
    %2704 = vmatprep.subr.mxu0 0.0
    %2705 = vmatpush1.msra.mxu0 0.0
    %2706 = vmatprep.subr.mxu0 0.0
    %2707 = vmatpush1.msra.mxu0 0.0
    %2708 = vmatprep.subr.mxu0 0.0
    %2709 = vmatpush1.msra.mxu0 0.0
    %2710 = vmatprep.subr.mxu0 0.0
    %2711 = vmatpush1.msra.mxu0 0.0
    %2712 = vmatprep.subr.mxu0 0.0
    %2713 = vmatpush1.msra.mxu0 0.0
    %2714 = vmatprep.subr.mxu0 0.0
    %2715 = vmatpush1.msra.mxu0 0.0
    %2716 = vmatprep.subr.mxu0 0.0
    %2717 = vmatpush1.msra.mxu0 0.0
    %2718 = vmatprep.subr.mxu0 0.0
    %2719 = vmatpush1.msra.mxu0 0.0
    %2720 = vmatprep.subr.mxu0 0.0
    %2721 = vmatpush1.msra.mxu0 0.0
    %2722 = vmatprep.subr.mxu0 0.0
    %2723 = vmatpush1.msra.mxu0 0.0
    %2724 = vmatprep.subr.mxu0 0.0
    %2725 = vmatpush1.msra.mxu0 0.0
    %2726 = vmatprep.subr.mxu0 0.0
    %2727 = vmatpush1.msra.mxu0 0.0
    %2728 = vmatprep.mubr.f32.mxu0 0.0
    %2729 = vmatmul.mubr.f32.gmra.mrb[0].mxu0 %v387
    %v2730 = vpop.f32.mrb[0].mxu0
    %v2731 = vadd.f32 %v2663, %v2730
    %v2732 = vpop.f32.mrb[0].mxu0
    %2733 = vmatprep.mubr.f32.mxu0 0.0
    %2734 = vmatmul.mubr.f32.gmra.mrb[0].mxu0 %v390
    %v2735 = vpop.f32.mrb[0].mxu0
    %v2736 = vadd.f32 %v2663, %v2735
    %v2737 = vpop.f32.mrb[0].mxu0
    %2738 = vmatprep.mubr.f32.mxu0 0.0
    %2739 = vmatmul.mubr.f32.gmra.mrb[0].mxu0 %v393
    %v2740 = vpop.f32.mrb[0].mxu0
    %v2741 = vadd.f32 %v2663, %v2740
    %v2742 = vpop.f32.mrb[0].mxu0
    %2743 = vmatprep.mubr.f32.mxu0 0.0
    %2744 = vmatmul.mubr.f32.gmra.mrb[0].mxu0 %v396
    %v2745 = vpop.f32.mrb[0].mxu0
    %v2746 = vadd.f32 %v2663, %v2745
    %v2747 = vpop.f32.mrb[0].mxu0
    %2748 = vdwg.mxu0
    %v2749 = vmul.f32 %v2731, %v373
    %v2750 = vmul.f32 %v2736, %v374
    %v2751 = vmul.f32 %v2741, %v375
    %v2752 = vmul.f32 %v2746, %v376
    %v2753 = vadd.f32 %v2650, %v2749
    %v2754 = vadd.f32 %v2651, %v2750
    %v2755 = vadd.f32 %v2652, %v2751
    %v2756 = vadd.f32 %v2653, %v2752
    %s2757 = scalar_lea.vmem %s6, 576
    %v2758 = vld [vmem:[%s2757] sm:$0xff]
    %v2759 = vld [vmem:[%s2757 + $0x8] sm:$0xff]
    %v2760 = vld [vmem:[%s2757 + $0x10] sm:$0xff]
    %v2761 = vld [vmem:[%s2757 + $0x18] sm:$0xff]
    %v2762 = vld [vmem:[%s8 + $0x12] sm:$0x1]
    %v2763 = vlaneseq
    %v2764 = vshrl.u32 %v2763, 7
    %v2765 = vsub.s32 0, %v2764
    %v2766 = vrot.slane %v2762, %v2765
    %2767 = vmatprep.subr.mxu0 0.0
    %2768 = vmatpush1.msra.mxu0 %v2758
    %2769 = vmatprep.subr.mxu0 0.0
    %2770 = vmatpush1.msra.mxu0 %v2759
    %2771 = vmatprep.subr.mxu0 0.0
    %2772 = vmatpush1.msra.mxu0 %v2760
    %2773 = vmatprep.subr.mxu0 0.0
    %2774 = vmatpush1.msra.mxu0 %v2761
    %2775 = vmatprep.subr.mxu0 0.0
    %2776 = vmatpush1.msra.mxu0 0.0
    %2777 = vmatprep.subr.mxu0 0.0
    %2778 = vmatpush1.msra.mxu0 0.0
    %2779 = vmatprep.subr.mxu0 0.0
    %2780 = vmatpush1.msra.mxu0 0.0
    %2781 = vmatprep.subr.mxu0 0.0
    %2782 = vmatpush1.msra.mxu0 0.0
    %2783 = vmatprep.subr.mxu0 0.0
    %2784 = vmatpush1.msra.mxu0 0.0
    %2785 = vmatprep.subr.mxu0 0.0
    %2786 = vmatpush1.msra.mxu0 0.0
    %2787 = vmatprep.subr.mxu0 0.0
    %2788 = vmatpush1.msra.mxu0 0.0
    %2789 = vmatprep.subr.mxu0 0.0
    %2790 = vmatpush1.msra.mxu0 0.0
    %2791 = vmatprep.subr.mxu0 0.0
    %2792 = vmatpush1.msra.mxu0 0.0
    %2793 = vmatprep.subr.mxu0 0.0
    %2794 = vmatpush1.msra.mxu0 0.0
    %2795 = vmatprep.subr.mxu0 0.0
    %2796 = vmatpush1.msra.mxu0 0.0
    %2797 = vmatprep.subr.mxu0 0.0
    %2798 = vmatpush1.msra.mxu0 0.0
    %2799 = vmatprep.subr.mxu0 0.0
    %2800 = vmatpush1.msra.mxu0 0.0
    %2801 = vmatprep.subr.mxu0 0.0
    %2802 = vmatpush1.msra.mxu0 0.0
    %2803 = vmatprep.subr.mxu0 0.0
    %2804 = vmatpush1.msra.mxu0 0.0
    %2805 = vmatprep.subr.mxu0 0.0
    %2806 = vmatpush1.msra.mxu0 0.0
    %2807 = vmatprep.subr.mxu0 0.0
    %2808 = vmatpush1.msra.mxu0 0.0
    %2809 = vmatprep.subr.mxu0 0.0
    %2810 = vmatpush1.msra.mxu0 0.0
    %2811 = vmatprep.subr.mxu0 0.0
    %2812 = vmatpush1.msra.mxu0 0.0
    %2813 = vmatprep.subr.mxu0 0.0
    %2814 = vmatpush1.msra.mxu0 0.0
    %2815 = vmatprep.subr.mxu0 0.0
    %2816 = vmatpush1.msra.mxu0 0.0
    %2817 = vmatprep.subr.mxu0 0.0
    %2818 = vmatpush1.msra.mxu0 0.0
    %2819 = vmatprep.subr.mxu0 0.0
    %2820 = vmatpush1.msra.mxu0 0.0
    %2821 = vmatprep.subr.mxu0 0.0
    %2822 = vmatpush1.msra.mxu0 0.0
    %2823 = vmatprep.subr.mxu0 0.0
    %2824 = vmatpush1.msra.mxu0 0.0
    %2825 = vmatprep.subr.mxu0 0.0
    %2826 = vmatpush1.msra.mxu0 0.0
    %2827 = vmatprep.subr.mxu0 0.0
    %2828 = vmatpush1.msra.mxu0 0.0
    %2829 = vmatprep.subr.mxu0 0.0
    %2830 = vmatpush1.msra.mxu0 0.0
    %2831 = vmatprep.mubr.f32.mxu0 0.0
    %2832 = vmatmul.mubr.f32.gmra.mrb[0].mxu0 %v387
    %v2833 = vpop.f32.mrb[0].mxu0
    %v2834 = vadd.f32 %v2766, %v2833
    %v2835 = vpop.f32.mrb[0].mxu0
    %2836 = vmatprep.mubr.f32.mxu0 0.0
    %2837 = vmatmul.mubr.f32.gmra.mrb[0].mxu0 %v390
    %v2838 = vpop.f32.mrb[0].mxu0
    %v2839 = vadd.f32 %v2766, %v2838
    %v2840 = vpop.f32.mrb[0].mxu0
    %2841 = vmatprep.mubr.f32.mxu0 0.0
    %2842 = vmatmul.mubr.f32.gmra.mrb[0].mxu0 %v393
    %v2843 = vpop.f32.mrb[0].mxu0
    %v2844 = vadd.f32 %v2766, %v2843
    %v2845 = vpop.f32.mrb[0].mxu0
    %2846 = vmatprep.mubr.f32.mxu0 0.0
    %2847 = vmatmul.mubr.f32.gmra.mrb[0].mxu0 %v396
    %v2848 = vpop.f32.mrb[0].mxu0
    %v2849 = vadd.f32 %v2766, %v2848
    %v2850 = vpop.f32.mrb[0].mxu0
    %2851 = vdwg.mxu0
    %v2853 = vsel %vm887, %v2551, 0
    %v2856 = vsel %vm887, %v2552, 0
    %v2859 = vsel %vm887, %v2753, 0
    %v2862 = vsel %vm887, %v2754, 0
    %2864 = vmatprep.subr.mxu0 0.0
    %2865 = vmatpush1.xpose.msra.mxu0 %v2859
    %2866 = vmatprep.subr.mxu0 0.0
    %2867 = vmatpush1.xpose.msra.mxu0 %v2862
    %2868 = vmatprep.subr.mxu0 0.0
    %2869 = vmatpush1.xpose.msra.mxu0 0.0
    %2870 = vmatprep.subr.mxu0 0.0
    %2871 = vmatpush1.xpose.msra.mxu0 0.0
    %2872 = vmatprep.subr.mxu0 0.0
    %2873 = vmatpush1.xpose.msra.mxu0 0.0
    %2874 = vmatprep.subr.mxu0 0.0
    %2875 = vmatpush1.xpose.msra.mxu0 0.0
    %2876 = vmatprep.subr.mxu0 0.0
    %2877 = vmatpush1.xpose.msra.mxu0 0.0
    %2878 = vmatprep.subr.mxu0 0.0
    %2879 = vmatpush1.xpose.msra.mxu0 0.0
    %2880 = vmatprep.subr.mxu0 0.0
    %2881 = vmatpush1.xpose.msra.mxu0 0.0
    %2882 = vmatprep.subr.mxu0 0.0
    %2883 = vmatpush1.xpose.msra.mxu0 0.0
    %2884 = vmatprep.subr.mxu0 0.0
    %2885 = vmatpush1.xpose.msra.mxu0 0.0
    %2886 = vmatprep.subr.mxu0 0.0
    %2887 = vmatpush1.xpose.msra.mxu0 0.0
    %2888 = vmatprep.subr.mxu0 0.0
    %2889 = vmatpush1.xpose.msra.mxu0 0.0
    %2890 = vmatprep.subr.mxu0 0.0
    %2891 = vmatpush1.xpose.msra.mxu0 0.0
    %2892 = vmatprep.subr.mxu0 0.0
    %2893 = vmatpush1.xpose.msra.mxu0 0.0
    %2894 = vmatprep.subr.mxu0 0.0
    %2895 = vmatpush1.xpose.msra.mxu0 0.0
    %2896 = vmatprep.subr.mxu0 0.0
    %2897 = vmatpush1.xpose.msra.mxu0 0.0
    %2898 = vmatprep.subr.mxu0 0.0
    %2899 = vmatpush1.xpose.msra.mxu0 0.0
    %2900 = vmatprep.subr.mxu0 0.0
    %2901 = vmatpush1.xpose.msra.mxu0 0.0
    %2902 = vmatprep.subr.mxu0 0.0
    %2903 = vmatpush1.xpose.msra.mxu0 0.0
    %2904 = vmatprep.subr.mxu0 0.0
    %2905 = vmatpush1.xpose.msra.mxu0 0.0
    %2906 = vmatprep.subr.mxu0 0.0
    %2907 = vmatpush1.xpose.msra.mxu0 0.0
    %2908 = vmatprep.subr.mxu0 0.0
    %2909 = vmatpush1.xpose.msra.mxu0 0.0
    %2910 = vmatprep.subr.mxu0 0.0
    %2911 = vmatpush1.xpose.msra.mxu0 0.0
    %2912 = vmatprep.subr.mxu0 0.0
    %2913 = vmatpush1.xpose.msra.mxu0 0.0
    %2914 = vmatprep.subr.mxu0 0.0
    %2915 = vmatpush1.xpose.msra.mxu0 0.0
    %2916 = vmatprep.subr.mxu0 0.0
    %2917 = vmatpush1.xpose.msra.mxu0 0.0
    %2918 = vmatprep.subr.mxu0 0.0
    %2919 = vmatpush1.xpose.msra.mxu0 0.0
    %2920 = vmatprep.subr.mxu0 0.0
    %2921 = vmatpush1.xpose.msra.mxu0 0.0
    %2922 = vmatprep.subr.mxu0 0.0
    %2923 = vmatpush1.xpose.msra.mxu0 0.0
    %2924 = vmatprep.subr.mxu0 0.0
    %2925 = vmatpush1.xpose.msra.mxu0 0.0
    %2926 = vmatprep.subr.mxu0 0.0
    %2927 = vmatpush1.xpose.msra.mxu0 0.0
    %2928 = vmatprep.mubr.f32.mxu0 0.0
    %2929 = vmatmul.mubr.f32.gmra.mrb[0].mxu0 %v2853
    %v2930 = vpop.f32.mrb[0].mxu0
    %v2931 = vadd.f32 0.0, %v2930
    %v2932 = vpop.f32.mrb[0].mxu0
    %2933 = vmatprep.mubr.f32.mxu0 0.0
    %2934 = vmatmul.mubr.f32.gmra.mrb[0].mxu0 %v2856
    %v2935 = vpop.f32.mrb[0].mxu0
    %v2936 = vadd.f32 0.0, %v2935
    %v2937 = vpop.f32.mrb[0].mxu0
    %2938 = vdwg.mxu0
    %v2940 = vsel %vm887, %v2553, 0
    %v2943 = vsel %vm887, %v2554, 0
    %v2946 = vsel %vm887, %v2755, 0
    %v2949 = vsel %vm887, %v2756, 0
    %2951 = vmatprep.subr.mxu0 0.0
    %2952 = vmatpush1.xpose.msra.mxu0 %v2946
    %2953 = vmatprep.subr.mxu0 0.0
    %2954 = vmatpush1.xpose.msra.mxu0 %v2949
    %2955 = vmatprep.subr.mxu0 0.0
    %2956 = vmatpush1.xpose.msra.mxu0 0.0
    %2957 = vmatprep.subr.mxu0 0.0
    %2958 = vmatpush1.xpose.msra.mxu0 0.0
    %2959 = vmatprep.subr.mxu0 0.0
    %2960 = vmatpush1.xpose.msra.mxu0 0.0
    %2961 = vmatprep.subr.mxu0 0.0
    %2962 = vmatpush1.xpose.msra.mxu0 0.0
    %2963 = vmatprep.subr.mxu0 0.0
    %2964 = vmatpush1.xpose.msra.mxu0 0.0
    %2965 = vmatprep.subr.mxu0 0.0
    %2966 = vmatpush1.xpose.msra.mxu0 0.0
    %2967 = vmatprep.subr.mxu0 0.0
    %2968 = vmatpush1.xpose.msra.mxu0 0.0
    %2969 = vmatprep.subr.mxu0 0.0
    %2970 = vmatpush1.xpose.msra.mxu0 0.0
    %2971 = vmatprep.subr.mxu0 0.0
    %2972 = vmatpush1.xpose.msra.mxu0 0.0
    %2973 = vmatprep.subr.mxu0 0.0
    %2974 = vmatpush1.xpose.msra.mxu0 0.0
    %2975 = vmatprep.subr.mxu0 0.0
    %2976 = vmatpush1.xpose.msra.mxu0 0.0
    %2977 = vmatprep.subr.mxu0 0.0
    %2978 = vmatpush1.xpose.msra.mxu0 0.0
    %2979 = vmatprep.subr.mxu0 0.0
    %2980 = vmatpush1.xpose.msra.mxu0 0.0
    %2981 = vmatprep.subr.mxu0 0.0
    %2982 = vmatpush1.xpose.msra.mxu0 0.0
    %2983 = vmatprep.subr.mxu0 0.0
    %2984 = vmatpush1.xpose.msra.mxu0 0.0
    %2985 = vmatprep.subr.mxu0 0.0
    %2986 = vmatpush1.xpose.msra.mxu0 0.0
    %2987 = vmatprep.subr.mxu0 0.0
    %2988 = vmatpush1.xpose.msra.mxu0 0.0
    %2989 = vmatprep.subr.mxu0 0.0
    %2990 = vmatpush1.xpose.msra.mxu0 0.0
    %2991 = vmatprep.subr.mxu0 0.0
    %2992 = vmatpush1.xpose.msra.mxu0 0.0
    %2993 = vmatprep.subr.mxu0 0.0
    %2994 = vmatpush1.xpose.msra.mxu0 0.0
    %2995 = vmatprep.subr.mxu0 0.0
    %2996 = vmatpush1.xpose.msra.mxu0 0.0
    %2997 = vmatprep.subr.mxu0 0.0
    %2998 = vmatpush1.xpose.msra.mxu0 0.0
    %2999 = vmatprep.subr.mxu0 0.0
    %3000 = vmatpush1.xpose.msra.mxu0 0.0
    %3001 = vmatprep.subr.mxu0 0.0
    %3002 = vmatpush1.xpose.msra.mxu0 0.0
    %3003 = vmatprep.subr.mxu0 0.0
    %3004 = vmatpush1.xpose.msra.mxu0 0.0
    %3005 = vmatprep.subr.mxu0 0.0
    %3006 = vmatpush1.xpose.msra.mxu0 0.0
    %3007 = vmatprep.subr.mxu0 0.0
    %3008 = vmatpush1.xpose.msra.mxu0 0.0
    %3009 = vmatprep.subr.mxu0 0.0
    %3010 = vmatpush1.xpose.msra.mxu0 0.0
    %3011 = vmatprep.subr.mxu0 0.0
    %3012 = vmatpush1.xpose.msra.mxu0 0.0
    %3013 = vmatprep.subr.mxu0 0.0
    %3014 = vmatpush1.xpose.msra.mxu0 0.0
    %3015 = vmatprep.mubr.f32.mxu0 0.0
    %3016 = vmatmul.mubr.f32.gmra.mrb[0].mxu0 %v2940
    %v3017 = vpop.f32.mrb[0].mxu0
    %v3018 = vadd.f32 0.0, %v3017
    %v3019 = vpop.f32.mrb[0].mxu0
    %3020 = vmatprep.mubr.f32.mxu0 0.0
    %3021 = vmatmul.mubr.f32.gmra.mrb[0].mxu0 %v2943
    %v3022 = vpop.f32.mrb[0].mxu0
    %v3023 = vadd.f32 0.0, %v3022
    %v3024 = vpop.f32.mrb[0].mxu0
    %3025 = vdwg.mxu0
    %v3026 = vmul.f32 %v2931, 0.35355338
    %v3027 = vmul.f32 %v2936, 0.35355338
    %v3028 = vmul.f32 %v3018, 0.35355338
    %v3029 = vmul.f32 %v3023, 0.35355338
    %v3030 = vsel %vm1066, %v3026, -inf
    %3031 = vmax.xlane.f32.xlu0 %v3030
    %v3032 = vpop.xlane.xlu0 %3031
    %v3033 = vsel %vm1066, %v3027, -inf
    %3034 = vmax.xlane.f32.xlu0 %v3033
    %v3035 = vpop.xlane.xlu0 %3034
    %v3036 = vsel %vm1066, %v3028, -inf
    %3037 = vmax.xlane.f32.xlu0 %v3036
    %v3038 = vpop.xlane.xlu0 %3037
    %v3039 = vsel %vm1066, %v3029, -inf
    %3040 = vmax.xlane.f32.xlu0 %v3039
    %v3041 = vpop.xlane.xlu0 %3040
    %v3042 = vsub.f32 %v3026, %v3032
    %v3043 = vsub.f32 %v3027, %v3035
    %v3044 = vsub.f32 %v3028, %v3038
    %v3045 = vsub.f32 %v3029, %v3041
    %v3046 = vmul.f32 %v3042, 1.442695
    %v3047 = vpow.pop %v3046
    %v3048 = vmul.f32 %v3043, 1.442695
    %v3049 = vpow.pop %v3048
    %v3050 = vmul.f32 %v3044, 1.442695
    %v3051 = vpow.pop %v3050
    %v3052 = vmul.f32 %v3045, 1.442695
    %v3053 = vpow.pop %v3052
    %v3054 = vsel %vm1066, %v3047, 0.0
    %3055 = vadd.xlane.f32.xlu0 %v3054
    %v3056 = vpop.xlane.xlu0 %3055
    %v3057 = vsel %vm1066, %v3049, 0.0
    %3058 = vadd.xlane.f32.xlu0 %v3057
    %v3059 = vpop.xlane.xlu0 %3058
    %v3060 = vsel %vm1066, %v3051, 0.0
    %3061 = vadd.xlane.f32.xlu0 %v3060
    %v3062 = vpop.xlane.xlu0 %3061
    %v3063 = vsel %vm1066, %v3053, 0.0
    %3064 = vadd.xlane.f32.xlu0 %v3063
    %v3065 = vpop.xlane.xlu0 %3064
    %v3066 = vrcp.pop %v3056
    %v3067 = vrcp.pop %v3059
    %v3068 = vrcp.pop %v3062
    %v3069 = vrcp.pop %v3065
    %v3070 = vmul.f32 %v3047, %v3066
    %v3071 = vmul.f32 %v3049, %v3067
    %v3072 = vmul.f32 %v3051, %v3068
    %v3073 = vmul.f32 %v3053, %v3069
    %v3075 = vsel %vm1066, %v3070, 0
    %v3078 = vsel %vm1066, %v3071, 0
    %3080 = vmatprep.subr.mxu0 0.0
    %3081 = vmatpush1.msra.mxu0 %v2834
    %3082 = vmatprep.subr.mxu0 0.0
    %3083 = vmatpush1.msra.mxu0 %v2839
    %3084 = vmatprep.subr.mxu0 0.0
    %3085 = vmatpush1.msra.mxu0 0.0
    %3086 = vmatprep.subr.mxu0 0.0
    %3087 = vmatpush1.msra.mxu0 0.0
    %3088 = vmatprep.subr.mxu0 0.0
    %3089 = vmatpush1.msra.mxu0 0.0
    %3090 = vmatprep.subr.mxu0 0.0
    %3091 = vmatpush1.msra.mxu0 0.0
    %3092 = vmatprep.subr.mxu0 0.0
    %3093 = vmatpush1.msra.mxu0 0.0
    %3094 = vmatprep.subr.mxu0 0.0
    %3095 = vmatpush1.msra.mxu0 0.0
    %3096 = vmatprep.subr.mxu0 0.0
    %3097 = vmatpush1.msra.mxu0 0.0
    %3098 = vmatprep.subr.mxu0 0.0
    %3099 = vmatpush1.msra.mxu0 0.0
    %3100 = vmatprep.subr.mxu0 0.0
    %3101 = vmatpush1.msra.mxu0 0.0
    %3102 = vmatprep.subr.mxu0 0.0
    %3103 = vmatpush1.msra.mxu0 0.0
    %3104 = vmatprep.subr.mxu0 0.0
    %3105 = vmatpush1.msra.mxu0 0.0
    %3106 = vmatprep.subr.mxu0 0.0
    %3107 = vmatpush1.msra.mxu0 0.0
    %3108 = vmatprep.subr.mxu0 0.0
    %3109 = vmatpush1.msra.mxu0 0.0
    %3110 = vmatprep.subr.mxu0 0.0
    %3111 = vmatpush1.msra.mxu0 0.0
    %3112 = vmatprep.subr.mxu0 0.0
    %3113 = vmatpush1.msra.mxu0 0.0
    %3114 = vmatprep.subr.mxu0 0.0
    %3115 = vmatpush1.msra.mxu0 0.0
    %3116 = vmatprep.subr.mxu0 0.0
    %3117 = vmatpush1.msra.mxu0 0.0
    %3118 = vmatprep.subr.mxu0 0.0
    %3119 = vmatpush1.msra.mxu0 0.0
    %3120 = vmatprep.subr.mxu0 0.0
    %3121 = vmatpush1.msra.mxu0 0.0
    %3122 = vmatprep.subr.mxu0 0.0
    %3123 = vmatpush1.msra.mxu0 0.0
    %3124 = vmatprep.subr.mxu0 0.0
    %3125 = vmatpush1.msra.mxu0 0.0
    %3126 = vmatprep.subr.mxu0 0.0
    %3127 = vmatpush1.msra.mxu0 0.0
    %3128 = vmatprep.subr.mxu0 0.0
    %3129 = vmatpush1.msra.mxu0 0.0
    %3130 = vmatprep.subr.mxu0 0.0
    %3131 = vmatpush1.msra.mxu0 0.0
    %3132 = vmatprep.subr.mxu0 0.0
    %3133 = vmatpush1.msra.mxu0 0.0
    %3134 = vmatprep.subr.mxu0 0.0
    %3135 = vmatpush1.msra.mxu0 0.0
    %3136 = vmatprep.subr.mxu0 0.0
    %3137 = vmatpush1.msra.mxu0 0.0
    %3138 = vmatprep.subr.mxu0 0.0
    %3139 = vmatpush1.msra.mxu0 0.0
    %3140 = vmatprep.subr.mxu0 0.0
    %3141 = vmatpush1.msra.mxu0 0.0
    %3142 = vmatprep.subr.mxu0 0.0
    %3143 = vmatpush1.msra.mxu0 0.0
    %3144 = vmatprep.mubr.f32.mxu0 0.0
    %3145 = vmatmul.mubr.f32.gmra.mrb[0].mxu0 %v3075
    %v3146 = vpop.f32.mrb[0].mxu0
    %v3147 = vadd.f32 0.0, %v3146
    %v3148 = vpop.f32.mrb[0].mxu0
    %3149 = vmatprep.mubr.f32.mxu0 0.0
    %3150 = vmatmul.mubr.f32.gmra.mrb[0].mxu0 %v3078
    %v3151 = vpop.f32.mrb[0].mxu0
    %v3152 = vadd.f32 0.0, %v3151
    %v3153 = vpop.f32.mrb[0].mxu0
    %3154 = vdwg.mxu0
    %v3156 = vsel %vm1066, %v3072, 0
    %v3159 = vsel %vm1066, %v3073, 0
    %3161 = vmatprep.subr.mxu0 0.0
    %3162 = vmatpush1.msra.mxu0 %v2844
    %3163 = vmatprep.subr.mxu0 0.0
    %3164 = vmatpush1.msra.mxu0 %v2849
    %3165 = vmatprep.subr.mxu0 0.0
    %3166 = vmatpush1.msra.mxu0 0.0
    %3167 = vmatprep.subr.mxu0 0.0
    %3168 = vmatpush1.msra.mxu0 0.0
    %3169 = vmatprep.subr.mxu0 0.0
    %3170 = vmatpush1.msra.mxu0 0.0
    %3171 = vmatprep.subr.mxu0 0.0
    %3172 = vmatpush1.msra.mxu0 0.0
    %3173 = vmatprep.subr.mxu0 0.0
    %3174 = vmatpush1.msra.mxu0 0.0
    %3175 = vmatprep.subr.mxu0 0.0
    %3176 = vmatpush1.msra.mxu0 0.0
    %3177 = vmatprep.subr.mxu0 0.0
    %3178 = vmatpush1.msra.mxu0 0.0
    %3179 = vmatprep.subr.mxu0 0.0
    %3180 = vmatpush1.msra.mxu0 0.0
    %3181 = vmatprep.subr.mxu0 0.0
    %3182 = vmatpush1.msra.mxu0 0.0
    %3183 = vmatprep.subr.mxu0 0.0
    %3184 = vmatpush1.msra.mxu0 0.0
    %3185 = vmatprep.subr.mxu0 0.0
    %3186 = vmatpush1.msra.mxu0 0.0
    %3187 = vmatprep.subr.mxu0 0.0
    %3188 = vmatpush1.msra.mxu0 0.0
    %3189 = vmatprep.subr.mxu0 0.0
    %3190 = vmatpush1.msra.mxu0 0.0
    %3191 = vmatprep.subr.mxu0 0.0
    %3192 = vmatpush1.msra.mxu0 0.0
    %3193 = vmatprep.subr.mxu0 0.0
    %3194 = vmatpush1.msra.mxu0 0.0
    %3195 = vmatprep.subr.mxu0 0.0
    %3196 = vmatpush1.msra.mxu0 0.0
    %3197 = vmatprep.subr.mxu0 0.0
    %3198 = vmatpush1.msra.mxu0 0.0
    %3199 = vmatprep.subr.mxu0 0.0
    %3200 = vmatpush1.msra.mxu0 0.0
    %3201 = vmatprep.subr.mxu0 0.0
    %3202 = vmatpush1.msra.mxu0 0.0
    %3203 = vmatprep.subr.mxu0 0.0
    %3204 = vmatpush1.msra.mxu0 0.0
    %3205 = vmatprep.subr.mxu0 0.0
    %3206 = vmatpush1.msra.mxu0 0.0
    %3207 = vmatprep.subr.mxu0 0.0
    %3208 = vmatpush1.msra.mxu0 0.0
    %3209 = vmatprep.subr.mxu0 0.0
    %3210 = vmatpush1.msra.mxu0 0.0
    %3211 = vmatprep.subr.mxu0 0.0
    %3212 = vmatpush1.msra.mxu0 0.0
    %3213 = vmatprep.subr.mxu0 0.0
    %3214 = vmatpush1.msra.mxu0 0.0
    %3215 = vmatprep.subr.mxu0 0.0
    %3216 = vmatpush1.msra.mxu0 0.0
    %3217 = vmatprep.subr.mxu0 0.0
    %3218 = vmatpush1.msra.mxu0 0.0
    %3219 = vmatprep.subr.mxu0 0.0
    %3220 = vmatpush1.msra.mxu0 0.0
    %3221 = vmatprep.subr.mxu0 0.0
    %3222 = vmatpush1.msra.mxu0 0.0
    %3223 = vmatprep.subr.mxu0 0.0
    %3224 = vmatpush1.msra.mxu0 0.0
    %3225 = vmatprep.mubr.f32.mxu0 0.0
    %3226 = vmatmul.mubr.f32.gmra.mrb[0].mxu0 %v3156
    %v3227 = vpop.f32.mrb[0].mxu0
    %v3228 = vadd.f32 0.0, %v3227
    %v3229 = vpop.f32.mrb[0].mxu0
    %3230 = vmatprep.mubr.f32.mxu0 0.0
    %3231 = vmatmul.mubr.f32.gmra.mrb[0].mxu0 %v3159
    %v3232 = vpop.f32.mrb[0].mxu0
    %v3233 = vadd.f32 0.0, %v3232
    %v3234 = vpop.f32.mrb[0].mxu0
    %3235 = vdwg.mxu0
    %s3236 = scalar_lea.vmem %s7, 16
    %v3237 = vld [vmem:[%s3236] sm:$0xff]
    %v3239 = vsel %vm887, %v3147, 0
    %v3242 = vsel %vm887, %v3152, 0
    %v3245 = vsel %vm887, %v3228, 0
    %v3248 = vsel %vm887, %v3233, 0
    %3250 = vmatprep.subr.mxu0 0.0
    %3251 = vmatpush1.msra.mxu0 %v3237
    %3252 = vmatprep.subr.mxu0 0.0
    %3253 = vmatpush1.msra.mxu0 0.0
    %3254 = vmatprep.subr.mxu0 0.0
    %3255 = vmatpush1.msra.mxu0 0.0
    %3256 = vmatprep.subr.mxu0 0.0
    %3257 = vmatpush1.msra.mxu0 0.0
    %3258 = vmatprep.subr.mxu0 0.0
    %3259 = vmatpush1.msra.mxu0 0.0
    %3260 = vmatprep.subr.mxu0 0.0
    %3261 = vmatpush1.msra.mxu0 0.0
    %3262 = vmatprep.subr.mxu0 0.0
    %3263 = vmatpush1.msra.mxu0 0.0
    %3264 = vmatprep.subr.mxu0 0.0
    %3265 = vmatpush1.msra.mxu0 0.0
    %3266 = vmatprep.subr.mxu0 0.0
    %3267 = vmatpush1.msra.mxu0 0.0
    %3268 = vmatprep.subr.mxu0 0.0
    %3269 = vmatpush1.msra.mxu0 0.0
    %3270 = vmatprep.subr.mxu0 0.0
    %3271 = vmatpush1.msra.mxu0 0.0
    %3272 = vmatprep.subr.mxu0 0.0
    %3273 = vmatpush1.msra.mxu0 0.0
    %3274 = vmatprep.subr.mxu0 0.0
    %3275 = vmatpush1.msra.mxu0 0.0
    %3276 = vmatprep.subr.mxu0 0.0
    %3277 = vmatpush1.msra.mxu0 0.0
    %3278 = vmatprep.subr.mxu0 0.0
    %3279 = vmatpush1.msra.mxu0 0.0
    %3280 = vmatprep.subr.mxu0 0.0
    %3281 = vmatpush1.msra.mxu0 0.0
    %3282 = vmatprep.subr.mxu0 0.0
    %3283 = vmatpush1.msra.mxu0 0.0
    %3284 = vmatprep.subr.mxu0 0.0
    %3285 = vmatpush1.msra.mxu0 0.0
    %3286 = vmatprep.subr.mxu0 0.0
    %3287 = vmatpush1.msra.mxu0 0.0
    %3288 = vmatprep.subr.mxu0 0.0
    %3289 = vmatpush1.msra.mxu0 0.0
    %3290 = vmatprep.subr.mxu0 0.0
    %3291 = vmatpush1.msra.mxu0 0.0
    %3292 = vmatprep.subr.mxu0 0.0
    %3293 = vmatpush1.msra.mxu0 0.0
    %3294 = vmatprep.subr.mxu0 0.0
    %3295 = vmatpush1.msra.mxu0 0.0
    %3296 = vmatprep.subr.mxu0 0.0
    %3297 = vmatpush1.msra.mxu0 0.0
    %3298 = vmatprep.subr.mxu0 0.0
    %3299 = vmatpush1.msra.mxu0 0.0
    %3300 = vmatprep.subr.mxu0 0.0
    %3301 = vmatpush1.msra.mxu0 0.0
    %3302 = vmatprep.subr.mxu0 0.0
    %3303 = vmatpush1.msra.mxu0 0.0
    %3304 = vmatprep.subr.mxu0 0.0
    %3305 = vmatpush1.msra.mxu0 0.0
    %3306 = vmatprep.subr.mxu0 0.0
    %3307 = vmatpush1.msra.mxu0 0.0
    %3308 = vmatprep.subr.mxu0 0.0
    %3309 = vmatpush1.msra.mxu0 0.0
    %3310 = vmatprep.subr.mxu0 0.0
    %3311 = vmatpush1.msra.mxu0 0.0
    %3312 = vmatprep.subr.mxu0 0.0
    %3313 = vmatpush1.msra.mxu0 0.0
    %3314 = vmatprep.mubr.f32.mxu0 0.0
    %3315 = vmatmul.mubr.f32.gmra.mrb[0].mxu0 %v3239
    %v3316 = vpop.f32.mrb[0].mxu0
    %v3317 = vadd.f32 0.0, %v3316
    %v3318 = vpop.f32.mrb[0].mxu0
    %3319 = vmatprep.mubr.f32.mxu0 0.0
    %3320 = vmatmul.mubr.f32.gmra.mrb[0].mxu0 %v3242
    %v3321 = vpop.f32.mrb[0].mxu0
    %v3322 = vadd.f32 0.0, %v3321
    %v3323 = vpop.f32.mrb[0].mxu0
    %3324 = vmatprep.mubr.f32.mxu0 0.0
    %3325 = vmatmul.mubr.f32.gmra.mrb[0].mxu0 %v3245
    %v3326 = vpop.f32.mrb[0].mxu0
    %v3327 = vadd.f32 0.0, %v3326
    %v3328 = vpop.f32.mrb[0].mxu0
    %3329 = vmatprep.mubr.f32.mxu0 0.0
    %3330 = vmatmul.mubr.f32.gmra.mrb[0].mxu0 %v3248
    %v3331 = vpop.f32.mrb[0].mxu0
    %v3332 = vadd.f32 0.0, %v3331
    %v3333 = vpop.f32.mrb[0].mxu0
    %3334 = vdwg.mxu0
    %v3335 = vadd.f32 %v2335, %v3317
    %v3336 = vadd.f32 %v2340, %v3322
    %v3337 = vadd.f32 %v2345, %v3327
    %v3338 = vadd.f32 %v2350, %v3332
    %s3339 = scalar_lea.vmem %s6, 96
    %v3340 = vld [vmem:[%s3339] sm:$0xff]
    %v3341 = vld [vmem:[%s3339 + $0x8] sm:$0xff]
    %v3342 = vld [vmem:[%s3339 + $0x10] sm:$0xff]
    %v3343 = vld [vmem:[%s3339 + $0x18] sm:$0xff]
    %v3344 = vld [vmem:[%s8 + $0x3] sm:$0x1]
    %v3345 = vlaneseq
    %v3346 = vshrl.u32 %v3345, 7
    %v3347 = vsub.s32 0, %v3346
    %v3348 = vrot.slane %v3344, %v3347
    %3349 = vmatprep.subr.mxu0 0.0
    %3350 = vmatpush1.msra.mxu0 %v3340
    %3351 = vmatprep.subr.mxu0 0.0
    %3352 = vmatpush1.msra.mxu0 %v3341
    %3353 = vmatprep.subr.mxu0 0.0
    %3354 = vmatpush1.msra.mxu0 %v3342
    %3355 = vmatprep.subr.mxu0 0.0
    %3356 = vmatpush1.msra.mxu0 %v3343
    %3357 = vmatprep.subr.mxu0 0.0
    %3358 = vmatpush1.msra.mxu0 0.0
    %3359 = vmatprep.subr.mxu0 0.0
    %3360 = vmatpush1.msra.mxu0 0.0
    %3361 = vmatprep.subr.mxu0 0.0
    %3362 = vmatpush1.msra.mxu0 0.0
    %3363 = vmatprep.subr.mxu0 0.0
    %3364 = vmatpush1.msra.mxu0 0.0
    %3365 = vmatprep.subr.mxu0 0.0
    %3366 = vmatpush1.msra.mxu0 0.0
    %3367 = vmatprep.subr.mxu0 0.0
    %3368 = vmatpush1.msra.mxu0 0.0
    %3369 = vmatprep.subr.mxu0 0.0
    %3370 = vmatpush1.msra.mxu0 0.0
    %3371 = vmatprep.subr.mxu0 0.0
    %3372 = vmatpush1.msra.mxu0 0.0
    %3373 = vmatprep.subr.mxu0 0.0
    %3374 = vmatpush1.msra.mxu0 0.0
    %3375 = vmatprep.subr.mxu0 0.0
    %3376 = vmatpush1.msra.mxu0 0.0
    %3377 = vmatprep.subr.mxu0 0.0
    %3378 = vmatpush1.msra.mxu0 0.0
    %3379 = vmatprep.subr.mxu0 0.0
    %3380 = vmatpush1.msra.mxu0 0.0
    %3381 = vmatprep.subr.mxu0 0.0
    %3382 = vmatpush1.msra.mxu0 0.0
    %3383 = vmatprep.subr.mxu0 0.0
    %3384 = vmatpush1.msra.mxu0 0.0
    %3385 = vmatprep.subr.mxu0 0.0
    %3386 = vmatpush1.msra.mxu0 0.0
    %3387 = vmatprep.subr.mxu0 0.0
    %3388 = vmatpush1.msra.mxu0 0.0
    %3389 = vmatprep.subr.mxu0 0.0
    %3390 = vmatpush1.msra.mxu0 0.0
    %3391 = vmatprep.subr.mxu0 0.0
    %3392 = vmatpush1.msra.mxu0 0.0
    %3393 = vmatprep.subr.mxu0 0.0
    %3394 = vmatpush1.msra.mxu0 0.0
    %3395 = vmatprep.subr.mxu0 0.0
    %3396 = vmatpush1.msra.mxu0 0.0
    %3397 = vmatprep.subr.mxu0 0.0
    %3398 = vmatpush1.msra.mxu0 0.0
    %3399 = vmatprep.subr.mxu0 0.0
    %3400 = vmatpush1.msra.mxu0 0.0
    %3401 = vmatprep.subr.mxu0 0.0
    %3402 = vmatpush1.msra.mxu0 0.0
    %3403 = vmatprep.subr.mxu0 0.0
    %3404 = vmatpush1.msra.mxu0 0.0
    %3405 = vmatprep.subr.mxu0 0.0
    %3406 = vmatpush1.msra.mxu0 0.0
    %3407 = vmatprep.subr.mxu0 0.0
    %3408 = vmatpush1.msra.mxu0 0.0
    %3409 = vmatprep.subr.mxu0 0.0
    %3410 = vmatpush1.msra.mxu0 0.0
    %3411 = vmatprep.subr.mxu0 0.0
    %3412 = vmatpush1.msra.mxu0 0.0
    %3413 = vmatprep.mubr.f32.mxu0 0.0
    %3414 = vmatmul.mubr.f32.gmra.mrb[0].mxu0 %v387
    %v3415 = vpop.f32.mrb[0].mxu0
    %v3416 = vadd.f32 %v3348, %v3415
    %v3417 = vpop.f32.mrb[0].mxu0
    %3418 = vmatprep.mubr.f32.mxu0 0.0
    %3419 = vmatmul.mubr.f32.gmra.mrb[0].mxu0 %v390
    %v3420 = vpop.f32.mrb[0].mxu0
    %v3421 = vadd.f32 %v3348, %v3420
    %v3422 = vpop.f32.mrb[0].mxu0
    %3423 = vmatprep.mubr.f32.mxu0 0.0
    %3424 = vmatmul.mubr.f32.gmra.mrb[0].mxu0 %v393
    %v3425 = vpop.f32.mrb[0].mxu0
    %v3426 = vadd.f32 %v3348, %v3425
    %v3427 = vpop.f32.mrb[0].mxu0
    %3428 = vmatprep.mubr.f32.mxu0 0.0
    %3429 = vmatmul.mubr.f32.gmra.mrb[0].mxu0 %v396
    %v3430 = vpop.f32.mrb[0].mxu0
    %v3431 = vadd.f32 %v3348, %v3430
    %v3432 = vpop.f32.mrb[0].mxu0
    %3433 = vdwg.mxu0
    %v3434 = vmul.f32 %v3416, %v368
    %v3435 = vmul.f32 %v3421, %v369
    %v3436 = vmul.f32 %v3426, %v370
    %v3437 = vmul.f32 %v3431, %v371
    %s3438 = scalar_lea.vmem %s6, 224
    %v3439 = vld [vmem:[%s3438] sm:$0xff]
    %v3440 = vld [vmem:[%s3438 + $0x8] sm:$0xff]
    %v3441 = vld [vmem:[%s3438 + $0x10] sm:$0xff]
    %v3442 = vld [vmem:[%s3438 + $0x18] sm:$0xff]
    %v3443 = vld [vmem:[%s8 + $0x7] sm:$0x1]
    %v3444 = vlaneseq
    %v3445 = vshrl.u32 %v3444, 7
    %v3446 = vsub.s32 0, %v3445
    %v3447 = vrot.slane %v3443, %v3446
    %3448 = vmatprep.subr.mxu0 0.0
    %3449 = vmatpush1.msra.mxu0 %v3439
    %3450 = vmatprep.subr.mxu0 0.0
    %3451 = vmatpush1.msra.mxu0 %v3440
    %3452 = vmatprep.subr.mxu0 0.0
    %3453 = vmatpush1.msra.mxu0 %v3441
    %3454 = vmatprep.subr.mxu0 0.0
    %3455 = vmatpush1.msra.mxu0 %v3442
    %3456 = vmatprep.subr.mxu0 0.0
    %3457 = vmatpush1.msra.mxu0 0.0
    %3458 = vmatprep.subr.mxu0 0.0
    %3459 = vmatpush1.msra.mxu0 0.0
    %3460 = vmatprep.subr.mxu0 0.0
    %3461 = vmatpush1.msra.mxu0 0.0
    %3462 = vmatprep.subr.mxu0 0.0
    %3463 = vmatpush1.msra.mxu0 0.0
    %3464 = vmatprep.subr.mxu0 0.0
    %3465 = vmatpush1.msra.mxu0 0.0
    %3466 = vmatprep.subr.mxu0 0.0
    %3467 = vmatpush1.msra.mxu0 0.0
    %3468 = vmatprep.subr.mxu0 0.0
    %3469 = vmatpush1.msra.mxu0 0.0
    %3470 = vmatprep.subr.mxu0 0.0
    %3471 = vmatpush1.msra.mxu0 0.0
    %3472 = vmatprep.subr.mxu0 0.0
    %3473 = vmatpush1.msra.mxu0 0.0
    %3474 = vmatprep.subr.mxu0 0.0
    %3475 = vmatpush1.msra.mxu0 0.0
    %3476 = vmatprep.subr.mxu0 0.0
    %3477 = vmatpush1.msra.mxu0 0.0
    %3478 = vmatprep.subr.mxu0 0.0
    %3479 = vmatpush1.msra.mxu0 0.0
    %3480 = vmatprep.subr.mxu0 0.0
    %3481 = vmatpush1.msra.mxu0 0.0
    %3482 = vmatprep.subr.mxu0 0.0
    %3483 = vmatpush1.msra.mxu0 0.0
    %3484 = vmatprep.subr.mxu0 0.0
    %3485 = vmatpush1.msra.mxu0 0.0
    %3486 = vmatprep.subr.mxu0 0.0
    %3487 = vmatpush1.msra.mxu0 0.0
    %3488 = vmatprep.subr.mxu0 0.0
    %3489 = vmatpush1.msra.mxu0 0.0
    %3490 = vmatprep.subr.mxu0 0.0
    %3491 = vmatpush1.msra.mxu0 0.0
    %3492 = vmatprep.subr.mxu0 0.0
    %3493 = vmatpush1.msra.mxu0 0.0
    %3494 = vmatprep.subr.mxu0 0.0
    %3495 = vmatpush1.msra.mxu0 0.0
    %3496 = vmatprep.subr.mxu0 0.0
    %3497 = vmatpush1.msra.mxu0 0.0
    %3498 = vmatprep.subr.mxu0 0.0
    %3499 = vmatpush1.msra.mxu0 0.0
    %3500 = vmatprep.subr.mxu0 0.0
    %3501 = vmatpush1.msra.mxu0 0.0
    %3502 = vmatprep.subr.mxu0 0.0
    %3503 = vmatpush1.msra.mxu0 0.0
    %3504 = vmatprep.subr.mxu0 0.0
    %3505 = vmatpush1.msra.mxu0 0.0
    %3506 = vmatprep.subr.mxu0 0.0
    %3507 = vmatpush1.msra.mxu0 0.0
    %3508 = vmatprep.subr.mxu0 0.0
    %3509 = vmatpush1.msra.mxu0 0.0
    %3510 = vmatprep.subr.mxu0 0.0
    %3511 = vmatpush1.msra.mxu0 0.0
    %3512 = vmatprep.mubr.f32.mxu0 0.0
    %3513 = vmatmul.mubr.f32.gmra.mrb[0].mxu0 %v387
    %v3514 = vpop.f32.mrb[0].mxu0
    %v3515 = vadd.f32 %v3447, %v3514
    %v3516 = vpop.f32.mrb[0].mxu0
    %3517 = vmatprep.mubr.f32.mxu0 0.0
    %3518 = vmatmul.mubr.f32.gmra.mrb[0].mxu0 %v390
    %v3519 = vpop.f32.mrb[0].mxu0
    %v3520 = vadd.f32 %v3447, %v3519
    %v3521 = vpop.f32.mrb[0].mxu0
    %3522 = vmatprep.mubr.f32.mxu0 0.0
    %3523 = vmatmul.mubr.f32.gmra.mrb[0].mxu0 %v393
    %v3524 = vpop.f32.mrb[0].mxu0
    %v3525 = vadd.f32 %v3447, %v3524
    %v3526 = vpop.f32.mrb[0].mxu0
    %3527 = vmatprep.mubr.f32.mxu0 0.0
    %3528 = vmatmul.mubr.f32.gmra.mrb[0].mxu0 %v396
    %v3529 = vpop.f32.mrb[0].mxu0
    %v3530 = vadd.f32 %v3447, %v3529
    %v3531 = vpop.f32.mrb[0].mxu0
    %3532 = vdwg.mxu0
    %v3533 = vmul.f32 %v3515, %v373
    %v3534 = vmul.f32 %v3520, %v374
    %v3535 = vmul.f32 %v3525, %v375
    %v3536 = vmul.f32 %v3530, %v376
    %v3537 = vadd.f32 %v3434, %v3533
    %v3538 = vadd.f32 %v3435, %v3534
    %v3539 = vadd.f32 %v3436, %v3535
    %v3540 = vadd.f32 %v3437, %v3536
    %s3541 = scalar_lea.vmem %s6, 352
    %v3542 = vld [vmem:[%s3541] sm:$0xff]
    %v3543 = vld [vmem:[%s3541 + $0x8] sm:$0xff]
    %v3544 = vld [vmem:[%s3541 + $0x10] sm:$0xff]
    %v3545 = vld [vmem:[%s3541 + $0x18] sm:$0xff]
    %v3546 = vld [vmem:[%s8 + $0xb] sm:$0x1]
    %v3547 = vlaneseq
    %v3548 = vshrl.u32 %v3547, 7
    %v3549 = vsub.s32 0, %v3548
    %v3550 = vrot.slane %v3546, %v3549
    %3551 = vmatprep.subr.mxu0 0.0
    %3552 = vmatpush1.msra.mxu0 %v3542
    %3553 = vmatprep.subr.mxu0 0.0
    %3554 = vmatpush1.msra.mxu0 %v3543
    %3555 = vmatprep.subr.mxu0 0.0
    %3556 = vmatpush1.msra.mxu0 %v3544
    %3557 = vmatprep.subr.mxu0 0.0
    %3558 = vmatpush1.msra.mxu0 %v3545
    %3559 = vmatprep.subr.mxu0 0.0
    %3560 = vmatpush1.msra.mxu0 0.0
    %3561 = vmatprep.subr.mxu0 0.0
    %3562 = vmatpush1.msra.mxu0 0.0
    %3563 = vmatprep.subr.mxu0 0.0
    %3564 = vmatpush1.msra.mxu0 0.0
    %3565 = vmatprep.subr.mxu0 0.0
    %3566 = vmatpush1.msra.mxu0 0.0
    %3567 = vmatprep.subr.mxu0 0.0
    %3568 = vmatpush1.msra.mxu0 0.0
    %3569 = vmatprep.subr.mxu0 0.0
    %3570 = vmatpush1.msra.mxu0 0.0
    %3571 = vmatprep.subr.mxu0 0.0
    %3572 = vmatpush1.msra.mxu0 0.0
    %3573 = vmatprep.subr.mxu0 0.0
    %3574 = vmatpush1.msra.mxu0 0.0
    %3575 = vmatprep.subr.mxu0 0.0
    %3576 = vmatpush1.msra.mxu0 0.0
    %3577 = vmatprep.subr.mxu0 0.0
    %3578 = vmatpush1.msra.mxu0 0.0
    %3579 = vmatprep.subr.mxu0 0.0
    %3580 = vmatpush1.msra.mxu0 0.0
    %3581 = vmatprep.subr.mxu0 0.0
    %3582 = vmatpush1.msra.mxu0 0.0
    %3583 = vmatprep.subr.mxu0 0.0
    %3584 = vmatpush1.msra.mxu0 0.0
    %3585 = vmatprep.subr.mxu0 0.0
    %3586 = vmatpush1.msra.mxu0 0.0
    %3587 = vmatprep.subr.mxu0 0.0
    %3588 = vmatpush1.msra.mxu0 0.0
    %3589 = vmatprep.subr.mxu0 0.0
    %3590 = vmatpush1.msra.mxu0 0.0
    %3591 = vmatprep.subr.mxu0 0.0
    %3592 = vmatpush1.msra.mxu0 0.0
    %3593 = vmatprep.subr.mxu0 0.0
    %3594 = vmatpush1.msra.mxu0 0.0
    %3595 = vmatprep.subr.mxu0 0.0
    %3596 = vmatpush1.msra.mxu0 0.0
    %3597 = vmatprep.subr.mxu0 0.0
    %3598 = vmatpush1.msra.mxu0 0.0
    %3599 = vmatprep.subr.mxu0 0.0
    %3600 = vmatpush1.msra.mxu0 0.0
    %3601 = vmatprep.subr.mxu0 0.0
    %3602 = vmatpush1.msra.mxu0 0.0
    %3603 = vmatprep.subr.mxu0 0.0
    %3604 = vmatpush1.msra.mxu0 0.0
    %3605 = vmatprep.subr.mxu0 0.0
    %3606 = vmatpush1.msra.mxu0 0.0
    %3607 = vmatprep.subr.mxu0 0.0
    %3608 = vmatpush1.msra.mxu0 0.0
    %3609 = vmatprep.subr.mxu0 0.0
    %3610 = vmatpush1.msra.mxu0 0.0
    %3611 = vmatprep.subr.mxu0 0.0
    %3612 = vmatpush1.msra.mxu0 0.0
    %3613 = vmatprep.subr.mxu0 0.0
    %3614 = vmatpush1.msra.mxu0 0.0
    %3615 = vmatprep.mubr.f32.mxu0 0.0
    %3616 = vmatmul.mubr.f32.gmra.mrb[0].mxu0 %v387
    %v3617 = vpop.f32.mrb[0].mxu0
    %v3618 = vadd.f32 %v3550, %v3617
    %v3619 = vpop.f32.mrb[0].mxu0
    %3620 = vmatprep.mubr.f32.mxu0 0.0
    %3621 = vmatmul.mubr.f32.gmra.mrb[0].mxu0 %v390
    %v3622 = vpop.f32.mrb[0].mxu0
    %v3623 = vadd.f32 %v3550, %v3622
    %v3624 = vpop.f32.mrb[0].mxu0
    %3625 = vmatprep.mubr.f32.mxu0 0.0
    %3626 = vmatmul.mubr.f32.gmra.mrb[0].mxu0 %v393
    %v3627 = vpop.f32.mrb[0].mxu0
    %v3628 = vadd.f32 %v3550, %v3627
    %v3629 = vpop.f32.mrb[0].mxu0
    %3630 = vmatprep.mubr.f32.mxu0 0.0
    %3631 = vmatmul.mubr.f32.gmra.mrb[0].mxu0 %v396
    %v3632 = vpop.f32.mrb[0].mxu0
    %v3633 = vadd.f32 %v3550, %v3632
    %v3634 = vpop.f32.mrb[0].mxu0
    %3635 = vdwg.mxu0
    %v3636 = vmul.f32 %v3618, %v368
    %v3637 = vmul.f32 %v3623, %v369
    %v3638 = vmul.f32 %v3628, %v370
    %v3639 = vmul.f32 %v3633, %v371
    %s3640 = scalar_lea.vmem %s6, 480
    %v3641 = vld [vmem:[%s3640] sm:$0xff]
    %v3642 = vld [vmem:[%s3640 + $0x8] sm:$0xff]
    %v3643 = vld [vmem:[%s3640 + $0x10] sm:$0xff]
    %v3644 = vld [vmem:[%s3640 + $0x18] sm:$0xff]
    %v3645 = vld [vmem:[%s8 + $0xf] sm:$0x1]
    %v3646 = vlaneseq
    %v3647 = vshrl.u32 %v3646, 7
    %v3648 = vsub.s32 0, %v3647
    %v3649 = vrot.slane %v3645, %v3648
    %3650 = vmatprep.subr.mxu0 0.0
    %3651 = vmatpush1.msra.mxu0 %v3641
    %3652 = vmatprep.subr.mxu0 0.0
    %3653 = vmatpush1.msra.mxu0 %v3642
    %3654 = vmatprep.subr.mxu0 0.0
    %3655 = vmatpush1.msra.mxu0 %v3643
    %3656 = vmatprep.subr.mxu0 0.0
    %3657 = vmatpush1.msra.mxu0 %v3644
    %3658 = vmatprep.subr.mxu0 0.0
    %3659 = vmatpush1.msra.mxu0 0.0
    %3660 = vmatprep.subr.mxu0 0.0
    %3661 = vmatpush1.msra.mxu0 0.0
    %3662 = vmatprep.subr.mxu0 0.0
    %3663 = vmatpush1.msra.mxu0 0.0
    %3664 = vmatprep.subr.mxu0 0.0
    %3665 = vmatpush1.msra.mxu0 0.0
    %3666 = vmatprep.subr.mxu0 0.0
    %3667 = vmatpush1.msra.mxu0 0.0
    %3668 = vmatprep.subr.mxu0 0.0
    %3669 = vmatpush1.msra.mxu0 0.0
    %3670 = vmatprep.subr.mxu0 0.0
    %3671 = vmatpush1.msra.mxu0 0.0
    %3672 = vmatprep.subr.mxu0 0.0
    %3673 = vmatpush1.msra.mxu0 0.0
    %3674 = vmatprep.subr.mxu0 0.0
    %3675 = vmatpush1.msra.mxu0 0.0
    %3676 = vmatprep.subr.mxu0 0.0
    %3677 = vmatpush1.msra.mxu0 0.0
    %3678 = vmatprep.subr.mxu0 0.0
    %3679 = vmatpush1.msra.mxu0 0.0
    %3680 = vmatprep.subr.mxu0 0.0
    %3681 = vmatpush1.msra.mxu0 0.0
    %3682 = vmatprep.subr.mxu0 0.0
    %3683 = vmatpush1.msra.mxu0 0.0
    %3684 = vmatprep.subr.mxu0 0.0
    %3685 = vmatpush1.msra.mxu0 0.0
    %3686 = vmatprep.subr.mxu0 0.0
    %3687 = vmatpush1.msra.mxu0 0.0
    %3688 = vmatprep.subr.mxu0 0.0
    %3689 = vmatpush1.msra.mxu0 0.0
    %3690 = vmatprep.subr.mxu0 0.0
    %3691 = vmatpush1.msra.mxu0 0.0
    %3692 = vmatprep.subr.mxu0 0.0
    %3693 = vmatpush1.msra.mxu0 0.0
    %3694 = vmatprep.subr.mxu0 0.0
    %3695 = vmatpush1.msra.mxu0 0.0
    %3696 = vmatprep.subr.mxu0 0.0
    %3697 = vmatpush1.msra.mxu0 0.0
    %3698 = vmatprep.subr.mxu0 0.0
    %3699 = vmatpush1.msra.mxu0 0.0
    %3700 = vmatprep.subr.mxu0 0.0
    %3701 = vmatpush1.msra.mxu0 0.0
    %3702 = vmatprep.subr.mxu0 0.0
    %3703 = vmatpush1.msra.mxu0 0.0
    %3704 = vmatprep.subr.mxu0 0.0
    %3705 = vmatpush1.msra.mxu0 0.0
    %3706 = vmatprep.subr.mxu0 0.0
    %3707 = vmatpush1.msra.mxu0 0.0
    %3708 = vmatprep.subr.mxu0 0.0
    %3709 = vmatpush1.msra.mxu0 0.0
    %3710 = vmatprep.subr.mxu0 0.0
    %3711 = vmatpush1.msra.mxu0 0.0
    %3712 = vmatprep.subr.mxu0 0.0
    %3713 = vmatpush1.msra.mxu0 0.0
    %3714 = vmatprep.mubr.f32.mxu0 0.0
    %3715 = vmatmul.mubr.f32.gmra.mrb[0].mxu0 %v387
    %v3716 = vpop.f32.mrb[0].mxu0
    %v3717 = vadd.f32 %v3649, %v3716
    %v3718 = vpop.f32.mrb[0].mxu0
    %3719 = vmatprep.mubr.f32.mxu0 0.0
    %3720 = vmatmul.mubr.f32.gmra.mrb[0].mxu0 %v390
    %v3721 = vpop.f32.mrb[0].mxu0
    %v3722 = vadd.f32 %v3649, %v3721
    %v3723 = vpop.f32.mrb[0].mxu0
    %3724 = vmatprep.mubr.f32.mxu0 0.0
    %3725 = vmatmul.mubr.f32.gmra.mrb[0].mxu0 %v393
    %v3726 = vpop.f32.mrb[0].mxu0
    %v3727 = vadd.f32 %v3649, %v3726
    %v3728 = vpop.f32.mrb[0].mxu0
    %3729 = vmatprep.mubr.f32.mxu0 0.0
    %3730 = vmatmul.mubr.f32.gmra.mrb[0].mxu0 %v396
    %v3731 = vpop.f32.mrb[0].mxu0
    %v3732 = vadd.f32 %v3649, %v3731
    %v3733 = vpop.f32.mrb[0].mxu0
    %3734 = vdwg.mxu0
    %v3735 = vmul.f32 %v3717, %v373
    %v3736 = vmul.f32 %v3722, %v374
    %v3737 = vmul.f32 %v3727, %v375
    %v3738 = vmul.f32 %v3732, %v376
    %v3739 = vadd.f32 %v3636, %v3735
    %v3740 = vadd.f32 %v3637, %v3736
    %v3741 = vadd.f32 %v3638, %v3737
    %v3742 = vadd.f32 %v3639, %v3738
    %s3743 = scalar_lea.vmem %s6, 608
    %v3744 = vld [vmem:[%s3743] sm:$0xff]
    %v3745 = vld [vmem:[%s3743 + $0x8] sm:$0xff]
    %v3746 = vld [vmem:[%s3743 + $0x10] sm:$0xff]
    %v3747 = vld [vmem:[%s3743 + $0x18] sm:$0xff]
    %v3748 = vld [vmem:[%s8 + $0x13] sm:$0x1]
    %v3749 = vlaneseq
    %v3750 = vshrl.u32 %v3749, 7
    %v3751 = vsub.s32 0, %v3750
    %v3752 = vrot.slane %v3748, %v3751
    %3753 = vmatprep.subr.mxu0 0.0
    %3754 = vmatpush1.msra.mxu0 %v3744
    %3755 = vmatprep.subr.mxu0 0.0
    %3756 = vmatpush1.msra.mxu0 %v3745
    %3757 = vmatprep.subr.mxu0 0.0
    %3758 = vmatpush1.msra.mxu0 %v3746
    %3759 = vmatprep.subr.mxu0 0.0
    %3760 = vmatpush1.msra.mxu0 %v3747
    %3761 = vmatprep.subr.mxu0 0.0
    %3762 = vmatpush1.msra.mxu0 0.0
    %3763 = vmatprep.subr.mxu0 0.0
    %3764 = vmatpush1.msra.mxu0 0.0
    %3765 = vmatprep.subr.mxu0 0.0
    %3766 = vmatpush1.msra.mxu0 0.0
    %3767 = vmatprep.subr.mxu0 0.0
    %3768 = vmatpush1.msra.mxu0 0.0
    %3769 = vmatprep.subr.mxu0 0.0
    %3770 = vmatpush1.msra.mxu0 0.0
    %3771 = vmatprep.subr.mxu0 0.0
    %3772 = vmatpush1.msra.mxu0 0.0
    %3773 = vmatprep.subr.mxu0 0.0
    %3774 = vmatpush1.msra.mxu0 0.0
    %3775 = vmatprep.subr.mxu0 0.0
    %3776 = vmatpush1.msra.mxu0 0.0
    %3777 = vmatprep.subr.mxu0 0.0
    %3778 = vmatpush1.msra.mxu0 0.0
    %3779 = vmatprep.subr.mxu0 0.0
    %3780 = vmatpush1.msra.mxu0 0.0
    %3781 = vmatprep.subr.mxu0 0.0
    %3782 = vmatpush1.msra.mxu0 0.0
    %3783 = vmatprep.subr.mxu0 0.0
    %3784 = vmatpush1.msra.mxu0 0.0
    %3785 = vmatprep.subr.mxu0 0.0
    %3786 = vmatpush1.msra.mxu0 0.0
    %3787 = vmatprep.subr.mxu0 0.0
    %3788 = vmatpush1.msra.mxu0 0.0
    %3789 = vmatprep.subr.mxu0 0.0
    %3790 = vmatpush1.msra.mxu0 0.0
    %3791 = vmatprep.subr.mxu0 0.0
    %3792 = vmatpush1.msra.mxu0 0.0
    %3793 = vmatprep.subr.mxu0 0.0
    %3794 = vmatpush1.msra.mxu0 0.0
    %3795 = vmatprep.subr.mxu0 0.0
    %3796 = vmatpush1.msra.mxu0 0.0
    %3797 = vmatprep.subr.mxu0 0.0
    %3798 = vmatpush1.msra.mxu0 0.0
    %3799 = vmatprep.subr.mxu0 0.0
    %3800 = vmatpush1.msra.mxu0 0.0
    %3801 = vmatprep.subr.mxu0 0.0
    %3802 = vmatpush1.msra.mxu0 0.0
    %3803 = vmatprep.subr.mxu0 0.0
    %3804 = vmatpush1.msra.mxu0 0.0
    %3805 = vmatprep.subr.mxu0 0.0
    %3806 = vmatpush1.msra.mxu0 0.0
    %3807 = vmatprep.subr.mxu0 0.0
    %3808 = vmatpush1.msra.mxu0 0.0
    %3809 = vmatprep.subr.mxu0 0.0
    %3810 = vmatpush1.msra.mxu0 0.0
    %3811 = vmatprep.subr.mxu0 0.0
    %3812 = vmatpush1.msra.mxu0 0.0
    %3813 = vmatprep.subr.mxu0 0.0
    %3814 = vmatpush1.msra.mxu0 0.0
    %3815 = vmatprep.subr.mxu0 0.0
    %3816 = vmatpush1.msra.mxu0 0.0
    %3817 = vmatprep.mubr.f32.mxu0 0.0
    %3818 = vmatmul.mubr.f32.gmra.mrb[0].mxu0 %v387
    %v3819 = vpop.f32.mrb[0].mxu0
    %v3820 = vadd.f32 %v3752, %v3819
    %v3821 = vpop.f32.mrb[0].mxu0
    %3822 = vmatprep.mubr.f32.mxu0 0.0
    %3823 = vmatmul.mubr.f32.gmra.mrb[0].mxu0 %v390
    %v3824 = vpop.f32.mrb[0].mxu0
    %v3825 = vadd.f32 %v3752, %v3824
    %v3826 = vpop.f32.mrb[0].mxu0
    %3827 = vmatprep.mubr.f32.mxu0 0.0
    %3828 = vmatmul.mubr.f32.gmra.mrb[0].mxu0 %v393
    %v3829 = vpop.f32.mrb[0].mxu0
    %v3830 = vadd.f32 %v3752, %v3829
    %v3831 = vpop.f32.mrb[0].mxu0
    %3832 = vmatprep.mubr.f32.mxu0 0.0
    %3833 = vmatmul.mubr.f32.gmra.mrb[0].mxu0 %v396
    %v3834 = vpop.f32.mrb[0].mxu0
    %v3835 = vadd.f32 %v3752, %v3834
    %v3836 = vpop.f32.mrb[0].mxu0
    %3837 = vdwg.mxu0
    %v3839 = vsel %vm887, %v3537, 0
    %v3842 = vsel %vm887, %v3538, 0
    %v3845 = vsel %vm887, %v3739, 0
    %v3848 = vsel %vm887, %v3740, 0
    %3850 = vmatprep.subr.mxu0 0.0
    %3851 = vmatpush1.xpose.msra.mxu0 %v3845
    %3852 = vmatprep.subr.mxu0 0.0
    %3853 = vmatpush1.xpose.msra.mxu0 %v3848
    %3854 = vmatprep.subr.mxu0 0.0
    %3855 = vmatpush1.xpose.msra.mxu0 0.0
    %3856 = vmatprep.subr.mxu0 0.0
    %3857 = vmatpush1.xpose.msra.mxu0 0.0
    %3858 = vmatprep.subr.mxu0 0.0
    %3859 = vmatpush1.xpose.msra.mxu0 0.0
    %3860 = vmatprep.subr.mxu0 0.0
    %3861 = vmatpush1.xpose.msra.mxu0 0.0
    %3862 = vmatprep.subr.mxu0 0.0
    %3863 = vmatpush1.xpose.msra.mxu0 0.0
    %3864 = vmatprep.subr.mxu0 0.0
    %3865 = vmatpush1.xpose.msra.mxu0 0.0
    %3866 = vmatprep.subr.mxu0 0.0
    %3867 = vmatpush1.xpose.msra.mxu0 0.0
    %3868 = vmatprep.subr.mxu0 0.0
    %3869 = vmatpush1.xpose.msra.mxu0 0.0
    %3870 = vmatprep.subr.mxu0 0.0
    %3871 = vmatpush1.xpose.msra.mxu0 0.0
    %3872 = vmatprep.subr.mxu0 0.0
    %3873 = vmatpush1.xpose.msra.mxu0 0.0
    %3874 = vmatprep.subr.mxu0 0.0
    %3875 = vmatpush1.xpose.msra.mxu0 0.0
    %3876 = vmatprep.subr.mxu0 0.0
    %3877 = vmatpush1.xpose.msra.mxu0 0.0
    %3878 = vmatprep.subr.mxu0 0.0
    %3879 = vmatpush1.xpose.msra.mxu0 0.0
    %3880 = vmatprep.subr.mxu0 0.0
    %3881 = vmatpush1.xpose.msra.mxu0 0.0
    %3882 = vmatprep.subr.mxu0 0.0
    %3883 = vmatpush1.xpose.msra.mxu0 0.0
    %3884 = vmatprep.subr.mxu0 0.0
    %3885 = vmatpush1.xpose.msra.mxu0 0.0
    %3886 = vmatprep.subr.mxu0 0.0
    %3887 = vmatpush1.xpose.msra.mxu0 0.0
    %3888 = vmatprep.subr.mxu0 0.0
    %3889 = vmatpush1.xpose.msra.mxu0 0.0
    %3890 = vmatprep.subr.mxu0 0.0
    %3891 = vmatpush1.xpose.msra.mxu0 0.0
    %3892 = vmatprep.subr.mxu0 0.0
    %3893 = vmatpush1.xpose.msra.mxu0 0.0
    %3894 = vmatprep.subr.mxu0 0.0
    %3895 = vmatpush1.xpose.msra.mxu0 0.0
    %3896 = vmatprep.subr.mxu0 0.0
    %3897 = vmatpush1.xpose.msra.mxu0 0.0
    %3898 = vmatprep.subr.mxu0 0.0
    %3899 = vmatpush1.xpose.msra.mxu0 0.0
    %3900 = vmatprep.subr.mxu0 0.0
    %3901 = vmatpush1.xpose.msra.mxu0 0.0
    %3902 = vmatprep.subr.mxu0 0.0
    %3903 = vmatpush1.xpose.msra.mxu0 0.0
    %3904 = vmatprep.subr.mxu0 0.0
    %3905 = vmatpush1.xpose.msra.mxu0 0.0
    %3906 = vmatprep.subr.mxu0 0.0
    %3907 = vmatpush1.xpose.msra.mxu0 0.0
    %3908 = vmatprep.subr.mxu0 0.0
    %3909 = vmatpush1.xpose.msra.mxu0 0.0
    %3910 = vmatprep.subr.mxu0 0.0
    %3911 = vmatpush1.xpose.msra.mxu0 0.0
    %3912 = vmatprep.subr.mxu0 0.0
    %3913 = vmatpush1.xpose.msra.mxu0 0.0
    %3914 = vmatprep.mubr.f32.mxu0 0.0
    %3915 = vmatmul.mubr.f32.gmra.mrb[0].mxu0 %v3839
    %v3916 = vpop.f32.mrb[0].mxu0
    %v3917 = vadd.f32 0.0, %v3916
    %v3918 = vpop.f32.mrb[0].mxu0
    %3919 = vmatprep.mubr.f32.mxu0 0.0
    %3920 = vmatmul.mubr.f32.gmra.mrb[0].mxu0 %v3842
    %v3921 = vpop.f32.mrb[0].mxu0
    %v3922 = vadd.f32 0.0, %v3921
    %v3923 = vpop.f32.mrb[0].mxu0
    %3924 = vdwg.mxu0
    %v3926 = vsel %vm887, %v3539, 0
    %v3929 = vsel %vm887, %v3540, 0
    %v3932 = vsel %vm887, %v3741, 0
    %v3935 = vsel %vm887, %v3742, 0
    %3937 = vmatprep.subr.mxu0 0.0
    %3938 = vmatpush1.xpose.msra.mxu0 %v3932
    %3939 = vmatprep.subr.mxu0 0.0
    %3940 = vmatpush1.xpose.msra.mxu0 %v3935
    %3941 = vmatprep.subr.mxu0 0.0
    %3942 = vmatpush1.xpose.msra.mxu0 0.0
    %3943 = vmatprep.subr.mxu0 0.0
    %3944 = vmatpush1.xpose.msra.mxu0 0.0
    %3945 = vmatprep.subr.mxu0 0.0
    %3946 = vmatpush1.xpose.msra.mxu0 0.0
    %3947 = vmatprep.subr.mxu0 0.0
    %3948 = vmatpush1.xpose.msra.mxu0 0.0
    %3949 = vmatprep.subr.mxu0 0.0
    %3950 = vmatpush1.xpose.msra.mxu0 0.0
    %3951 = vmatprep.subr.mxu0 0.0
    %3952 = vmatpush1.xpose.msra.mxu0 0.0
    %3953 = vmatprep.subr.mxu0 0.0
    %3954 = vmatpush1.xpose.msra.mxu0 0.0
    %3955 = vmatprep.subr.mxu0 0.0
    %3956 = vmatpush1.xpose.msra.mxu0 0.0
    %3957 = vmatprep.subr.mxu0 0.0
    %3958 = vmatpush1.xpose.msra.mxu0 0.0
    %3959 = vmatprep.subr.mxu0 0.0
    %3960 = vmatpush1.xpose.msra.mxu0 0.0
    %3961 = vmatprep.subr.mxu0 0.0
    %3962 = vmatpush1.xpose.msra.mxu0 0.0
    %3963 = vmatprep.subr.mxu0 0.0
    %3964 = vmatpush1.xpose.msra.mxu0 0.0
    %3965 = vmatprep.subr.mxu0 0.0
    %3966 = vmatpush1.xpose.msra.mxu0 0.0
    %3967 = vmatprep.subr.mxu0 0.0
    %3968 = vmatpush1.xpose.msra.mxu0 0.0
    %3969 = vmatprep.subr.mxu0 0.0
    %3970 = vmatpush1.xpose.msra.mxu0 0.0
    %3971 = vmatprep.subr.mxu0 0.0
    %3972 = vmatpush1.xpose.msra.mxu0 0.0
    %3973 = vmatprep.subr.mxu0 0.0
    %3974 = vmatpush1.xpose.msra.mxu0 0.0
    %3975 = vmatprep.subr.mxu0 0.0
    %3976 = vmatpush1.xpose.msra.mxu0 0.0
    %3977 = vmatprep.subr.mxu0 0.0
    %3978 = vmatpush1.xpose.msra.mxu0 0.0
    %3979 = vmatprep.subr.mxu0 0.0
    %3980 = vmatpush1.xpose.msra.mxu0 0.0
    %3981 = vmatprep.subr.mxu0 0.0
    %3982 = vmatpush1.xpose.msra.mxu0 0.0
    %3983 = vmatprep.subr.mxu0 0.0
    %3984 = vmatpush1.xpose.msra.mxu0 0.0
    %3985 = vmatprep.subr.mxu0 0.0
    %3986 = vmatpush1.xpose.msra.mxu0 0.0
    %3987 = vmatprep.subr.mxu0 0.0
    %3988 = vmatpush1.xpose.msra.mxu0 0.0
    %3989 = vmatprep.subr.mxu0 0.0
    %3990 = vmatpush1.xpose.msra.mxu0 0.0
    %3991 = vmatprep.subr.mxu0 0.0
    %3992 = vmatpush1.xpose.msra.mxu0 0.0
    %3993 = vmatprep.subr.mxu0 0.0
    %3994 = vmatpush1.xpose.msra.mxu0 0.0
    %3995 = vmatprep.subr.mxu0 0.0
    %3996 = vmatpush1.xpose.msra.mxu0 0.0
    %3997 = vmatprep.subr.mxu0 0.0
    %3998 = vmatpush1.xpose.msra.mxu0 0.0
    %3999 = vmatprep.subr.mxu0 0.0
    %4000 = vmatpush1.xpose.msra.mxu0 0.0
    %4001 = vmatprep.mubr.f32.mxu0 0.0
    %4002 = vmatmul.mubr.f32.gmra.mrb[0].mxu0 %v3926
    %v4003 = vpop.f32.mrb[0].mxu0
    %v4004 = vadd.f32 0.0, %v4003
    %v4005 = vpop.f32.mrb[0].mxu0
    %4006 = vmatprep.mubr.f32.mxu0 0.0
    %4007 = vmatmul.mubr.f32.gmra.mrb[0].mxu0 %v3929
    %v4008 = vpop.f32.mrb[0].mxu0
    %v4009 = vadd.f32 0.0, %v4008
    %v4010 = vpop.f32.mrb[0].mxu0
    %4011 = vdwg.mxu0
    %v4012 = vmul.f32 %v3917, 0.35355338
    %v4013 = vmul.f32 %v3922, 0.35355338
    %v4014 = vmul.f32 %v4004, 0.35355338
    %v4015 = vmul.f32 %v4009, 0.35355338
    %v4016 = vsel %vm1066, %v4012, -inf
    %4017 = vmax.xlane.f32.xlu0 %v4016
    %v4018 = vpop.xlane.xlu0 %4017
    %v4019 = vsel %vm1066, %v4013, -inf
    %4020 = vmax.xlane.f32.xlu0 %v4019
    %v4021 = vpop.xlane.xlu0 %4020
    %v4022 = vsel %vm1066, %v4014, -inf
    %4023 = vmax.xlane.f32.xlu0 %v4022
    %v4024 = vpop.xlane.xlu0 %4023
    %v4025 = vsel %vm1066, %v4015, -inf
    %4026 = vmax.xlane.f32.xlu0 %v4025
    %v4027 = vpop.xlane.xlu0 %4026
    %v4028 = vsub.f32 %v4012, %v4018
    %v4029 = vsub.f32 %v4013, %v4021
    %v4030 = vsub.f32 %v4014, %v4024
    %v4031 = vsub.f32 %v4015, %v4027
    %v4032 = vmul.f32 %v4028, 1.442695
    %v4033 = vpow.pop %v4032
    %v4034 = vmul.f32 %v4029, 1.442695
    %v4035 = vpow.pop %v4034
    %v4036 = vmul.f32 %v4030, 1.442695
    %v4037 = vpow.pop %v4036
    %v4038 = vmul.f32 %v4031, 1.442695
    %v4039 = vpow.pop %v4038
    %v4040 = vsel %vm1066, %v4033, 0.0
    %4041 = vadd.xlane.f32.xlu0 %v4040
    %v4042 = vpop.xlane.xlu0 %4041
    %v4043 = vsel %vm1066, %v4035, 0.0
    %4044 = vadd.xlane.f32.xlu0 %v4043
    %v4045 = vpop.xlane.xlu0 %4044
    %v4046 = vsel %vm1066, %v4037, 0.0
    %4047 = vadd.xlane.f32.xlu0 %v4046
    %v4048 = vpop.xlane.xlu0 %4047
    %v4049 = vsel %vm1066, %v4039, 0.0
    %4050 = vadd.xlane.f32.xlu0 %v4049
    %v4051 = vpop.xlane.xlu0 %4050
    %v4052 = vrcp.pop %v4042
    %v4053 = vrcp.pop %v4045
    %v4054 = vrcp.pop %v4048
    %v4055 = vrcp.pop %v4051
    %v4056 = vmul.f32 %v4033, %v4052
    %v4057 = vmul.f32 %v4035, %v4053
    %v4058 = vmul.f32 %v4037, %v4054
    %v4059 = vmul.f32 %v4039, %v4055
    %v4061 = vsel %vm1066, %v4056, 0
    %v4064 = vsel %vm1066, %v4057, 0
    %4066 = vmatprep.subr.mxu0 0.0
    %4067 = vmatpush1.msra.mxu0 %v3820
    %4068 = vmatprep.subr.mxu0 0.0
    %4069 = vmatpush1.msra.mxu0 %v3825
    %4070 = vmatprep.subr.mxu0 0.0
    %4071 = vmatpush1.msra.mxu0 0.0
    %4072 = vmatprep.subr.mxu0 0.0
    %4073 = vmatpush1.msra.mxu0 0.0
    %4074 = vmatprep.subr.mxu0 0.0
    %4075 = vmatpush1.msra.mxu0 0.0
    %4076 = vmatprep.subr.mxu0 0.0
    %4077 = vmatpush1.msra.mxu0 0.0
    %4078 = vmatprep.subr.mxu0 0.0
    %4079 = vmatpush1.msra.mxu0 0.0
    %4080 = vmatprep.subr.mxu0 0.0
    %4081 = vmatpush1.msra.mxu0 0.0
    %4082 = vmatprep.subr.mxu0 0.0
    %4083 = vmatpush1.msra.mxu0 0.0
    %4084 = vmatprep.subr.mxu0 0.0
    %4085 = vmatpush1.msra.mxu0 0.0
    %4086 = vmatprep.subr.mxu0 0.0
    %4087 = vmatpush1.msra.mxu0 0.0
    %4088 = vmatprep.subr.mxu0 0.0
    %4089 = vmatpush1.msra.mxu0 0.0
    %4090 = vmatprep.subr.mxu0 0.0
    %4091 = vmatpush1.msra.mxu0 0.0
    %4092 = vmatprep.subr.mxu0 0.0
    %4093 = vmatpush1.msra.mxu0 0.0
    %4094 = vmatprep.subr.mxu0 0.0
    %4095 = vmatpush1.msra.mxu0 0.0
    %4096 = vmatprep.subr.mxu0 0.0
    %4097 = vmatpush1.msra.mxu0 0.0
    %4098 = vmatprep.subr.mxu0 0.0
    %4099 = vmatpush1.msra.mxu0 0.0
    %4100 = vmatprep.subr.mxu0 0.0
    %4101 = vmatpush1.msra.mxu0 0.0
    %4102 = vmatprep.subr.mxu0 0.0
    %4103 = vmatpush1.msra.mxu0 0.0
    %4104 = vmatprep.subr.mxu0 0.0
    %4105 = vmatpush1.msra.mxu0 0.0
    %4106 = vmatprep.subr.mxu0 0.0
    %4107 = vmatpush1.msra.mxu0 0.0
    %4108 = vmatprep.subr.mxu0 0.0
    %4109 = vmatpush1.msra.mxu0 0.0
    %4110 = vmatprep.subr.mxu0 0.0
    %4111 = vmatpush1.msra.mxu0 0.0
    %4112 = vmatprep.subr.mxu0 0.0
    %4113 = vmatpush1.msra.mxu0 0.0
    %4114 = vmatprep.subr.mxu0 0.0
    %4115 = vmatpush1.msra.mxu0 0.0
    %4116 = vmatprep.subr.mxu0 0.0
    %4117 = vmatpush1.msra.mxu0 0.0
    %4118 = vmatprep.subr.mxu0 0.0
    %4119 = vmatpush1.msra.mxu0 0.0
    %4120 = vmatprep.subr.mxu0 0.0
    %4121 = vmatpush1.msra.mxu0 0.0
    %4122 = vmatprep.subr.mxu0 0.0
    %4123 = vmatpush1.msra.mxu0 0.0
    %4124 = vmatprep.subr.mxu0 0.0
    %4125 = vmatpush1.msra.mxu0 0.0
    %4126 = vmatprep.subr.mxu0 0.0
    %4127 = vmatpush1.msra.mxu0 0.0
    %4128 = vmatprep.subr.mxu0 0.0
    %4129 = vmatpush1.msra.mxu0 0.0
    %4130 = vmatprep.mubr.f32.mxu0 0.0
    %4131 = vmatmul.mubr.f32.gmra.mrb[0].mxu0 %v4061
    %v4132 = vpop.f32.mrb[0].mxu0
    %v4133 = vadd.f32 0.0, %v4132
    %v4134 = vpop.f32.mrb[0].mxu0
    %4135 = vmatprep.mubr.f32.mxu0 0.0
    %4136 = vmatmul.mubr.f32.gmra.mrb[0].mxu0 %v4064
    %v4137 = vpop.f32.mrb[0].mxu0
    %v4138 = vadd.f32 0.0, %v4137
    %v4139 = vpop.f32.mrb[0].mxu0
    %4140 = vdwg.mxu0
    %v4142 = vsel %vm1066, %v4058, 0
    %v4145 = vsel %vm1066, %v4059, 0
    %4147 = vmatprep.subr.mxu0 0.0
    %4148 = vmatpush1.msra.mxu0 %v3830
    %4149 = vmatprep.subr.mxu0 0.0
    %4150 = vmatpush1.msra.mxu0 %v3835
    %4151 = vmatprep.subr.mxu0 0.0
    %4152 = vmatpush1.msra.mxu0 0.0
    %4153 = vmatprep.subr.mxu0 0.0
    %4154 = vmatpush1.msra.mxu0 0.0
    %4155 = vmatprep.subr.mxu0 0.0
    %4156 = vmatpush1.msra.mxu0 0.0
    %4157 = vmatprep.subr.mxu0 0.0
    %4158 = vmatpush1.msra.mxu0 0.0
    %4159 = vmatprep.subr.mxu0 0.0
    %4160 = vmatpush1.msra.mxu0 0.0
    %4161 = vmatprep.subr.mxu0 0.0
    %4162 = vmatpush1.msra.mxu0 0.0
    %4163 = vmatprep.subr.mxu0 0.0
    %4164 = vmatpush1.msra.mxu0 0.0
    %4165 = vmatprep.subr.mxu0 0.0
    %4166 = vmatpush1.msra.mxu0 0.0
    %4167 = vmatprep.subr.mxu0 0.0
    %4168 = vmatpush1.msra.mxu0 0.0
    %4169 = vmatprep.subr.mxu0 0.0
    %4170 = vmatpush1.msra.mxu0 0.0
    %4171 = vmatprep.subr.mxu0 0.0
    %4172 = vmatpush1.msra.mxu0 0.0
    %4173 = vmatprep.subr.mxu0 0.0
    %4174 = vmatpush1.msra.mxu0 0.0
    %4175 = vmatprep.subr.mxu0 0.0
    %4176 = vmatpush1.msra.mxu0 0.0
    %4177 = vmatprep.subr.mxu0 0.0
    %4178 = vmatpush1.msra.mxu0 0.0
    %4179 = vmatprep.subr.mxu0 0.0
    %4180 = vmatpush1.msra.mxu0 0.0
    %4181 = vmatprep.subr.mxu0 0.0
    %4182 = vmatpush1.msra.mxu0 0.0
    %4183 = vmatprep.subr.mxu0 0.0
    %4184 = vmatpush1.msra.mxu0 0.0
    %4185 = vmatprep.subr.mxu0 0.0
    %4186 = vmatpush1.msra.mxu0 0.0
    %4187 = vmatprep.subr.mxu0 0.0
    %4188 = vmatpush1.msra.mxu0 0.0
    %4189 = vmatprep.subr.mxu0 0.0
    %4190 = vmatpush1.msra.mxu0 0.0
    %4191 = vmatprep.subr.mxu0 0.0
    %4192 = vmatpush1.msra.mxu0 0.0
    %4193 = vmatprep.subr.mxu0 0.0
    %4194 = vmatpush1.msra.mxu0 0.0
    %4195 = vmatprep.subr.mxu0 0.0
    %4196 = vmatpush1.msra.mxu0 0.0
    %4197 = vmatprep.subr.mxu0 0.0
    %4198 = vmatpush1.msra.mxu0 0.0
    %4199 = vmatprep.subr.mxu0 0.0
    %4200 = vmatpush1.msra.mxu0 0.0
    %4201 = vmatprep.subr.mxu0 0.0
    %4202 = vmatpush1.msra.mxu0 0.0
    %4203 = vmatprep.subr.mxu0 0.0
    %4204 = vmatpush1.msra.mxu0 0.0
    %4205 = vmatprep.subr.mxu0 0.0
    %4206 = vmatpush1.msra.mxu0 0.0
    %4207 = vmatprep.subr.mxu0 0.0
    %4208 = vmatpush1.msra.mxu0 0.0
    %4209 = vmatprep.subr.mxu0 0.0
    %4210 = vmatpush1.msra.mxu0 0.0
    %4211 = vmatprep.mubr.f32.mxu0 0.0
    %4212 = vmatmul.mubr.f32.gmra.mrb[0].mxu0 %v4142
    %v4213 = vpop.f32.mrb[0].mxu0
    %v4214 = vadd.f32 0.0, %v4213
    %v4215 = vpop.f32.mrb[0].mxu0
    %4216 = vmatprep.mubr.f32.mxu0 0.0
    %4217 = vmatmul.mubr.f32.gmra.mrb[0].mxu0 %v4145
    %v4218 = vpop.f32.mrb[0].mxu0
    %v4219 = vadd.f32 0.0, %v4218
    %v4220 = vpop.f32.mrb[0].mxu0
    %4221 = vdwg.mxu0
    %s4222 = scalar_lea.vmem %s7, 24
    %v4223 = vld [vmem:[%s4222] sm:$0xff]
    %v4225 = vsel %vm887, %v4133, 0
    %v4228 = vsel %vm887, %v4138, 0
    %v4231 = vsel %vm887, %v4214, 0
    %v4234 = vsel %vm887, %v4219, 0
    %4236 = vmatprep.subr.mxu0 0.0
    %4237 = vmatpush1.msra.mxu0 %v4223
    %4238 = vmatprep.subr.mxu0 0.0
    %4239 = vmatpush1.msra.mxu0 0.0
    %4240 = vmatprep.subr.mxu0 0.0
    %4241 = vmatpush1.msra.mxu0 0.0
    %4242 = vmatprep.subr.mxu0 0.0
    %4243 = vmatpush1.msra.mxu0 0.0
    %4244 = vmatprep.subr.mxu0 0.0
    %4245 = vmatpush1.msra.mxu0 0.0
    %4246 = vmatprep.subr.mxu0 0.0
    %4247 = vmatpush1.msra.mxu0 0.0
    %4248 = vmatprep.subr.mxu0 0.0
    %4249 = vmatpush1.msra.mxu0 0.0
    %4250 = vmatprep.subr.mxu0 0.0
    %4251 = vmatpush1.msra.mxu0 0.0
    %4252 = vmatprep.subr.mxu0 0.0
    %4253 = vmatpush1.msra.mxu0 0.0
    %4254 = vmatprep.subr.mxu0 0.0
    %4255 = vmatpush1.msra.mxu0 0.0
    %4256 = vmatprep.subr.mxu0 0.0
    %4257 = vmatpush1.msra.mxu0 0.0
    %4258 = vmatprep.subr.mxu0 0.0
    %4259 = vmatpush1.msra.mxu0 0.0
    %4260 = vmatprep.subr.mxu0 0.0
    %4261 = vmatpush1.msra.mxu0 0.0
    %4262 = vmatprep.subr.mxu0 0.0
    %4263 = vmatpush1.msra.mxu0 0.0
    %4264 = vmatprep.subr.mxu0 0.0
    %4265 = vmatpush1.msra.mxu0 0.0
    %4266 = vmatprep.subr.mxu0 0.0
    %4267 = vmatpush1.msra.mxu0 0.0
    %4268 = vmatprep.subr.mxu0 0.0
    %4269 = vmatpush1.msra.mxu0 0.0
    %4270 = vmatprep.subr.mxu0 0.0
    %4271 = vmatpush1.msra.mxu0 0.0
    %4272 = vmatprep.subr.mxu0 0.0
    %4273 = vmatpush1.msra.mxu0 0.0
    %4274 = vmatprep.subr.mxu0 0.0
    %4275 = vmatpush1.msra.mxu0 0.0
    %4276 = vmatprep.subr.mxu0 0.0
    %4277 = vmatpush1.msra.mxu0 0.0
    %4278 = vmatprep.subr.mxu0 0.0
    %4279 = vmatpush1.msra.mxu0 0.0
    %4280 = vmatprep.subr.mxu0 0.0
    %4281 = vmatpush1.msra.mxu0 0.0
    %4282 = vmatprep.subr.mxu0 0.0
    %4283 = vmatpush1.msra.mxu0 0.0
    %4284 = vmatprep.subr.mxu0 0.0
    %4285 = vmatpush1.msra.mxu0 0.0
    %4286 = vmatprep.subr.mxu0 0.0
    %4287 = vmatpush1.msra.mxu0 0.0
    %4288 = vmatprep.subr.mxu0 0.0
    %4289 = vmatpush1.msra.mxu0 0.0
    %4290 = vmatprep.subr.mxu0 0.0
    %4291 = vmatpush1.msra.mxu0 0.0
    %4292 = vmatprep.subr.mxu0 0.0
    %4293 = vmatpush1.msra.mxu0 0.0
    %4294 = vmatprep.subr.mxu0 0.0
    %4295 = vmatpush1.msra.mxu0 0.0
    %4296 = vmatprep.subr.mxu0 0.0
    %4297 = vmatpush1.msra.mxu0 0.0
    %4298 = vmatprep.subr.mxu0 0.0
    %4299 = vmatpush1.msra.mxu0 0.0
    %4300 = vmatprep.mubr.f32.mxu0 0.0
    %4301 = vmatmul.mubr.f32.gmra.mrb[0].mxu0 %v4225
    %v4302 = vpop.f32.mrb[0].mxu0
    %v4303 = vadd.f32 0.0, %v4302
    %v4304 = vpop.f32.mrb[0].mxu0
    %4305 = vmatprep.mubr.f32.mxu0 0.0
    %4306 = vmatmul.mubr.f32.gmra.mrb[0].mxu0 %v4228
    %v4307 = vpop.f32.mrb[0].mxu0
    %v4308 = vadd.f32 0.0, %v4307
    %v4309 = vpop.f32.mrb[0].mxu0
    %4310 = vmatprep.mubr.f32.mxu0 0.0
    %4311 = vmatmul.mubr.f32.gmra.mrb[0].mxu0 %v4231
    %v4312 = vpop.f32.mrb[0].mxu0
    %v4313 = vadd.f32 0.0, %v4312
    %v4314 = vpop.f32.mrb[0].mxu0
    %4315 = vmatprep.mubr.f32.mxu0 0.0
    %4316 = vmatmul.mubr.f32.gmra.mrb[0].mxu0 %v4234
    %v4317 = vpop.f32.mrb[0].mxu0
    %v4318 = vadd.f32 0.0, %v4317
    %v4319 = vpop.f32.mrb[0].mxu0
    %4320 = vdwg.mxu0
    %v4321 = vadd.f32 %v3335, %v4303
    %v4322 = vadd.f32 %v3336, %v4308
    %v4323 = vadd.f32 %v3337, %v4313
    %v4324 = vadd.f32 %v3338, %v4318
    %v4325 = vadd.f32 %v364, %v4321
    %v4326 = vadd.f32 %v365, %v4322
    %v4327 = vadd.f32 %v366, %v4323
    %v4328 = vadd.f32 %v367, %v4324
    %v4329 = vld [vmem:[%s2 + $0x8] sm:$0x1]
    %v4330 = vlaneseq
    %v4331 = vshrl.u32 %v4330, 7
    %v4332 = vsub.s32 0, %v4331
    %v4333 = vrot.slane %v4329, %v4332
    %v4334 = vadd.f32 %v4325, %v4333
    %v4335 = vadd.f32 %v4326, %v4333
    %v4336 = vadd.f32 %v4327, %v4333
    %v4337 = vadd.f32 %v4328, %v4333
    %v4338 = vld [vmem:[%s9] sm:$0xff]
    %v4339 = vld [vmem:[%s9 + $0x8] sm:$0xff]
    %v4340 = vld [vmem:[%s9 + $0x10] sm:$0xff]
    %v4341 = vld [vmem:[%s9 + $0x18] sm:$0xff]
    %v4343 = vsel %vm45, %v4334, 0
    %v4346 = vsel %vm45, %v4335, 0
    %v4349 = vsel %vm45, %v4336, 0
    %v4352 = vsel %vm45, %v4337, 0
    %4354 = vmatprep.subr.mxu0 0.0
    %4355 = vmatpush1.msra.mxu0 %v4338
    %4356 = vmatprep.subr.mxu0 0.0
    %4357 = vmatpush1.msra.mxu0 %v4339
    %4358 = vmatprep.subr.mxu0 0.0
    %4359 = vmatpush1.msra.mxu0 %v4340
    %4360 = vmatprep.subr.mxu0 0.0
    %4361 = vmatpush1.msra.mxu0 %v4341
    %4362 = vmatprep.subr.mxu0 0.0
    %4363 = vmatpush1.msra.mxu0 0.0
    %4364 = vmatprep.subr.mxu0 0.0
    %4365 = vmatpush1.msra.mxu0 0.0
    %4366 = vmatprep.subr.mxu0 0.0
    %4367 = vmatpush1.msra.mxu0 0.0
    %4368 = vmatprep.subr.mxu0 0.0
    %4369 = vmatpush1.msra.mxu0 0.0
    %4370 = vmatprep.subr.mxu0 0.0
    %4371 = vmatpush1.msra.mxu0 0.0
    %4372 = vmatprep.subr.mxu0 0.0
    %4373 = vmatpush1.msra.mxu0 0.0
    %4374 = vmatprep.subr.mxu0 0.0
    %4375 = vmatpush1.msra.mxu0 0.0
    %4376 = vmatprep.subr.mxu0 0.0
    %4377 = vmatpush1.msra.mxu0 0.0
    %4378 = vmatprep.subr.mxu0 0.0
    %4379 = vmatpush1.msra.mxu0 0.0
    %4380 = vmatprep.subr.mxu0 0.0
    %4381 = vmatpush1.msra.mxu0 0.0
    %4382 = vmatprep.subr.mxu0 0.0
    %4383 = vmatpush1.msra.mxu0 0.0
    %4384 = vmatprep.subr.mxu0 0.0
    %4385 = vmatpush1.msra.mxu0 0.0
    %4386 = vmatprep.subr.mxu0 0.0
    %4387 = vmatpush1.msra.mxu0 0.0
    %4388 = vmatprep.subr.mxu0 0.0
    %4389 = vmatpush1.msra.mxu0 0.0
    %4390 = vmatprep.subr.mxu0 0.0
    %4391 = vmatpush1.msra.mxu0 0.0
    %4392 = vmatprep.subr.mxu0 0.0
    %4393 = vmatpush1.msra.mxu0 0.0
    %4394 = vmatprep.subr.mxu0 0.0
    %4395 = vmatpush1.msra.mxu0 0.0
    %4396 = vmatprep.subr.mxu0 0.0
    %4397 = vmatpush1.msra.mxu0 0.0
    %4398 = vmatprep.subr.mxu0 0.0
    %4399 = vmatpush1.msra.mxu0 0.0
    %4400 = vmatprep.subr.mxu0 0.0
    %4401 = vmatpush1.msra.mxu0 0.0
    %4402 = vmatprep.subr.mxu0 0.0
    %4403 = vmatpush1.msra.mxu0 0.0
    %4404 = vmatprep.subr.mxu0 0.0
    %4405 = vmatpush1.msra.mxu0 0.0
    %4406 = vmatprep.subr.mxu0 0.0
    %4407 = vmatpush1.msra.mxu0 0.0
    %4408 = vmatprep.subr.mxu0 0.0
    %4409 = vmatpush1.msra.mxu0 0.0
    %4410 = vmatprep.subr.mxu0 0.0
    %4411 = vmatpush1.msra.mxu0 0.0
    %4412 = vmatprep.subr.mxu0 0.0
    %4413 = vmatpush1.msra.mxu0 0.0
    %4414 = vmatprep.subr.mxu0 0.0
    %4415 = vmatpush1.msra.mxu0 0.0
    %4416 = vmatprep.subr.mxu0 0.0
    %4417 = vmatpush1.msra.mxu0 0.0
    %4418 = vmatprep.mubr.f32.mxu0 0.0
    %4419 = vmatmul.mubr.f32.gmra.mrb[0].mxu0 %v4343
    %v4420 = vpop.f32.mrb[0].mxu0
    %v4421 = vadd.f32 0.0, %v4420
    %v4422 = vpop.f32.mrb[0].mxu0
    %4423 = vmatprep.mubr.f32.mxu0 0.0
    %4424 = vmatmul.mubr.f32.gmra.mrb[0].mxu0 %v4346
    %v4425 = vpop.f32.mrb[0].mxu0
    %v4426 = vadd.f32 0.0, %v4425
    %v4427 = vpop.f32.mrb[0].mxu0
    %4428 = vmatprep.mubr.f32.mxu0 0.0
    %4429 = vmatmul.mubr.f32.gmra.mrb[0].mxu0 %v4349
    %v4430 = vpop.f32.mrb[0].mxu0
    %v4431 = vadd.f32 0.0, %v4430
    %v4432 = vpop.f32.mrb[0].mxu0
    %4433 = vmatprep.mubr.f32.mxu0 0.0
    %4434 = vmatmul.mubr.f32.gmra.mrb[0].mxu0 %v4352
    %v4435 = vpop.f32.mrb[0].mxu0
    %v4436 = vadd.f32 0.0, %v4435
    %v4437 = vpop.f32.mrb[0].mxu0
    %4438 = vdwg.mxu0
    %s4439 = scalar_lea.vmem %s9, 32
    %v4440 = vld [vmem:[%s4439] sm:$0xff]
    %v4441 = vld [vmem:[%s4439 + $0x8] sm:$0xff]
    %v4442 = vld [vmem:[%s4439 + $0x10] sm:$0xff]
    %v4443 = vld [vmem:[%s4439 + $0x18] sm:$0xff]
    %4444 = vmatprep.subr.mxu0 0.0
    %4445 = vmatpush1.msra.mxu0 %v4440
    %4446 = vmatprep.subr.mxu0 0.0
    %4447 = vmatpush1.msra.mxu0 %v4441
    %4448 = vmatprep.subr.mxu0 0.0
    %4449 = vmatpush1.msra.mxu0 %v4442
    %4450 = vmatprep.subr.mxu0 0.0
    %4451 = vmatpush1.msra.mxu0 %v4443
    %4452 = vmatprep.subr.mxu0 0.0
    %4453 = vmatpush1.msra.mxu0 0.0
    %4454 = vmatprep.subr.mxu0 0.0
    %4455 = vmatpush1.msra.mxu0 0.0
    %4456 = vmatprep.subr.mxu0 0.0
    %4457 = vmatpush1.msra.mxu0 0.0
    %4458 = vmatprep.subr.mxu0 0.0
    %4459 = vmatpush1.msra.mxu0 0.0
    %4460 = vmatprep.subr.mxu0 0.0
    %4461 = vmatpush1.msra.mxu0 0.0
    %4462 = vmatprep.subr.mxu0 0.0
    %4463 = vmatpush1.msra.mxu0 0.0
    %4464 = vmatprep.subr.mxu0 0.0
    %4465 = vmatpush1.msra.mxu0 0.0
    %4466 = vmatprep.subr.mxu0 0.0
    %4467 = vmatpush1.msra.mxu0 0.0
    %4468 = vmatprep.subr.mxu0 0.0
    %4469 = vmatpush1.msra.mxu0 0.0
    %4470 = vmatprep.subr.mxu0 0.0
    %4471 = vmatpush1.msra.mxu0 0.0
    %4472 = vmatprep.subr.mxu0 0.0
    %4473 = vmatpush1.msra.mxu0 0.0
    %4474 = vmatprep.subr.mxu0 0.0
    %4475 = vmatpush1.msra.mxu0 0.0
    %4476 = vmatprep.subr.mxu0 0.0
    %4477 = vmatpush1.msra.mxu0 0.0
    %4478 = vmatprep.subr.mxu0 0.0
    %4479 = vmatpush1.msra.mxu0 0.0
    %4480 = vmatprep.subr.mxu0 0.0
    %4481 = vmatpush1.msra.mxu0 0.0
    %4482 = vmatprep.subr.mxu0 0.0
    %4483 = vmatpush1.msra.mxu0 0.0
    %4484 = vmatprep.subr.mxu0 0.0
    %4485 = vmatpush1.msra.mxu0 0.0
    %4486 = vmatprep.subr.mxu0 0.0
    %4487 = vmatpush1.msra.mxu0 0.0
    %4488 = vmatprep.subr.mxu0 0.0
    %4489 = vmatpush1.msra.mxu0 0.0
    %4490 = vmatprep.subr.mxu0 0.0
    %4491 = vmatpush1.msra.mxu0 0.0
    %4492 = vmatprep.subr.mxu0 0.0
    %4493 = vmatpush1.msra.mxu0 0.0
    %4494 = vmatprep.subr.mxu0 0.0
    %4495 = vmatpush1.msra.mxu0 0.0
    %4496 = vmatprep.subr.mxu0 0.0
    %4497 = vmatpush1.msra.mxu0 0.0
    %4498 = vmatprep.subr.mxu0 0.0
    %4499 = vmatpush1.msra.mxu0 0.0
    %4500 = vmatprep.subr.mxu0 0.0
    %4501 = vmatpush1.msra.mxu0 0.0
    %4502 = vmatprep.subr.mxu0 0.0
    %4503 = vmatpush1.msra.mxu0 0.0
    %4504 = vmatprep.subr.mxu0 0.0
    %4505 = vmatpush1.msra.mxu0 0.0
    %4506 = vmatprep.subr.mxu0 0.0
    %4507 = vmatpush1.msra.mxu0 0.0
    %4508 = vmatprep.mubr.f32.mxu0 0.0
    %4509 = vmatmul.mubr.f32.gmra.mrb[0].mxu0 %v4343
    %v4510 = vpop.f32.mrb[0].mxu0
    %v4511 = vadd.f32 0.0, %v4510
    %v4512 = vpop.f32.mrb[0].mxu0
    %4513 = vmatprep.mubr.f32.mxu0 0.0
    %4514 = vmatmul.mubr.f32.gmra.mrb[0].mxu0 %v4346
    %v4515 = vpop.f32.mrb[0].mxu0
    %v4516 = vadd.f32 0.0, %v4515
    %v4517 = vpop.f32.mrb[0].mxu0
    %4518 = vmatprep.mubr.f32.mxu0 0.0
    %4519 = vmatmul.mubr.f32.gmra.mrb[0].mxu0 %v4349
    %v4520 = vpop.f32.mrb[0].mxu0
    %v4521 = vadd.f32 0.0, %v4520
    %v4522 = vpop.f32.mrb[0].mxu0
    %4523 = vmatprep.mubr.f32.mxu0 0.0
    %4524 = vmatmul.mubr.f32.gmra.mrb[0].mxu0 %v4352
    %v4525 = vpop.f32.mrb[0].mxu0
    %v4526 = vadd.f32 0.0, %v4525
    %v4527 = vpop.f32.mrb[0].mxu0
    %4528 = vdwg.mxu0
    %v4529 = vxor.u32 %v4511, 2147483648
    %v4530 = vxor.u32 %v4516, 2147483648
    %v4531 = vxor.u32 %v4521, 2147483648
    %v4532 = vxor.u32 %v4526, 2147483648
    %v4533 = vmul.f32 %v4529, 1.442695
    %v4534 = vpow.pop %v4533
    %v4535 = vmul.f32 %v4530, 1.442695
    %v4536 = vpow.pop %v4535
    %v4537 = vmul.f32 %v4531, 1.442695
    %v4538 = vpow.pop %v4537
    %v4539 = vmul.f32 %v4532, 1.442695
    %v4540 = vpow.pop %v4539
    %v4541 = vadd.f32 %v4534, 1.0
    %v4542 = vadd.f32 %v4536, 1.0
    %v4543 = vadd.f32 %v4538, 1.0
    %v4544 = vadd.f32 %v4540, 1.0
    %v4545 = vrcp.pop %v4541
    %v4546 = vmul.f32 1.0, %v4545
    %v4547 = vrcp.pop %v4542
    %v4548 = vmul.f32 1.0, %v4547
    %v4549 = vrcp.pop %v4543
    %v4550 = vmul.f32 1.0, %v4549
    %v4551 = vrcp.pop %v4544
    %v4552 = vmul.f32 1.0, %v4551
    %v4553 = vmul.f32 %v4421, %v4546
    %v4554 = vmul.f32 %v4426, %v4548
    %v4555 = vmul.f32 %v4431, %v4550
    %v4556 = vmul.f32 %v4436, %v4552
    %s4557 = scalar_lea.vmem %s10, 96
    %v4558 = vld [vmem:[%s4557] sm:$0xff]
    %v4559 = vld [vmem:[%s4557 + $0x8] sm:$0xff]
    %v4560 = vld [vmem:[%s4557 + $0x10] sm:$0xff]
    %v4561 = vld [vmem:[%s4557 + $0x18] sm:$0xff]
    %v4562 = vmul.f32 %v4553, %v4558
    %v4563 = vmul.f32 %v4554, %v4559
    %v4564 = vmul.f32 %v4555, %v4560
    %v4565 = vmul.f32 %v4556, %v4561
    %v4566 = vrot.slane %v4553, 5
    %v4567 = vrot.slane %v4554, 5
    %v4568 = vrot.slane %v4555, 5
    %v4569 = vrot.slane %v4556, 5
    %v4570 = vlaneseq
    %v4571 = vshrl.u32 %v4570, 7
    %vm4572 = vcmp.lt.s32.totalorder %v4571, 3
    %v4573 = vsel %vm4572, %v4568, %v4569
    %v4574 = vsel %vm4572, %v4567, %v4568
    %v4575 = vsel %vm4572, %v4566, %v4567
    %v4576 = vsel %vm4572, %v4569, %v4566
    %v4577 = vld [vmem:[%s10] sm:$0xff]
    %v4578 = vld [vmem:[%s10 + $0x8] sm:$0xff]
    %v4579 = vld [vmem:[%s10 + $0x10] sm:$0xff]
    %v4580 = vld [vmem:[%s10 + $0x18] sm:$0xff]
    %v4581 = vmul.f32 %v4576, %v4577
    %v4582 = vmul.f32 %v4575, %v4578
    %v4583 = vmul.f32 %v4574, %v4579
    %v4584 = vmul.f32 %v4573, %v4580
    %v4585 = vadd.f32 %v4562, %v4581
    %v4586 = vadd.f32 %v4563, %v4582
    %v4587 = vadd.f32 %v4564, %v4583
    %v4588 = vadd.f32 %v4565, %v4584
    %v4589 = vrot.slane %v4553, 6
    %v4590 = vrot.slane %v4554, 6
    %v4591 = vrot.slane %v4555, 6
    %v4592 = vrot.slane %v4556, 6
    %vm4593 = vcmp.lt.s32.totalorder %v4571, 2
    %v4594 = vsel %vm4593, %v4591, %v4592
    %v4595 = vsel %vm4593, %v4590, %v4591
    %v4596 = vsel %vm4593, %v4589, %v4590
    %v4597 = vsel %vm4593, %v4592, %v4589
    %s4598 = scalar_lea.vmem %s10, 32
    %v4599 = vld [vmem:[%s4598] sm:$0xff]
    %v4600 = vld [vmem:[%s4598 + $0x8] sm:$0xff]
    %v4601 = vld [vmem:[%s4598 + $0x10] sm:$0xff]
    %v4602 = vld [vmem:[%s4598 + $0x18] sm:$0xff]
    %v4603 = vmul.f32 %v4597, %v4599
    %v4604 = vmul.f32 %v4596, %v4600
    %v4605 = vmul.f32 %v4595, %v4601
    %v4606 = vmul.f32 %v4594, %v4602
    %v4607 = vadd.f32 %v4585, %v4603
    %v4608 = vadd.f32 %v4586, %v4604
    %v4609 = vadd.f32 %v4587, %v4605
    %v4610 = vadd.f32 %v4588, %v4606
    %v4611 = vrot.slane %v4553, 7
    %v4612 = vrot.slane %v4554, 7
    %v4613 = vrot.slane %v4555, 7
    %v4614 = vrot.slane %v4556, 7
    %vm4615 = vcmp.lt.s32.totalorder %v4571, 1
    %v4616 = vsel %vm4615, %v4613, %v4614
    %v4617 = vsel %vm4615, %v4612, %v4613
    %v4618 = vsel %vm4615, %v4611, %v4612
    %v4619 = vsel %vm4615, %v4614, %v4611
    %s4620 = scalar_lea.vmem %s10, 64
    %v4621 = vld [vmem:[%s4620] sm:$0xff]
    %v4622 = vld [vmem:[%s4620 + $0x8] sm:$0xff]
    %v4623 = vld [vmem:[%s4620 + $0x10] sm:$0xff]
    %v4624 = vld [vmem:[%s4620 + $0x18] sm:$0xff]
    %v4625 = vmul.f32 %v4619, %v4621
    %v4626 = vmul.f32 %v4618, %v4622
    %v4627 = vmul.f32 %v4617, %v4623
    %v4628 = vmul.f32 %v4616, %v4624
    %v4629 = vadd.f32 %v4607, %v4625
    %v4630 = vadd.f32 %v4608, %v4626
    %v4631 = vadd.f32 %v4609, %v4627
    %v4632 = vadd.f32 %v4610, %v4628
    %v4633 = vrot.slane %v4553, 1
    %v4634 = vrot.slane %v4554, 1
    %v4635 = vrot.slane %v4555, 1
    %v4636 = vrot.slane %v4556, 1
    %vm4637 = vcmp.lt.s32.totalorder %v4571, 7
    %v4638 = vsel %vm4637, %v4635, %v4636
    %v4639 = vsel %vm4637, %v4634, %v4635
    %v4640 = vsel %vm4637, %v4633, %v4634
    %v4641 = vsel %vm4637, %v4636, %v4633
    %s4642 = scalar_lea.vmem %s10, 128
    %v4643 = vld [vmem:[%s4642] sm:$0xff]
    %v4644 = vld [vmem:[%s4642 + $0x8] sm:$0xff]
    %v4645 = vld [vmem:[%s4642 + $0x10] sm:$0xff]
    %v4646 = vld [vmem:[%s4642 + $0x18] sm:$0xff]
    %v4647 = vmul.f32 %v4640, %v4643
    %v4648 = vmul.f32 %v4639, %v4644
    %v4649 = vmul.f32 %v4638, %v4645
    %v4650 = vmul.f32 %v4641, %v4646
    %v4651 = vadd.f32 %v4629, %v4647
    %v4652 = vadd.f32 %v4630, %v4648
    %v4653 = vadd.f32 %v4631, %v4649
    %v4654 = vadd.f32 %v4632, %v4650
    %v4655 = vrot.slane %v4553, 2
    %v4656 = vrot.slane %v4554, 2
    %v4657 = vrot.slane %v4555, 2
    %v4658 = vrot.slane %v4556, 2
    %vm4659 = vcmp.lt.s32.totalorder %v4571, 6
    %v4660 = vsel %vm4659, %v4657, %v4658
    %v4661 = vsel %vm4659, %v4656, %v4657
    %v4662 = vsel %vm4659, %v4655, %v4656
    %v4663 = vsel %vm4659, %v4658, %v4655
    %s4664 = scalar_lea.vmem %s10, 160
    %v4665 = vld [vmem:[%s4664] sm:$0xff]
    %v4666 = vld [vmem:[%s4664 + $0x8] sm:$0xff]
    %v4667 = vld [vmem:[%s4664 + $0x10] sm:$0xff]
    %v4668 = vld [vmem:[%s4664 + $0x18] sm:$0xff]
    %v4669 = vmul.f32 %v4662, %v4665
    %v4670 = vmul.f32 %v4661, %v4666
    %v4671 = vmul.f32 %v4660, %v4667
    %v4672 = vmul.f32 %v4663, %v4668
    %v4673 = vadd.f32 %v4651, %v4669
    %v4674 = vadd.f32 %v4652, %v4670
    %v4675 = vadd.f32 %v4653, %v4671
    %v4676 = vadd.f32 %v4654, %v4672
    %v4677 = vrot.slane %v4553, 3
    %v4678 = vrot.slane %v4554, 3
    %v4679 = vrot.slane %v4555, 3
    %v4680 = vrot.slane %v4556, 3
    %vm4681 = vcmp.lt.s32.totalorder %v4571, 5
    %v4682 = vsel %vm4681, %v4679, %v4680
    %v4683 = vsel %vm4681, %v4678, %v4679
    %v4684 = vsel %vm4681, %v4677, %v4678
    %v4685 = vsel %vm4681, %v4680, %v4677
    %s4686 = scalar_lea.vmem %s10, 192
    %v4687 = vld [vmem:[%s4686] sm:$0xff]
    %v4688 = vld [vmem:[%s4686 + $0x8] sm:$0xff]
    %v4689 = vld [vmem:[%s4686 + $0x10] sm:$0xff]
    %v4690 = vld [vmem:[%s4686 + $0x18] sm:$0xff]
    %v4691 = vmul.f32 %v4684, %v4687
    %v4692 = vmul.f32 %v4683, %v4688
    %v4693 = vmul.f32 %v4682, %v4689
    %v4694 = vmul.f32 %v4685, %v4690
    %v4695 = vadd.f32 %v4673, %v4691
    %v4696 = vadd.f32 %v4674, %v4692
    %v4697 = vadd.f32 %v4675, %v4693
    %v4698 = vadd.f32 %v4676, %v4694
    %v4699 = vld [vmem:[%s2 + $0x9] sm:$0x1]
    %v4700 = vlaneseq
    %v4701 = vshrl.u32 %v4700, 7
    %v4702 = vsub.s32 0, %v4701
    %v4703 = vrot.slane %v4699, %v4702
    %v4704 = vmul.f32 %v4695, %v4703
    %v4705 = vmul.f32 %v4696, %v4703
    %v4706 = vmul.f32 %v4697, %v4703
    %v4707 = vmul.f32 %v4698, %v4703
    %v4708 = vld [vmem:[%s2 + $0xa] sm:$0x1]
    %v4709 = vlaneseq
    %v4710 = vshrl.u32 %v4709, 7
    %v4711 = vsub.s32 0, %v4710
    %v4712 = vrot.slane %v4708, %v4711
    %v4713 = vadd.f32 %v4704, %v4712
    %v4714 = vadd.f32 %v4705, %v4712
    %v4715 = vadd.f32 %v4706, %v4712
    %v4716 = vadd.f32 %v4707, %v4712
    %v4717 = vxor.u32 %v4713, 2147483648
    %v4718 = vxor.u32 %v4714, 2147483648
    %v4719 = vxor.u32 %v4715, 2147483648
    %v4720 = vxor.u32 %v4716, 2147483648
    %v4721 = vmul.f32 %v4717, 1.442695
    %v4722 = vpow.pop %v4721
    %v4723 = vmul.f32 %v4718, 1.442695
    %v4724 = vpow.pop %v4723
    %v4725 = vmul.f32 %v4719, 1.442695
    %v4726 = vpow.pop %v4725
    %v4727 = vmul.f32 %v4720, 1.442695
    %v4728 = vpow.pop %v4727
    %v4729 = vadd.f32 %v4722, 1.0
    %v4730 = vadd.f32 %v4724, 1.0
    %v4731 = vadd.f32 %v4726, 1.0
    %v4732 = vadd.f32 %v4728, 1.0
    %v4733 = vrcp.pop %v4729
    %v4734 = vmul.f32 1.0, %v4733
    %v4735 = vrcp.pop %v4730
    %v4736 = vmul.f32 1.0, %v4735
    %v4737 = vrcp.pop %v4731
    %v4738 = vmul.f32 1.0, %v4737
    %v4739 = vrcp.pop %v4732
    %v4740 = vmul.f32 1.0, %v4739
    %v4741 = vmul.f32 %v4713, %v4734
    %v4742 = vmul.f32 %v4714, %v4736
    %v4743 = vmul.f32 %v4715, %v4738
    %v4744 = vmul.f32 %v4716, %v4740
    %s4745 = scalar_lea.vmem %s9, 64
    %v4746 = vld [vmem:[%s4745] sm:$0xff]
    %v4747 = vld [vmem:[%s4745 + $0x8] sm:$0xff]
    %v4748 = vld [vmem:[%s4745 + $0x10] sm:$0xff]
    %v4749 = vld [vmem:[%s4745 + $0x18] sm:$0xff]
    %v4750 = vld [vmem:[%s2 + $0xb] sm:$0x1]
    %v4751 = vlaneseq
    %v4752 = vshrl.u32 %v4751, 7
    %v4753 = vsub.s32 0, %v4752
    %v4754 = vrot.slane %v4750, %v4753
    %v4756 = vsel %vm45, %v4741, 0
    %v4759 = vsel %vm45, %v4742, 0
    %v4762 = vsel %vm45, %v4743, 0
    %v4765 = vsel %vm45, %v4744, 0
    %4767 = vmatprep.subr.mxu0 0.0
    %4768 = vmatpush1.msra.mxu0 %v4746
    %4769 = vmatprep.subr.mxu0 0.0
    %4770 = vmatpush1.msra.mxu0 %v4747
    %4771 = vmatprep.subr.mxu0 0.0
    %4772 = vmatpush1.msra.mxu0 %v4748
    %4773 = vmatprep.subr.mxu0 0.0
    %4774 = vmatpush1.msra.mxu0 %v4749
    %4775 = vmatprep.subr.mxu0 0.0
    %4776 = vmatpush1.msra.mxu0 0.0
    %4777 = vmatprep.subr.mxu0 0.0
    %4778 = vmatpush1.msra.mxu0 0.0
    %4779 = vmatprep.subr.mxu0 0.0
    %4780 = vmatpush1.msra.mxu0 0.0
    %4781 = vmatprep.subr.mxu0 0.0
    %4782 = vmatpush1.msra.mxu0 0.0
    %4783 = vmatprep.subr.mxu0 0.0
    %4784 = vmatpush1.msra.mxu0 0.0
    %4785 = vmatprep.subr.mxu0 0.0
    %4786 = vmatpush1.msra.mxu0 0.0
    %4787 = vmatprep.subr.mxu0 0.0
    %4788 = vmatpush1.msra.mxu0 0.0
    %4789 = vmatprep.subr.mxu0 0.0
    %4790 = vmatpush1.msra.mxu0 0.0
    %4791 = vmatprep.subr.mxu0 0.0
    %4792 = vmatpush1.msra.mxu0 0.0
    %4793 = vmatprep.subr.mxu0 0.0
    %4794 = vmatpush1.msra.mxu0 0.0
    %4795 = vmatprep.subr.mxu0 0.0
    %4796 = vmatpush1.msra.mxu0 0.0
    %4797 = vmatprep.subr.mxu0 0.0
    %4798 = vmatpush1.msra.mxu0 0.0
    %4799 = vmatprep.subr.mxu0 0.0
    %4800 = vmatpush1.msra.mxu0 0.0
    %4801 = vmatprep.subr.mxu0 0.0
    %4802 = vmatpush1.msra.mxu0 0.0
    %4803 = vmatprep.subr.mxu0 0.0
    %4804 = vmatpush1.msra.mxu0 0.0
    %4805 = vmatprep.subr.mxu0 0.0
    %4806 = vmatpush1.msra.mxu0 0.0
    %4807 = vmatprep.subr.mxu0 0.0
    %4808 = vmatpush1.msra.mxu0 0.0
    %4809 = vmatprep.subr.mxu0 0.0
    %4810 = vmatpush1.msra.mxu0 0.0
    %4811 = vmatprep.subr.mxu0 0.0
    %4812 = vmatpush1.msra.mxu0 0.0
    %4813 = vmatprep.subr.mxu0 0.0
    %4814 = vmatpush1.msra.mxu0 0.0
    %4815 = vmatprep.subr.mxu0 0.0
    %4816 = vmatpush1.msra.mxu0 0.0
    %4817 = vmatprep.subr.mxu0 0.0
    %4818 = vmatpush1.msra.mxu0 0.0
    %4819 = vmatprep.subr.mxu0 0.0
    %4820 = vmatpush1.msra.mxu0 0.0
    %4821 = vmatprep.subr.mxu0 0.0
    %4822 = vmatpush1.msra.mxu0 0.0
    %4823 = vmatprep.subr.mxu0 0.0
    %4824 = vmatpush1.msra.mxu0 0.0
    %4825 = vmatprep.subr.mxu0 0.0
    %4826 = vmatpush1.msra.mxu0 0.0
    %4827 = vmatprep.subr.mxu0 0.0
    %4828 = vmatpush1.msra.mxu0 0.0
    %4829 = vmatprep.subr.mxu0 0.0
    %4830 = vmatpush1.msra.mxu0 0.0
    %4831 = vmatprep.mubr.f32.mxu0 0.0
    %4832 = vmatmul.mubr.f32.gmra.mrb[0].mxu0 %v4756
    %v4833 = vpop.f32.mrb[0].mxu0
    %v4834 = vadd.f32 %v4754, %v4833
    %v4835 = vpop.f32.mrb[0].mxu0
    %4836 = vmatprep.mubr.f32.mxu0 0.0
    %4837 = vmatmul.mubr.f32.gmra.mrb[0].mxu0 %v4759
    %v4838 = vpop.f32.mrb[0].mxu0
    %v4839 = vadd.f32 %v4754, %v4838
    %v4840 = vpop.f32.mrb[0].mxu0
    %4841 = vmatprep.mubr.f32.mxu0 0.0
    %4842 = vmatmul.mubr.f32.gmra.mrb[0].mxu0 %v4762
    %v4843 = vpop.f32.mrb[0].mxu0
    %v4844 = vadd.f32 %v4754, %v4843
    %v4845 = vpop.f32.mrb[0].mxu0
    %4846 = vmatprep.mubr.f32.mxu0 0.0
    %4847 = vmatmul.mubr.f32.gmra.mrb[0].mxu0 %v4765
    %v4848 = vpop.f32.mrb[0].mxu0
    %v4849 = vadd.f32 %v4754, %v4848
    %v4850 = vpop.f32.mrb[0].mxu0
    %4851 = vdwg.mxu0
    %v4852 = vadd.f32 %v4334, %v4834
    %v4853 = vadd.f32 %v4335, %v4839
    %v4854 = vadd.f32 %v4336, %v4844
    %v4855 = vadd.f32 %v4337, %v4849
    %v4856 = vld [vmem:[%s2 + $0x3] sm:$0x1]
    %v4857 = vld [vmem:[%s2 + $0x4] sm:$0x1]
    %v4858 = vsel %vm45, %v4852, 0.0
    %4859 = vadd.xlane.f32.xlu0 %v4858
    %v4860 = vpop.xlane.xlu0 %4859
    %v4861 = vsel %vm45, %v4853, 0.0
    %4862 = vadd.xlane.f32.xlu0 %v4861
    %v4863 = vpop.xlane.xlu0 %4862
    %v4864 = vsel %vm45, %v4854, 0.0
    %4865 = vadd.xlane.f32.xlu0 %v4864
    %v4866 = vpop.xlane.xlu0 %4865
    %v4867 = vsel %vm45, %v4855, 0.0
    %4868 = vadd.xlane.f32.xlu0 %v4867
    %v4869 = vpop.xlane.xlu0 %4868
    %v4870 = vmul.f32 %v4860, %v58
    %v4871 = vmul.f32 %v4863, %v58
    %v4872 = vmul.f32 %v4866, %v58
    %v4873 = vmul.f32 %v4869, %v58
    %v4874 = vsub.f32 %v4852, %v4870
    %v4875 = vsub.f32 %v4853, %v4871
    %v4876 = vsub.f32 %v4854, %v4872
    %v4877 = vsub.f32 %v4855, %v4873
    %v4878 = vmul.f32 %v4874, %v4874
    %v4879 = vmul.f32 %v4875, %v4875
    %v4880 = vmul.f32 %v4876, %v4876
    %v4881 = vmul.f32 %v4877, %v4877
    %v4882 = vsel %vm45, %v4878, 0.0
    %4883 = vadd.xlane.f32.xlu0 %v4882
    %v4884 = vpop.xlane.xlu0 %4883
    %v4885 = vsel %vm45, %v4879, 0.0
    %4886 = vadd.xlane.f32.xlu0 %v4885
    %v4887 = vpop.xlane.xlu0 %4886
    %v4888 = vsel %vm45, %v4880, 0.0
    %4889 = vadd.xlane.f32.xlu0 %v4888
    %v4890 = vpop.xlane.xlu0 %4889
    %v4891 = vsel %vm45, %v4881, 0.0
    %4892 = vadd.xlane.f32.xlu0 %v4891
    %v4893 = vpop.xlane.xlu0 %4892
    %v4894 = vmul.f32 %v4884, %v58
    %v4895 = vmul.f32 %v4887, %v58
    %v4896 = vmul.f32 %v4890, %v58
    %v4897 = vmul.f32 %v4893, %v58
    %v4898 = vadd.f32 %v4894, 1e-05
    %v4899 = vadd.f32 %v4895, 1e-05
    %v4900 = vadd.f32 %v4896, 1e-05
    %v4901 = vadd.f32 %v4897, 1e-05
    %v4902 = vrsqrt.pop %v4898
    %v4903 = vrsqrt.pop %v4899
    %v4904 = vrsqrt.pop %v4900
    %v4905 = vrsqrt.pop %v4901
    %v4906 = vmul.f32 %v4874, %v4902
    %v4907 = vmul.f32 %v4875, %v4903
    %v4908 = vmul.f32 %v4876, %v4904
    %v4909 = vmul.f32 %v4877, %v4905
    %v4910 = vlaneseq
    %v4911 = vshrl.u32 %v4910, 7
    %v4912 = vsub.s32 0, %v4911
    %v4913 = vrot.slane %v4856, %v4912
    %v4914 = vmul.f32 %v4906, %v4913
    %v4915 = vmul.f32 %v4907, %v4913
    %v4916 = vmul.f32 %v4908, %v4913
    %v4917 = vmul.f32 %v4909, %v4913
    %v4918 = vlaneseq
    %v4919 = vshrl.u32 %v4918, 7
    %v4920 = vsub.s32 0, %v4919
    %v4921 = vrot.slane %v4857, %v4920
    %v4922 = vadd.f32 %v4914, %v4921
    %v4923 = vadd.f32 %v4915, %v4921
    %v4924 = vadd.f32 %v4916, %v4921
    %v4925 = vadd.f32 %v4917, %v4921
    %s4926 = scalar_lea.vmem %s4, 32
    %v4927 = vld [vmem:[%s4926] sm:$0xff]
    %v4928 = vld [vmem:[%s4926 + $0x8] sm:$0xff]
    %v4929 = vld [vmem:[%s4926 + $0x10] sm:$0xff]
    %v4930 = vld [vmem:[%s4926 + $0x18] sm:$0xff]
    %v4931 = vld [vmem:[%s3 + $0x1] sm:$0x1]
    %v4932 = vlaneseq
    %v4933 = vshrl.u32 %v4932, 7
    %v4934 = vsub.s32 0, %v4933
    %v4935 = vrot.slane %v4931, %v4934
    %v4937 = vsel %vm45, %v4922, 0
    %v4940 = vsel %vm45, %v4923, 0
    %v4943 = vsel %vm45, %v4924, 0
    %v4946 = vsel %vm45, %v4925, 0
    %4948 = vmatprep.subr.mxu0 0.0
    %4949 = vmatpush1.msra.mxu0 %v4927
    %4950 = vmatprep.subr.mxu0 0.0
    %4951 = vmatpush1.msra.mxu0 %v4928
    %4952 = vmatprep.subr.mxu0 0.0
    %4953 = vmatpush1.msra.mxu0 %v4929
    %4954 = vmatprep.subr.mxu0 0.0
    %4955 = vmatpush1.msra.mxu0 %v4930
    %4956 = vmatprep.subr.mxu0 0.0
    %4957 = vmatpush1.msra.mxu0 0.0
    %4958 = vmatprep.subr.mxu0 0.0
    %4959 = vmatpush1.msra.mxu0 0.0
    %4960 = vmatprep.subr.mxu0 0.0
    %4961 = vmatpush1.msra.mxu0 0.0
    %4962 = vmatprep.subr.mxu0 0.0
    %4963 = vmatpush1.msra.mxu0 0.0
    %4964 = vmatprep.subr.mxu0 0.0
    %4965 = vmatpush1.msra.mxu0 0.0
    %4966 = vmatprep.subr.mxu0 0.0
    %4967 = vmatpush1.msra.mxu0 0.0
    %4968 = vmatprep.subr.mxu0 0.0
    %4969 = vmatpush1.msra.mxu0 0.0
    %4970 = vmatprep.subr.mxu0 0.0
    %4971 = vmatpush1.msra.mxu0 0.0
    %4972 = vmatprep.subr.mxu0 0.0
    %4973 = vmatpush1.msra.mxu0 0.0
    %4974 = vmatprep.subr.mxu0 0.0
    %4975 = vmatpush1.msra.mxu0 0.0
    %4976 = vmatprep.subr.mxu0 0.0
    %4977 = vmatpush1.msra.mxu0 0.0
    %4978 = vmatprep.subr.mxu0 0.0
    %4979 = vmatpush1.msra.mxu0 0.0
    %4980 = vmatprep.subr.mxu0 0.0
    %4981 = vmatpush1.msra.mxu0 0.0
    %4982 = vmatprep.subr.mxu0 0.0
    %4983 = vmatpush1.msra.mxu0 0.0
    %4984 = vmatprep.subr.mxu0 0.0
    %4985 = vmatpush1.msra.mxu0 0.0
    %4986 = vmatprep.subr.mxu0 0.0
    %4987 = vmatpush1.msra.mxu0 0.0
    %4988 = vmatprep.subr.mxu0 0.0
    %4989 = vmatpush1.msra.mxu0 0.0
    %4990 = vmatprep.subr.mxu0 0.0
    %4991 = vmatpush1.msra.mxu0 0.0
    %4992 = vmatprep.subr.mxu0 0.0
    %4993 = vmatpush1.msra.mxu0 0.0
    %4994 = vmatprep.subr.mxu0 0.0
    %4995 = vmatpush1.msra.mxu0 0.0
    %4996 = vmatprep.subr.mxu0 0.0
    %4997 = vmatpush1.msra.mxu0 0.0
    %4998 = vmatprep.subr.mxu0 0.0
    %4999 = vmatpush1.msra.mxu0 0.0
    %5000 = vmatprep.subr.mxu0 0.0
    %5001 = vmatpush1.msra.mxu0 0.0
    %5002 = vmatprep.subr.mxu0 0.0
    %5003 = vmatpush1.msra.mxu0 0.0
    %5004 = vmatprep.subr.mxu0 0.0
    %5005 = vmatpush1.msra.mxu0 0.0
    %5006 = vmatprep.subr.mxu0 0.0
    %5007 = vmatpush1.msra.mxu0 0.0
    %5008 = vmatprep.subr.mxu0 0.0
    %5009 = vmatpush1.msra.mxu0 0.0
    %5010 = vmatprep.subr.mxu0 0.0
    %5011 = vmatpush1.msra.mxu0 0.0
    %5012 = vmatprep.mubr.f32.mxu0 0.0
    %5013 = vmatmul.mubr.f32.gmra.mrb[0].mxu0 %v4937
    %v5014 = vpop.f32.mrb[0].mxu0
    %v5015 = vadd.f32 %v4935, %v5014
    %v5016 = vpop.f32.mrb[0].mxu0
    %5017 = vmatprep.mubr.f32.mxu0 0.0
    %5018 = vmatmul.mubr.f32.gmra.mrb[0].mxu0 %v4940
    %v5019 = vpop.f32.mrb[0].mxu0
    %v5020 = vadd.f32 %v4935, %v5019
    %v5021 = vpop.f32.mrb[0].mxu0
    %5022 = vmatprep.mubr.f32.mxu0 0.0
    %5023 = vmatmul.mubr.f32.gmra.mrb[0].mxu0 %v4943
    %v5024 = vpop.f32.mrb[0].mxu0
    %v5025 = vadd.f32 %v4935, %v5024
    %v5026 = vpop.f32.mrb[0].mxu0
    %5027 = vmatprep.mubr.f32.mxu0 0.0
    %5028 = vmatmul.mubr.f32.gmra.mrb[0].mxu0 %v4946
    %v5029 = vpop.f32.mrb[0].mxu0
    %v5030 = vadd.f32 %v4935, %v5029
    %v5031 = vpop.f32.mrb[0].mxu0
    %5032 = vdwg.mxu0
    %v5033 = vxor.u32 %v5015, 2147483648
    %v5034 = vxor.u32 %v5020, 2147483648
    %v5035 = vxor.u32 %v5025, 2147483648
    %v5036 = vxor.u32 %v5030, 2147483648
    %v5037 = vmul.f32 %v5033, 1.442695
    %v5038 = vpow.pop %v5037
    %v5039 = vmul.f32 %v5034, 1.442695
    %v5040 = vpow.pop %v5039
    %v5041 = vmul.f32 %v5035, 1.442695
    %v5042 = vpow.pop %v5041
    %v5043 = vmul.f32 %v5036, 1.442695
    %v5044 = vpow.pop %v5043
    %v5045 = vadd.f32 %v5038, 1.0
    %v5046 = vadd.f32 %v5040, 1.0
    %v5047 = vadd.f32 %v5042, 1.0
    %v5048 = vadd.f32 %v5044, 1.0
    %v5049 = vrcp.pop %v5045
    %v5050 = vmul.f32 1.0, %v5049
    %v5051 = vrcp.pop %v5046
    %v5052 = vmul.f32 1.0, %v5051
    %v5053 = vrcp.pop %v5047
    %v5054 = vmul.f32 1.0, %v5053
    %v5055 = vrcp.pop %v5048
    %v5056 = vmul.f32 1.0, %v5055
    %v5057 = vmul.f32 %v5015, %v5050
    %v5058 = vmul.f32 %v5020, %v5052
    %v5059 = vmul.f32 %v5025, %v5054
    %v5060 = vmul.f32 %v5030, %v5056
    %s5061 = scalar_lea.vmem %s5, 64
    %v5062 = vld [vmem:[%s5061] sm:$0xff]
    %v5063 = vld [vmem:[%s5061 + $0x8] sm:$0xff]
    %v5064 = vld [vmem:[%s5061 + $0x10] sm:$0xff]
    %v5065 = vld [vmem:[%s5061 + $0x18] sm:$0xff]
    %v5066 = vld [vmem:[%s5061 + $0x20] sm:$0xff]
    %v5067 = vld [vmem:[%s5061 + $0x28] sm:$0xff]
    %v5068 = vld [vmem:[%s5061 + $0x30] sm:$0xff]
    %v5069 = vld [vmem:[%s5061 + $0x38] sm:$0xff]
    %v5070 = vld [vmem:[%s2 + $0x5] sm:$0x1]
    %v5071 = vlaneseq
    %v5072 = vshrl.u32 %v5071, 7
    %v5073 = vsub.s32 0, %v5072
    %v5074 = vrot.slane %v5070, %v5073
    %v5076 = vsel %vm262, %v5057, 0
    %v5079 = vsel %vm262, %v5058, 0
    %v5082 = vsel %vm262, %v5059, 0
    %v5085 = vsel %vm262, %v5060, 0
    %5087 = vmatprep.subr.mxu0 0.0
    %5088 = vmatpush1.msra.mxu0 %v5062
    %5089 = vmatprep.subr.mxu0 0.0
    %5090 = vmatpush1.msra.mxu0 %v5063
    %5091 = vmatprep.subr.mxu0 0.0
    %5092 = vmatpush1.msra.mxu0 %v5064
    %5093 = vmatprep.subr.mxu0 0.0
    %5094 = vmatpush1.msra.mxu0 %v5065
    %5095 = vmatprep.subr.mxu0 0.0
    %5096 = vmatpush1.msra.mxu0 %v5066
    %5097 = vmatprep.subr.mxu0 0.0
    %5098 = vmatpush1.msra.mxu0 %v5067
    %5099 = vmatprep.subr.mxu0 0.0
    %5100 = vmatpush1.msra.mxu0 %v5068
    %5101 = vmatprep.subr.mxu0 0.0
    %5102 = vmatpush1.msra.mxu0 %v5069
    %5103 = vmatprep.subr.mxu0 0.0
    %5104 = vmatpush1.msra.mxu0 0.0
    %5105 = vmatprep.subr.mxu0 0.0
    %5106 = vmatpush1.msra.mxu0 0.0
    %5107 = vmatprep.subr.mxu0 0.0
    %5108 = vmatpush1.msra.mxu0 0.0
    %5109 = vmatprep.subr.mxu0 0.0
    %5110 = vmatpush1.msra.mxu0 0.0
    %5111 = vmatprep.subr.mxu0 0.0
    %5112 = vmatpush1.msra.mxu0 0.0
    %5113 = vmatprep.subr.mxu0 0.0
    %5114 = vmatpush1.msra.mxu0 0.0
    %5115 = vmatprep.subr.mxu0 0.0
    %5116 = vmatpush1.msra.mxu0 0.0
    %5117 = vmatprep.subr.mxu0 0.0
    %5118 = vmatpush1.msra.mxu0 0.0
    %5119 = vmatprep.subr.mxu0 0.0
    %5120 = vmatpush1.msra.mxu0 0.0
    %5121 = vmatprep.subr.mxu0 0.0
    %5122 = vmatpush1.msra.mxu0 0.0
    %5123 = vmatprep.subr.mxu0 0.0
    %5124 = vmatpush1.msra.mxu0 0.0
    %5125 = vmatprep.subr.mxu0 0.0
    %5126 = vmatpush1.msra.mxu0 0.0
    %5127 = vmatprep.subr.mxu0 0.0
    %5128 = vmatpush1.msra.mxu0 0.0
    %5129 = vmatprep.subr.mxu0 0.0
    %5130 = vmatpush1.msra.mxu0 0.0
    %5131 = vmatprep.subr.mxu0 0.0
    %5132 = vmatpush1.msra.mxu0 0.0
    %5133 = vmatprep.subr.mxu0 0.0
    %5134 = vmatpush1.msra.mxu0 0.0
    %5135 = vmatprep.subr.mxu0 0.0
    %5136 = vmatpush1.msra.mxu0 0.0
    %5137 = vmatprep.subr.mxu0 0.0
    %5138 = vmatpush1.msra.mxu0 0.0
    %5139 = vmatprep.subr.mxu0 0.0
    %5140 = vmatpush1.msra.mxu0 0.0
    %5141 = vmatprep.subr.mxu0 0.0
    %5142 = vmatpush1.msra.mxu0 0.0
    %5143 = vmatprep.subr.mxu0 0.0
    %5144 = vmatpush1.msra.mxu0 0.0
    %5145 = vmatprep.subr.mxu0 0.0
    %5146 = vmatpush1.msra.mxu0 0.0
    %5147 = vmatprep.subr.mxu0 0.0
    %5148 = vmatpush1.msra.mxu0 0.0
    %5149 = vmatprep.subr.mxu0 0.0
    %5150 = vmatpush1.msra.mxu0 0.0
    %5151 = vmatprep.mubr.f32.mxu0 0.0
    %5152 = vmatmul.mubr.f32.gmra.mrb[0].mxu0 %v5076
    %v5153 = vpop.f32.mrb[0].mxu0
    %v5154 = vadd.f32 %v5074, %v5153
    %v5155 = vpop.f32.mrb[0].mxu0
    %5156 = vmatprep.mubr.f32.mxu0 0.0
    %5157 = vmatmul.mubr.f32.gmra.mrb[0].mxu0 %v5079
    %v5158 = vpop.f32.mrb[0].mxu0
    %v5159 = vadd.f32 %v5074, %v5158
    %v5160 = vpop.f32.mrb[0].mxu0
    %5161 = vmatprep.mubr.f32.mxu0 0.0
    %5162 = vmatmul.mubr.f32.gmra.mrb[0].mxu0 %v5082
    %v5163 = vpop.f32.mrb[0].mxu0
    %v5164 = vadd.f32 %v5074, %v5163
    %v5165 = vpop.f32.mrb[0].mxu0
    %5166 = vmatprep.mubr.f32.mxu0 0.0
    %5167 = vmatmul.mubr.f32.gmra.mrb[0].mxu0 %v5085
    %v5168 = vpop.f32.mrb[0].mxu0
    %v5169 = vadd.f32 %v5074, %v5168
    %v5170 = vpop.f32.mrb[0].mxu0
    %5171 = vdwg.mxu0
    %v5172 = vmul.f32 %v5154, 0.5
    %v5173 = vmul.f32 %v5159, 0.5
    %v5174 = vmul.f32 %v5164, 0.5
    %v5175 = vmul.f32 %v5169, 0.5
    %v5176 = vadd.f32 %v4852, %v5172
    %v5177 = vadd.f32 %v4853, %v5173
    %v5178 = vadd.f32 %v4854, %v5174
    %v5179 = vadd.f32 %v4855, %v5175
    %v5180 = vld [vmem:[%s2 + $0x6] sm:$0x1]
    %v5181 = vld [vmem:[%s2 + $0x7] sm:$0x1]
    %v5182 = vsel %vm45, %v5176, 0.0
    %5183 = vadd.xlane.f32.xlu0 %v5182
    %v5184 = vpop.xlane.xlu0 %5183
    %v5185 = vsel %vm45, %v5177, 0.0
    %5186 = vadd.xlane.f32.xlu0 %v5185
    %v5187 = vpop.xlane.xlu0 %5186
    %v5188 = vsel %vm45, %v5178, 0.0
    %5189 = vadd.xlane.f32.xlu0 %v5188
    %v5190 = vpop.xlane.xlu0 %5189
    %v5191 = vsel %vm45, %v5179, 0.0
    %5192 = vadd.xlane.f32.xlu0 %v5191
    %v5193 = vpop.xlane.xlu0 %5192
    %v5194 = vmul.f32 %v5184, %v58
    %v5195 = vmul.f32 %v5187, %v58
    %v5196 = vmul.f32 %v5190, %v58
    %v5197 = vmul.f32 %v5193, %v58
    %v5198 = vsub.f32 %v5176, %v5194
    %v5199 = vsub.f32 %v5177, %v5195
    %v5200 = vsub.f32 %v5178, %v5196
    %v5201 = vsub.f32 %v5179, %v5197
    %v5202 = vmul.f32 %v5198, %v5198
    %v5203 = vmul.f32 %v5199, %v5199
    %v5204 = vmul.f32 %v5200, %v5200
    %v5205 = vmul.f32 %v5201, %v5201
    %v5206 = vsel %vm45, %v5202, 0.0
    %5207 = vadd.xlane.f32.xlu0 %v5206
    %v5208 = vpop.xlane.xlu0 %5207
    %v5209 = vsel %vm45, %v5203, 0.0
    %5210 = vadd.xlane.f32.xlu0 %v5209
    %v5211 = vpop.xlane.xlu0 %5210
    %v5212 = vsel %vm45, %v5204, 0.0
    %5213 = vadd.xlane.f32.xlu0 %v5212
    %v5214 = vpop.xlane.xlu0 %5213
    %v5215 = vsel %vm45, %v5205, 0.0
    %5216 = vadd.xlane.f32.xlu0 %v5215
    %v5217 = vpop.xlane.xlu0 %5216
    %v5218 = vmul.f32 %v5208, %v58
    %v5219 = vmul.f32 %v5211, %v58
    %v5220 = vmul.f32 %v5214, %v58
    %v5221 = vmul.f32 %v5217, %v58
    %v5222 = vadd.f32 %v5218, 1e-05
    %v5223 = vadd.f32 %v5219, 1e-05
    %v5224 = vadd.f32 %v5220, 1e-05
    %v5225 = vadd.f32 %v5221, 1e-05
    %v5226 = vrsqrt.pop %v5222
    %v5227 = vrsqrt.pop %v5223
    %v5228 = vrsqrt.pop %v5224
    %v5229 = vrsqrt.pop %v5225
    %v5230 = vmul.f32 %v5198, %v5226
    %v5231 = vmul.f32 %v5199, %v5227
    %v5232 = vmul.f32 %v5200, %v5228
    %v5233 = vmul.f32 %v5201, %v5229
    %v5234 = vlaneseq
    %v5235 = vshrl.u32 %v5234, 7
    %v5236 = vsub.s32 0, %v5235
    %v5237 = vrot.slane %v5180, %v5236
    %v5238 = vmul.f32 %v5230, %v5237
    %v5239 = vmul.f32 %v5231, %v5237
    %v5240 = vmul.f32 %v5232, %v5237
    %v5241 = vmul.f32 %v5233, %v5237
    %v5242 = vlaneseq
    %v5243 = vshrl.u32 %v5242, 7
    %v5244 = vsub.s32 0, %v5243
    %v5245 = vrot.slane %v5181, %v5244
    %v5246 = vadd.f32 %v5238, %v5245
    %v5247 = vadd.f32 %v5239, %v5245
    %v5248 = vadd.f32 %v5240, %v5245
    %v5249 = vadd.f32 %v5241, %v5245
    %5250 = vst.msk [vmem:[#allocation2] sm:$0xff] %vm45, %v5246
    %5251 = vst.msk [vmem:[#allocation2 + $0x8] sm:$0xff] %vm45, %v5247
    %5252 = vst.msk [vmem:[#allocation2 + $0x10] sm:$0xff] %vm45, %v5248
    %5253 = vst.msk [vmem:[#allocation2 + $0x18] sm:$0xff] %vm45, %v5249
    // Predicated region
    $region46: #{conformer_block.1} parent=1 // pred_check
      _
    $region47: #{conformer_block.1} parent=1 // pred_check_branch
      %5255 = sbr.rel (0) target = $region49
    $region48: #{conformer_block.1} parent=1 // pred_region
      %s5257 = ssub.s32 512, 512
      %5258 = vsyncadd [#allocation3], %s5257
      %s5259 = sshll.u32 [#allocation2], 4
      %s5260 = int_to_ptr.vmem [resolvable:$true] %s5259
      %5265 = dma.vmem_to_hbm [thread:$0]  %s5260, 512, %s11, [#allocation3], 128, 128, 8
    $region49: #{conformer_block.1} parent=1 // pred_fallthru
      _
    // Predicated region
    $region50: #{conformer_block.1} parent=1 // pred_check
      _
    $region51: #{conformer_block.1} parent=1 // pred_check_branch
      %5267 = sbr.rel (0) target = $region53
    $region52: #{conformer_block.1} parent=1 // pred_region
      %5268 = dma.done [#allocation3], 512
    $region53: #{conformer_block.1} parent=1 // pred_fallthru
      _
    %5269 = vsyncpa [#allocation3], 1

</llo_original>
